<compile_context>
chip_gen: v7x
topology: tpu7x:2x2x1
jax: 0.10.0
libtpu: 0.0.40
codegen_flags: <defaults>
</compile_context>

<pallas_src>
import jax
import jax.numpy as jnp
from jax.experimental import pallas as pl
from jax.experimental.pallas import tpu as pltpu


# ----------------------------------------------------------------------------
# Kernel bodies
# ----------------------------------------------------------------------------
def _make_kernel(mxu_pool):
    """Build the head kernel.

    mxu_pool=True : masked sum done on the MXU via a batched contraction;
                    mask block is (TB, 1, TL), acc scratch is (TB, 1, H).
    mxu_pool=False: VPU fallback (broadcast-multiply + sublane reduce);
                    mask block is (TB, TL), acc scratch is (TB, H).
    """

    def kernel(hidden_ref, mask_ref, invcnt_ref, w1_ref, b1_ref,
               w2_ref, b2_ref, out_ref, acc_ref):
        l = pl.program_id(1)

        @pl.when(l == 0)
        def _init():
            acc_ref[...] = jnp.zeros_like(acc_ref)

        hidden = hidden_ref[...]                              # (TB, TL, H)
        if mxu_pool:
            # acc[b, 1, h] += sum_l mask[b, 1, l] * hidden[b, l, h]   (MXU)
            acc_ref[...] += jnp.einsum(
                "bql,blh->bqh", mask_ref[...], hidden,
                preferred_element_type=jnp.float32)
        else:
            # VPU fallback: elementwise multiply + reduce over the L tile.
            m32 = mask_ref[...].astype(jnp.float32)           # (TB, TL)
            acc_ref[...] += jnp.sum(
                hidden.astype(jnp.float32) * m32[:, :, None], axis=1)

        @pl.when(l == pl.num_programs(1) - 1)
        def _finalize():
            acc = acc_ref[...]
            if mxu_pool:
                acc = acc[:, 0, :]                            # (TB, H)
            # mean pooling: multiply once by 1 / clamp(token_count, 1e-9).
            pooled = acc * invcnt_ref[...]                    # (TB, H) f32

            # x = ReLU(pre_classifier(pooled))
            x = jnp.dot(pooled.astype(w1_ref.dtype), w1_ref[...],
                        preferred_element_type=jnp.float32) + b1_ref[...]
            x = jnp.maximum(x, 0.0)

            # dropout: identity at inference time.

            # logits = classifier(x)   (lane-padded output columns)
            out = jnp.dot(x.astype(w2_ref.dtype), w2_ref[...],
                          preferred_element_type=jnp.float32) + b2_ref[...]
            out_ref[...] = out.astype(out_ref.dtype)

    return kernel


# ----------------------------------------------------------------------------
# Tiling / VMEM budgeting
# ----------------------------------------------------------------------------
def _round_up(x, m):
    return ((x + m - 1) // m) * m


def _vmem_capacity_bytes():
    try:
        info = pltpu.get_tpu_info()
        cap = getattr(info, "vmem_capacity_bytes", None)
        if cap:
            return int(cap)
    except Exception:
        pass
    return 64 * 1024 * 1024          # conservative default = v7x per-core VMEM


def _choose_tiles(B, L, H, cp, hid_bytes, w_bytes, tb=None, tl=None):
    """Pick (tb, tl) and a vmem_limit for the grid=(B//tb, L//tl) pipeline."""
    cap = _vmem_capacity_bytes()
    budget = int(cap * 0.70)         # headroom for compiler-internal scratch

    h_lane = _round_up(H, 128)

    def need(tb_, tl_):
        tb_pad = _round_up(tb_, 8)
        tl_lane = _round_up(tl_, 128)
        fixed = (2 * (H * h_lane + H * cp) * w_bytes      # w1, w2 (worst: 2x)
                 + 2 * 8 * (h_lane + cp) * 4              # b1, b2 (f32)
                 + tb_pad * h_lane * 4                    # acc scratch
                 + 2 * tb_pad * cp * 4                    # out (double-buffered)
                 + 2 * tb_pad * 128 * 4)                  # inv_counts
        hid = 2 * tb_pad * tl_ * h_lane * hid_bytes       # streamed hidden
        msk = 2 * tb_pad * tl_lane * hid_bytes            # streamed mask
        return fixed + hid + msk

    min_tl = 128 if L % 128 == 0 else L

    if tb is None:
        if B % 8 != 0:
            tb = B
        else:
            divisors = [t for t in (256, 128, 64, 32, 16, 8) if B % t == 0]
            fitting = [t for t in divisors if need(t, min_tl) <= budget]
            pool = fitting if fitting else divisors
            # keep >=2 grid steps on the parallel axis when possible (v7x 2xTC)
            two_core = [t for t in pool if B // t >= 2]
            tb = two_core[0] if two_core else pool[-1]

    if tl is None:
        if L % 128 != 0:
            tl = L                                        # single full-L tile
        else:
            cands = [t for t in range(L, 0, -128) if L % t == 0]
            tl = cands[-1]                                # 128 fallback
            for t in cands:                               # biggest that fits
                if need(tb, t) <= budget:
                    tl = t
                    break

    vmem_limit = min(cap - (4 << 20), max(need(tb, tl) + (8 << 20), 32 << 20))
    return tb, tl, int(vmem_limit)


# ----------------------------------------------------------------------------
# Wrapper
# ----------------------------------------------------------------------------
def finetune_esm_head(hidden_states, attention_mask, w1, b1, w2, b2,
                      *, tb=None, tl=None):
    """Masked mean-pool + pre_classifier/ReLU + classifier in one Pallas call.

    hidden_states : (B, L, H)   bf16/f32 last_hidden_state (HBM dtype kept)
    attention_mask: (B, L)      0/1 int or float
    w1, b1        : (H, H), (H,)   pre_classifier, weight stored as [in, out]
    w2, b2        : (H, C), (C,)   classifier,     weight stored as [in, out]
    returns       : (B, C) f32 logits
    """
    B, L, H = hidden_states.shape
    C = w2.shape[1]
    cp = _round_up(C, 128)                  # lane-dense padded output columns

    hid_dtype = hidden_states.dtype
    hid_bytes = jnp.dtype(hid_dtype).itemsize
    wt_dtype = jnp.bfloat16                 # MXU-native; halves weight VMEM
    w_bytes = jnp.dtype(wt_dtype).itemsize

    tb, tl, vmem_limit = _choose_tiles(B, L, H, cp, hid_bytes, w_bytes, tb, tl)
    assert B % tb == 0 and L % tl == 0, (B, L, tb, tl)

    # 0/1 mask in the hidden dtype (exact) + precomputed inverse token counts.
    mask = attention_mask.astype(hid_dtype)                       # (B, L)
    counts = jnp.sum(attention_mask.astype(jnp.float32), axis=1, keepdims=True)
    inv_counts = 1.0 / jnp.maximum(counts, 1e-9)                  # (B, 1) f32

    w1c = w1.astype(wt_dtype)
    b1r = b1.reshape(1, H).astype(jnp.float32)
    w2p = jnp.pad(w2, ((0, 0), (0, cp - C))).astype(wt_dtype)
    b2p = jnp.pad(b2.reshape(1, C), ((0, 0), (0, cp - C))).astype(jnp.float32)

    grid = (B // tb, L // tl)

    def _run(mxu_pool, single_buffer_weights):
        # Constant-index weights: fetched once; single-buffer when supported.
        w_kw = (dict(pipeline_mode=pl.Buffered(1))
                if single_buffer_weights else {})

        if mxu_pool:
            mask_arr = mask.reshape(B, 1, L)
            mask_spec = pl.BlockSpec((tb, 1, tl), lambda b, l: (b, 0, l))
            acc_shape = (tb, 1, H)
        else:
            mask_arr = mask
            mask_spec = pl.BlockSpec((tb, tl), lambda b, l: (b, l))
            acc_shape = (tb, H)

        grid_spec = pltpu.PrefetchScalarGridSpec(
            num_scalar_prefetch=0,
            grid=grid,
            in_specs=[
                # Streamed hidden-state tiles (double-buffered by Pallas).
                pl.BlockSpec((tb, tl, H), lambda b, l: (b, l, 0)),
                # Mask tile walking the same (b, l) schedule.
                mask_spec,
                # Per-batch inverse counts, resident across the L reduction.
                pl.BlockSpec((tb, 1), lambda b, l: (b, 0)),
                # Weights / biases: constant index_map -> fetched once.
                pl.BlockSpec((H, H), lambda b, l: (0, 0), **w_kw),
                pl.BlockSpec((1, H), lambda b, l: (0, 0), **w_kw),
                pl.BlockSpec((H, cp), lambda b, l: (0, 0), **w_kw),
                pl.BlockSpec((1, cp), lambda b, l: (0, 0), **w_kw),
            ],
            # Same output block across L -> resident accumulator-style output.
            out_specs=pl.BlockSpec((tb, cp), lambda b, l: (b, 0)),
            scratch_shapes=[pltpu.VMEM(acc_shape, jnp.float32)],
        )
        return pl.pallas_call(
            _make_kernel(mxu_pool),
            out_shape=jax.ShapeDtypeStruct((B, cp), jnp.float32),
            grid_spec=grid_spec,
            compiler_params=pltpu.CompilerParams(
                dimension_semantics=("parallel", "arbitrary"),
                vmem_limit_bytes=vmem_limit,
            ),
        )(hidden_states, mask_arr, inv_counts, w1c, b1r, w2p, b2p)

    # Preferred config first; fall back if this jax/mosaic build rejects the
    # single-buffered weight specs or the batched MXU contraction.
    attempts = [(True, True), (True, False), (False, True), (False, False)]
    out, err = None, None
    for mxu_pool, single_buf in attempts:
        try:
            out = _run(mxu_pool, single_buf)
            break
        except Exception as e:  # noqa: BLE001 - retry with a safer variant
            err = e
            out = None
    if out is None:
        raise err
    return out[:, :C]


def finetune_esm_forward(batch, params):
    """Full FinetuneESM forward (backbone stand-in + Pallas head)."""
    input_ids = batch["input_ids"]            # (B, L) int32
    attention_mask = batch["attention_mask"]  # (B, L)

    # Stand-in for self.llm(...).last_hidden_state: deterministic embedding
    # lookup (plain-JAX glue), kept in bf16 in HBM.
    last_hidden_state = params["embed_table"][input_ids]   # (B, L, H) bf16

    return finetune_esm_head(last_hidden_state, attention_mask,
                             params["w1"], params["b1"],
                             params["w2"], params["b2"])


def _reference(batch, params):
    """Pure-JAX reference of the same forward for a sanity check."""
    hidden = params["embed_table"][batch["input_ids"]]            # bf16
    mask = batch["attention_mask"].astype(jnp.float32)            # (B, L)
    sums = jnp.sum(hidden.astype(jnp.float32) * mask[:, :, None], axis=1)
    counts = jnp.maximum(jnp.sum(mask, axis=1, keepdims=True), 1e-9)
    pooled = sums / counts
    x = jnp.maximum(pooled @ params["w1"] + params["b1"], 0.0)
    return x @ params["w2"] + params["b2"]


if __name__ == "__main__":
    B, L, H, C = 2, 256, 32, 4        # batch, seq, hidden, num_classes
    VOCAB = 33                        # ESM vocab size

    key = jax.random.PRNGKey(0)
    k_emb, k_ids, k_w1, k_b1, k_w2, k_b2 = jax.random.split(key, 6)

    params = {
        "embed_table": (jax.random.normal(k_emb, (VOCAB, H), jnp.float32)
                        * 0.1).astype(jnp.bfloat16),
        "w1": jax.random.normal(k_w1, (H, H), jnp.float32) * 0.1,
        "b1": jax.random.normal(k_b1, (H,), jnp.float32) * 0.01,
        "w2": jax.random.normal(k_w2, (H, C), jnp.float32) * 0.1,
        "b2": jax.random.normal(k_b2, (C,), jnp.float32) * 0.01,
    }

    input_ids = jax.random.randint(k_ids, (B, L), 0, VOCAB, jnp.int32)
    # Padded sequences: second example has its last 96 tokens masked out.
    lengths = jnp.array([L, L - 96], dtype=jnp.int32)
    attention_mask = (jnp.arange(L)[None, :] < lengths[:, None]).astype(
        jnp.int32)
    batch = {"input_ids": input_ids, "attention_mask": attention_mask}

    logits = finetune_esm_forward(batch, params)
    jax.block_until_ready(logits)

    ref = _reference(batch, params)
    assert logits.shape == (B, C)
    # bf16 weights inside the kernel -> loosened tolerance vs f32 reference.
    assert jnp.allclose(logits, ref, atol=1e-2, rtol=2e-2), (
        jnp.max(jnp.abs(logits - ref)))

    print("KERNEL_OK")
</pallas_src>

<mosaic_0001>
module attributes {stable_mosaic.version = 11 : i64} {
  func.func @kernel(%arg0: i32, %arg1: i32, %arg2: memref<2x256x32xbf16, #tpu.memory_space<vmem>>, %arg3: memref<2x1x256xbf16, #tpu.memory_space<vmem>>, %arg4: memref<2x1xf32, #tpu.memory_space<vmem>>, %arg5: memref<32x32xbf16, #tpu.memory_space<vmem>>, %arg6: memref<1x32xf32, #tpu.memory_space<vmem>>, %arg7: memref<32x128xbf16, #tpu.memory_space<vmem>>, %arg8: memref<1x128xf32, #tpu.memory_space<vmem>>, %arg9: memref<2x128xf32, #tpu.memory_space<vmem>>, %arg10: memref<2x1x32xf32, #tpu.memory_space<vmem>>) attributes {dimension_semantics = [#tpu.dimension_semantics<parallel>, #tpu.dimension_semantics<arbitrary>], iteration_bounds = array<i64: 1, 1>, scalar_prefetch = 0 : i64, scratch_operands = 1 : i64, tpu.core_type = #tpu.core_type<tc>, window_params = [{transform_indices = @transform_0, window_bounds = array<i64: 2, 256, 32>}, {transform_indices = @transform_1, window_bounds = array<i64: 2, 1, 256>}, {transform_indices = @transform_2, window_bounds = array<i64: 2, 1>}, {pipeline_mode = #tpu.pipeline_mode<synchronous>, transform_indices = @transform_3, window_bounds = array<i64: 32, 32>}, {pipeline_mode = #tpu.pipeline_mode<synchronous>, transform_indices = @transform_4, window_bounds = array<i64: 1, 32>}, {pipeline_mode = #tpu.pipeline_mode<synchronous>, transform_indices = @transform_5, window_bounds = array<i64: 32, 128>}, {pipeline_mode = #tpu.pipeline_mode<synchronous>, transform_indices = @transform_6, window_bounds = array<i64: 1, 128>}, {transform_indices = @transform_7, window_bounds = array<i64: 2, 128>}]} {
    %c0_i32 = arith.constant 0 : i32
    %0 = arith.cmpi eq, %arg1, %c0_i32 : i32
    %1 = arith.extui %0 : i1 to i32
    %c0_i32_0 = arith.constant 0 : i32
    %2 = arith.cmpi ne, %1, %c0_i32_0 : i32
    scf.if %2 {
      %cst_14 = arith.constant 0.000000e+00 : f32
      %12 = vector.broadcast %cst_14 : f32 to vector<2x1x32xf32>
      %c0_15 = arith.constant 0 : index
      %c0_16 = arith.constant 0 : index
      %c0_17 = arith.constant 0 : index
      %13 = vector.load %arg10[%c0_15, %c0_16, %c0_17] : memref<2x1x32xf32, #tpu.memory_space<vmem>>, vector<2x1x32xf32>
      tpu.vector_store %arg10[%c0_15, %c0_16, %c0_17], %12 {strides = array<i32>} : memref<2x1x32xf32, #tpu.memory_space<vmem>>, vector<2x1x32xf32>,
    } else {
    }
    %c0 = arith.constant 0 : index
    %c0_1 = arith.constant 0 : index
    %c0_2 = arith.constant 0 : index
    %3 = vector.load %arg2[%c0, %c0_1, %c0_2] : memref<2x256x32xbf16, #tpu.memory_space<vmem>>, vector<2x256x32xbf16>
    %c0_3 = arith.constant 0 : index
    %c0_4 = arith.constant 0 : index
    %c0_5 = arith.constant 0 : index
    %4 = vector.load %arg10[%c0_3, %c0_4, %c0_5] : memref<2x1x32xf32, #tpu.memory_space<vmem>>, vector<2x1x32xf32>
    %c0_6 = arith.constant 0 : index
    %c0_7 = arith.constant 0 : index
    %c0_8 = arith.constant 0 : index
    %5 = vector.load %arg3[%c0_6, %c0_7, %c0_8] : memref<2x1x256xbf16, #tpu.memory_space<vmem>>, vector<2x1x256xbf16>
    "tpu.trace_start"() <{level = 10 : i32, message = "bql,blh->bqh"}> : () -> ()
    %cst = arith.constant dense<0.000000e+00> : vector<2x1x32xf32>
    %6 = tpu.matmul %5, %3, %cst {dimension_numbers = #tpu.dot_dimension_numbers<[2], [1], [1], [2], [0, 0, 0, 1, 1, 2], [0], [0]>} : vector<2x1x256xbf16>, vector<2x256x32xbf16>, vector<2x1x32xf32> -> vector<2x1x32xf32>
    "tpu.trace_stop"() : () -> ()
    %7 = arith.addf %4, %6 : vector<2x1x32xf32>
    %c0_9 = arith.constant 0 : index
    %c0_10 = arith.constant 0 : index
    %c0_11 = arith.constant 0 : index
    %8 = vector.load %arg10[%c0_9, %c0_10, %c0_11] : memref<2x1x32xf32, #tpu.memory_space<vmem>>, vector<2x1x32xf32>
    tpu.vector_store %arg10[%c0_9, %c0_10, %c0_11], %7 {strides = array<i32>} : memref<2x1x32xf32, #tpu.memory_space<vmem>>, vector<2x1x32xf32>,
    %c0_i32_12 = arith.constant 0 : i32
    %9 = arith.cmpi eq, %arg1, %c0_i32_12 : i32
    %10 = arith.extui %9 : i1 to i32
    %c0_i32_13 = arith.constant 0 : i32
    %11 = arith.cmpi ne, %10, %c0_i32_13 : i32
    scf.if %11 {
      %c0_14 = arith.constant 0 : index
      %c0_15 = arith.constant 0 : index
      %c0_16 = arith.constant 0 : index
      %12 = vector.load %arg10[%c0_14, %c0_15, %c0_16] : memref<2x1x32xf32, #tpu.memory_space<vmem>>, vector<2x1x32xf32>
      %13 = vector.shape_cast %12 : vector<2x1x32xf32> to vector<2x32xf32>
      %c0_17 = arith.constant 0 : index
      %c0_18 = arith.constant 0 : index
      %14 = vector.load %arg4[%c0_17, %c0_18] : memref<2x1xf32, #tpu.memory_space<vmem>>, vector<2x1xf32>
      %15 = vector.broadcast %14 : vector<2x1xf32> to vector<2x32xf32>
      %16 = arith.mulf %13, %15 : vector<2x32xf32>
      %17 = arith.truncf %16 : vector<2x32xf32> to vector<2x32xbf16>
      %c0_19 = arith.constant 0 : index
      %c0_20 = arith.constant 0 : index
      %18 = vector.load %arg5[%c0_19, %c0_20] : memref<32x32xbf16, #tpu.memory_space<vmem>>, vector<32x32xbf16>
      %cst_21 = arith.constant dense<0.000000e+00> : vector<2x32xf32>
      %19 = tpu.matmul %17, %18, %cst_21 {dimension_numbers = #tpu.dot_dimension_numbers<[1], [0], [0], [1], [0, 0, 1, 1], [], []>} : vector<2x32xbf16>, vector<32x32xbf16>, vector<2x32xf32> -> vector<2x32xf32>
      %c0_22 = arith.constant 0 : index
      %c0_23 = arith.constant 0 : index
      %20 = vector.load %arg6[%c0_22, %c0_23] : memref<1x32xf32, #tpu.memory_space<vmem>>, vector<1x32xf32>
      %21 = vector.broadcast %20 : vector<1x32xf32> to vector<2x32xf32>
      %22 = arith.addf %19, %21 : vector<2x32xf32>
      %cst_24 = arith.constant 0.000000e+00 : f32
      %23 = vector.broadcast %cst_24 : f32 to vector<2x32xf32>
      %24 = arith.maximumf %22, %23 : vector<2x32xf32>
      %25 = arith.truncf %24 : vector<2x32xf32> to vector<2x32xbf16>
      %c0_25 = arith.constant 0 : index
      %c0_26 = arith.constant 0 : index
      %26 = vector.load %arg7[%c0_25, %c0_26] : memref<32x128xbf16, #tpu.memory_space<vmem>>, vector<32x128xbf16>
      %cst_27 = arith.constant dense<0.000000e+00> : vector<2x128xf32>
      %27 = tpu.matmul %25, %26, %cst_27 {dimension_numbers = #tpu.dot_dimension_numbers<[1], [0], [0], [1], [0, 0, 1, 1], [], []>} : vector<2x32xbf16>, vector<32x128xbf16>, vector<2x128xf32> -> vector<2x128xf32>
      %c0_28 = arith.constant 0 : index
      %c0_29 = arith.constant 0 : index
      %28 = vector.load %arg8[%c0_28, %c0_29] : memref<1x128xf32, #tpu.memory_space<vmem>>, vector<1x128xf32>
      %29 = vector.broadcast %28 : vector<1x128xf32> to vector<2x128xf32>
      %30 = arith.addf %27, %29 : vector<2x128xf32>
      %c0_30 = arith.constant 0 : index
      %c0_31 = arith.constant 0 : index
      %31 = vector.load %arg9[%c0_30, %c0_31] : memref<2x128xf32, #tpu.memory_space<vmem>>, vector<2x128xf32>
      tpu.vector_store %arg9[%c0_30, %c0_31], %30 {strides = array<i32>} : memref<2x128xf32, #tpu.memory_space<vmem>>, vector<2x128xf32>,
    } else {
    }
    return
  }
  func.func @transform_0(%arg0: i32, %arg1: i32) -> (i32, i32, i32) {
    %c0_i32 = arith.constant 0 : i32
    %c0_i32_0 = arith.constant 0 : i32
    return %arg0, %arg1, %c0_i32 : i32, i32, i32
  }
  func.func @transform_1(%arg0: i32, %arg1: i32) -> (i32, i32, i32) {
    %c0_i32 = arith.constant 0 : i32
    %c0_i32_0 = arith.constant 0 : i32
    return %arg0, %c0_i32, %arg1 : i32, i32, i32
  }
  func.func @transform_2(%arg0: i32, %arg1: i32) -> (i32, i32) {
    %c0_i32 = arith.constant 0 : i32
    %c0_i32_0 = arith.constant 0 : i32
    return %arg0, %c0_i32 : i32, i32
  }
  func.func @transform_3(%arg0: i32, %arg1: i32) -> (i32, i32) {
    %c0_i32 = arith.constant 0 : i32
    %c0_i32_0 = arith.constant 0 : i32
    %c0_i32_1 = arith.constant 0 : i32
    return %c0_i32, %c0_i32_0 : i32, i32
  }
  func.func @transform_4(%arg0: i32, %arg1: i32) -> (i32, i32) {
    %c0_i32 = arith.constant 0 : i32
    %c0_i32_0 = arith.constant 0 : i32
    %c0_i32_1 = arith.constant 0 : i32
    return %c0_i32, %c0_i32_0 : i32, i32
  }
  func.func @transform_5(%arg0: i32, %arg1: i32) -> (i32, i32) {
    %c0_i32 = arith.constant 0 : i32
    %c0_i32_0 = arith.constant 0 : i32
    %c0_i32_1 = arith.constant 0 : i32
    return %c0_i32, %c0_i32_0 : i32, i32
  }
  func.func @transform_6(%arg0: i32, %arg1: i32) -> (i32, i32) {
    %c0_i32 = arith.constant 0 : i32
    %c0_i32_0 = arith.constant 0 : i32
    %c0_i32_1 = arith.constant 0 : i32
    return %c0_i32, %c0_i32_0 : i32, i32
  }
  func.func @transform_7(%arg0: i32, %arg1: i32) -> (i32, i32) {
    %c0_i32 = arith.constant 0 : i32
    %c0_i32_0 = arith.constant 0 : i32
    return %arg0, %c0_i32 : i32, i32
  }
}

module attributes {stable_mosaic.version = 11 : i64} {
  func.func @kernel(%arg0: i32, %arg1: i32, %arg2: memref<2x256x32xbf16, #tpu.memory_space<vmem>>, %arg3: memref<2x1x256xbf16, #tpu.memory_space<vmem>>, %arg4: memref<2x1xf32, #tpu.memory_space<vmem>>, %arg5: memref<32x32xbf16, #tpu.memory_space<vmem>>, %arg6: memref<1x32xf32, #tpu.memory_space<vmem>>, %arg7: memref<32x128xbf16, #tpu.memory_space<vmem>>, %arg8: memref<1x128xf32, #tpu.memory_space<vmem>>, %arg9: memref<2x128xf32, #tpu.memory_space<vmem>>, %arg10: memref<2x1x32xf32, #tpu.memory_space<vmem>>) attributes {dimension_semantics = [#tpu.dimension_semantics<parallel>, #tpu.dimension_semantics<arbitrary>], iteration_bounds = array<i64: 1, 1>, scalar_prefetch = 0 : i64, scratch_operands = 1 : i64, tpu.core_type = #tpu.core_type<tc>, window_params = [{transform_indices = @transform_0, window_bounds = array<i64: 2, 256, 32>}, {transform_indices = @transform_1, window_bounds = array<i64: 2, 1, 256>}, {transform_indices = @transform_2, window_bounds = array<i64: 2, 1>}, {pipeline_mode = #tpu.pipeline_mode<synchronous>, transform_indices = @transform_3, window_bounds = array<i64: 32, 32>}, {pipeline_mode = #tpu.pipeline_mode<synchronous>, transform_indices = @transform_4, window_bounds = array<i64: 1, 32>}, {pipeline_mode = #tpu.pipeline_mode<synchronous>, transform_indices = @transform_5, window_bounds = array<i64: 32, 128>}, {pipeline_mode = #tpu.pipeline_mode<synchronous>, transform_indices = @transform_6, window_bounds = array<i64: 1, 128>}, {transform_indices = @transform_7, window_bounds = array<i64: 2, 128>}]} {
    %c0_i32 = arith.constant 0 : i32
    %0 = arith.cmpi eq, %arg1, %c0_i32 : i32
    %1 = arith.extui %0 : i1 to i32
    %c0_i32_0 = arith.constant 0 : i32
    %2 = arith.cmpi ne, %1, %c0_i32_0 : i32
    scf.if %2 {
      %cst_14 = arith.constant 0.000000e+00 : f32
      %12 = vector.broadcast %cst_14 : f32 to vector<2x1x32xf32>
      %c0_15 = arith.constant 0 : index
      %c0_16 = arith.constant 0 : index
      %c0_17 = arith.constant 0 : index
      %13 = vector.load %arg10[%c0_15, %c0_16, %c0_17] : memref<2x1x32xf32, #tpu.memory_space<vmem>>, vector<2x1x32xf32>
      tpu.vector_store %arg10[%c0_15, %c0_16, %c0_17], %12 {strides = array<i32>} : memref<2x1x32xf32, #tpu.memory_space<vmem>>, vector<2x1x32xf32>,
    } else {
    }
    %c0 = arith.constant 0 : index
    %c0_1 = arith.constant 0 : index
    %c0_2 = arith.constant 0 : index
    %3 = vector.load %arg2[%c0, %c0_1, %c0_2] : memref<2x256x32xbf16, #tpu.memory_space<vmem>>, vector<2x256x32xbf16>
    %c0_3 = arith.constant 0 : index
    %c0_4 = arith.constant 0 : index
    %c0_5 = arith.constant 0 : index
    %4 = vector.load %arg10[%c0_3, %c0_4, %c0_5] : memref<2x1x32xf32, #tpu.memory_space<vmem>>, vector<2x1x32xf32>
    %c0_6 = arith.constant 0 : index
    %c0_7 = arith.constant 0 : index
    %c0_8 = arith.constant 0 : index
    %5 = vector.load %arg3[%c0_6, %c0_7, %c0_8] : memref<2x1x256xbf16, #tpu.memory_space<vmem>>, vector<2x1x256xbf16>
    "tpu.trace_start"() <{level = 10 : i32, message = "bql,blh->bqh"}> : () -> ()
    %cst = arith.constant dense<0.000000e+00> : vector<2x1x32xf32>
    %6 = tpu.matmul %5, %3, %cst {dimension_numbers = #tpu.dot_dimension_numbers<[2], [1], [1], [2], [0, 0, 0, 1, 1, 2], [0], [0]>} : vector<2x1x256xbf16>, vector<2x256x32xbf16>, vector<2x1x32xf32> -> vector<2x1x32xf32>
    "tpu.trace_stop"() : () -> ()
    %7 = arith.addf %4, %6 : vector<2x1x32xf32>
    %c0_9 = arith.constant 0 : index
    %c0_10 = arith.constant 0 : index
    %c0_11 = arith.constant 0 : index
    %8 = vector.load %arg10[%c0_9, %c0_10, %c0_11] : memref<2x1x32xf32, #tpu.memory_space<vmem>>, vector<2x1x32xf32>
    tpu.vector_store %arg10[%c0_9, %c0_10, %c0_11], %7 {strides = array<i32>} : memref<2x1x32xf32, #tpu.memory_space<vmem>>, vector<2x1x32xf32>,
    %c0_i32_12 = arith.constant 0 : i32
    %9 = arith.cmpi eq, %arg1, %c0_i32_12 : i32
    %10 = arith.extui %9 : i1 to i32
    %c0_i32_13 = arith.constant 0 : i32
    %11 = arith.cmpi ne, %10, %c0_i32_13 : i32
    scf.if %11 {
      %c0_14 = arith.constant 0 : index
      %c0_15 = arith.constant 0 : index
      %c0_16 = arith.constant 0 : index
      %12 = vector.load %arg10[%c0_14, %c0_15, %c0_16] : memref<2x1x32xf32, #tpu.memory_space<vmem>>, vector<2x1x32xf32>
      %13 = vector.shape_cast %12 : vector<2x1x32xf32> to vector<2x32xf32>
      %c0_17 = arith.constant 0 : index
      %c0_18 = arith.constant 0 : index
      %14 = vector.load %arg4[%c0_17, %c0_18] : memref<2x1xf32, #tpu.memory_space<vmem>>, vector<2x1xf32>
      %15 = vector.broadcast %14 : vector<2x1xf32> to vector<2x32xf32>
      %16 = arith.mulf %13, %15 : vector<2x32xf32>
      %17 = arith.truncf %16 : vector<2x32xf32> to vector<2x32xbf16>
      %c0_19 = arith.constant 0 : index
      %c0_20 = arith.constant 0 : index
      %18 = vector.load %arg5[%c0_19, %c0_20] : memref<32x32xbf16, #tpu.memory_space<vmem>>, vector<32x32xbf16>
      %cst_21 = arith.constant dense<0.000000e+00> : vector<2x32xf32>
      %19 = tpu.matmul %17, %18, %cst_21 {dimension_numbers = #tpu.dot_dimension_numbers<[1], [0], [0], [1], [0, 0, 1, 1], [], []>} : vector<2x32xbf16>, vector<32x32xbf16>, vector<2x32xf32> -> vector<2x32xf32>
      %c0_22 = arith.constant 0 : index
      %c0_23 = arith.constant 0 : index
      %20 = vector.load %arg6[%c0_22, %c0_23] : memref<1x32xf32, #tpu.memory_space<vmem>>, vector<1x32xf32>
      %21 = vector.broadcast %20 : vector<1x32xf32> to vector<2x32xf32>
      %22 = arith.addf %19, %21 : vector<2x32xf32>
      %cst_24 = arith.constant 0.000000e+00 : f32
      %23 = vector.broadcast %cst_24 : f32 to vector<2x32xf32>
      %24 = arith.maximumf %22, %23 : vector<2x32xf32>
      %25 = arith.truncf %24 : vector<2x32xf32> to vector<2x32xbf16>
      %c0_25 = arith.constant 0 : index
      %c0_26 = arith.constant 0 : index
      %26 = vector.load %arg7[%c0_25, %c0_26] : memref<32x128xbf16, #tpu.memory_space<vmem>>, vector<32x128xbf16>
      %cst_27 = arith.constant dense<0.000000e+00> : vector<2x128xf32>
      %27 = tpu.matmul %25, %26, %cst_27 {dimension_numbers = #tpu.dot_dimension_numbers<[1], [0], [0], [1], [0, 0, 1, 1], [], []>} : vector<2x32xbf16>, vector<32x128xbf16>, vector<2x128xf32> -> vector<2x128xf32>
      %c0_28 = arith.constant 0 : index
      %c0_29 = arith.constant 0 : index
      %28 = vector.load %arg8[%c0_28, %c0_29] : memref<1x128xf32, #tpu.memory_space<vmem>>, vector<1x128xf32>
      %29 = vector.broadcast %28 : vector<1x128xf32> to vector<2x128xf32>
      %30 = arith.addf %27, %29 : vector<2x128xf32>
      %c0_30 = arith.constant 0 : index
      %c0_31 = arith.constant 0 : index
      %31 = vector.load %arg9[%c0_30, %c0_31] : memref<2x128xf32, #tpu.memory_space<vmem>>, vector<2x128xf32>
      tpu.vector_store %arg9[%c0_30, %c0_31], %30 {strides = array<i32>} : memref<2x128xf32, #tpu.memory_space<vmem>>, vector<2x128xf32>,
    } else {
    }
    return
  }
  func.func @transform_0(%arg0: i32, %arg1: i32) -> (i32, i32, i32) {
    %c0_i32 = arith.constant 0 : i32
    %c0_i32_0 = arith.constant 0 : i32
    return %arg0, %arg1, %c0_i32 : i32, i32, i32
  }
  func.func @transform_1(%arg0: i32, %arg1: i32) -> (i32, i32, i32) {
    %c0_i32 = arith.constant 0 : i32
    %c0_i32_0 = arith.constant 0 : i32
    return %arg0, %c0_i32, %arg1 : i32, i32, i32
  }
  func.func @transform_2(%arg0: i32, %arg1: i32) -> (i32, i32) {
    %c0_i32 = arith.constant 0 : i32
    %c0_i32_0 = arith.constant 0 : i32
    return %arg0, %c0_i32 : i32, i32
  }
  func.func @transform_3(%arg0: i32, %arg1: i32) -> (i32, i32) {
    %c0_i32 = arith.constant 0 : i32
    %c0_i32_0 = arith.constant 0 : i32
    %c0_i32_1 = arith.constant 0 : i32
    return %c0_i32, %c0_i32_0 : i32, i32
  }
  func.func @transform_4(%arg0: i32, %arg1: i32) -> (i32, i32) {
    %c0_i32 = arith.constant 0 : i32
    %c0_i32_0 = arith.constant 0 : i32
    %c0_i32_1 = arith.constant 0 : i32
    return %c0_i32, %c0_i32_0 : i32, i32
  }
  func.func @transform_5(%arg0: i32, %arg1: i32) -> (i32, i32) {
    %c0_i32 = arith.constant 0 : i32
    %c0_i32_0 = arith.constant 0 : i32
    %c0_i32_1 = arith.constant 0 : i32
    return %c0_i32, %c0_i32_0 : i32, i32
  }
  func.func @transform_6(%arg0: i32, %arg1: i32) -> (i32, i32) {
    %c0_i32 = arith.constant 0 : i32
    %c0_i32_0 = arith.constant 0 : i32
    %c0_i32_1 = arith.constant 0 : i32
    return %c0_i32, %c0_i32_0 : i32, i32
  }
  func.func @transform_7(%arg0: i32, %arg1: i32) -> (i32, i32) {
    %c0_i32 = arith.constant 0 : i32
    %c0_i32_0 = arith.constant 0 : i32
    return %arg0, %c0_i32 : i32, i32
  }
}

module attributes {stable_mosaic.version = 11 : i64} {
  func.func @kernel(%arg0: i32, %arg1: i32, %arg2: memref<2x256x32xbf16, #tpu.memory_space<vmem>>, %arg3: memref<2x256xbf16, #tpu.memory_space<vmem>>, %arg4: memref<2x1xf32, #tpu.memory_space<vmem>>, %arg5: memref<32x32xbf16, #tpu.memory_space<vmem>>, %arg6: memref<1x32xf32, #tpu.memory_space<vmem>>, %arg7: memref<32x128xbf16, #tpu.memory_space<vmem>>, %arg8: memref<1x128xf32, #tpu.memory_space<vmem>>, %arg9: memref<2x128xf32, #tpu.memory_space<vmem>>, %arg10: memref<2x32xf32, #tpu.memory_space<vmem>>) attributes {dimension_semantics = [#tpu.dimension_semantics<parallel>, #tpu.dimension_semantics<arbitrary>], iteration_bounds = array<i64: 1, 1>, scalar_prefetch = 0 : i64, scratch_operands = 1 : i64, tpu.core_type = #tpu.core_type<tc>, window_params = [{transform_indices = @transform_0, window_bounds = array<i64: 2, 256, 32>}, {transform_indices = @transform_1, window_bounds = array<i64: 2, 256>}, {transform_indices = @transform_2, window_bounds = array<i64: 2, 1>}, {pipeline_mode = #tpu.pipeline_mode<synchronous>, transform_indices = @transform_3, window_bounds = array<i64: 32, 32>}, {pipeline_mode = #tpu.pipeline_mode<synchronous>, transform_indices = @transform_4, window_bounds = array<i64: 1, 32>}, {pipeline_mode = #tpu.pipeline_mode<synchronous>, transform_indices = @transform_5, window_bounds = array<i64: 32, 128>}, {pipeline_mode = #tpu.pipeline_mode<synchronous>, transform_indices = @transform_6, window_bounds = array<i64: 1, 128>}, {transform_indices = @transform_7, window_bounds = array<i64: 2, 128>}]} {
    %c0_i32 = arith.constant 0 : i32
    %0 = arith.cmpi eq, %arg1, %c0_i32 : i32
    %1 = arith.extui %0 : i1 to i32
    %c0_i32_0 = arith.constant 0 : i32
    %2 = arith.cmpi ne, %1, %c0_i32_0 : i32
    scf.if %2 {
      %cst_11 = arith.constant 0.000000e+00 : f32
      %17 = vector.broadcast %cst_11 : f32 to vector<2x32xf32>
      %c0_12 = arith.constant 0 : index
      %c0_13 = arith.constant 0 : index
      %18 = vector.load %arg10[%c0_12, %c0_13] : memref<2x32xf32, #tpu.memory_space<vmem>>, vector<2x32xf32>
      tpu.vector_store %arg10[%c0_12, %c0_13], %17 {strides = array<i32>} : memref<2x32xf32, #tpu.memory_space<vmem>>, vector<2x32xf32>,
    } else {
    }
    %c0 = arith.constant 0 : index
    %c0_1 = arith.constant 0 : index
    %c0_2 = arith.constant 0 : index
    %3 = vector.load %arg2[%c0, %c0_1, %c0_2] : memref<2x256x32xbf16, #tpu.memory_space<vmem>>, vector<2x256x32xbf16>
    %c0_3 = arith.constant 0 : index
    %c0_4 = arith.constant 0 : index
    %4 = vector.load %arg3[%c0_3, %c0_4] : memref<2x256xbf16, #tpu.memory_space<vmem>>, vector<2x256xbf16>
    %5 = arith.extf %4 : vector<2x256xbf16> to vector<2x256xf32>
    %c0_5 = arith.constant 0 : index
    %c0_6 = arith.constant 0 : index
    %6 = vector.load %arg10[%c0_5, %c0_6] : memref<2x32xf32, #tpu.memory_space<vmem>>, vector<2x32xf32>
    %7 = arith.extf %3 : vector<2x256x32xbf16> to vector<2x256x32xf32>
    %8 = vector.shape_cast %5 : vector<2x256xf32> to vector<2x256x1xf32>
    %9 = vector.broadcast %8 : vector<2x256x1xf32> to vector<2x256x32xf32>
    %10 = arith.mulf %7, %9 : vector<2x256x32xf32>
    %cst = arith.constant dense<0.000000e+00> : vector<2x32xf32>
    %11 = vector.multi_reduction <add>, %10, %cst [1] : vector<2x256x32xf32> to vector<2x32xf32>
    %12 = arith.addf %6, %11 : vector<2x32xf32>
    %c0_7 = arith.constant 0 : index
    %c0_8 = arith.constant 0 : index
    %13 = vector.load %arg10[%c0_7, %c0_8] : memref<2x32xf32, #tpu.memory_space<vmem>>, vector<2x32xf32>
    tpu.vector_store %arg10[%c0_7, %c0_8], %12 {strides = array<i32>} : memref<2x32xf32, #tpu.memory_space<vmem>>, vector<2x32xf32>,
    %c0_i32_9 = arith.constant 0 : i32
    %14 = arith.cmpi eq, %arg1, %c0_i32_9 : i32
    %15 = arith.extui %14 : i1 to i32
    %c0_i32_10 = arith.constant 0 : i32
    %16 = arith.cmpi ne, %15, %c0_i32_10 : i32
    scf.if %16 {
      %c0_11 = arith.constant 0 : index
      %c0_12 = arith.constant 0 : index
      %17 = vector.load %arg10[%c0_11, %c0_12] : memref<2x32xf32, #tpu.memory_space<vmem>>, vector<2x32xf32>
      %c0_13 = arith.constant 0 : index
      %c0_14 = arith.constant 0 : index
      %18 = vector.load %arg4[%c0_13, %c0_14] : memref<2x1xf32, #tpu.memory_space<vmem>>, vector<2x1xf32>
      %19 = vector.broadcast %18 : vector<2x1xf32> to vector<2x32xf32>
      %20 = arith.mulf %17, %19 : vector<2x32xf32>
      %21 = arith.truncf %20 : vector<2x32xf32> to vector<2x32xbf16>
      %c0_15 = arith.constant 0 : index
      %c0_16 = arith.constant 0 : index
      %22 = vector.load %arg5[%c0_15, %c0_16] : memref<32x32xbf16, #tpu.memory_space<vmem>>, vector<32x32xbf16>
      %cst_17 = arith.constant dense<0.000000e+00> : vector<2x32xf32>
      %23 = tpu.matmul %21, %22, %cst_17 {dimension_numbers = #tpu.dot_dimension_numbers<[1], [0], [0], [1], [0, 0, 1, 1], [], []>} : vector<2x32xbf16>, vector<32x32xbf16>, vector<2x32xf32> -> vector<2x32xf32>
      %c0_18 = arith.constant 0 : index
      %c0_19 = arith.constant 0 : index
      %24 = vector.load %arg6[%c0_18, %c0_19] : memref<1x32xf32, #tpu.memory_space<vmem>>, vector<1x32xf32>
      %25 = vector.broadcast %24 : vector<1x32xf32> to vector<2x32xf32>
      %26 = arith.addf %23, %25 : vector<2x32xf32>
      %cst_20 = arith.constant 0.000000e+00 : f32
      %27 = vector.broadcast %cst_20 : f32 to vector<2x32xf32>
      %28 = arith.maximumf %26, %27 : vector<2x32xf32>
      %29 = arith.truncf %28 : vector<2x32xf32> to vector<2x32xbf16>
      %c0_21 = arith.constant 0 : index
      %c0_22 = arith.constant 0 : index
      %30 = vector.load %arg7[%c0_21, %c0_22] : memref<32x128xbf16, #tpu.memory_space<vmem>>, vector<32x128xbf16>
      %cst_23 = arith.constant dense<0.000000e+00> : vector<2x128xf32>
      %31 = tpu.matmul %29, %30, %cst_23 {dimension_numbers = #tpu.dot_dimension_numbers<[1], [0], [0], [1], [0, 0, 1, 1], [], []>} : vector<2x32xbf16>, vector<32x128xbf16>, vector<2x128xf32> -> vector<2x128xf32>
      %c0_24 = arith.constant 0 : index
      %c0_25 = arith.constant 0 : index
      %32 = vector.load %arg8[%c0_24, %c0_25] : memref<1x128xf32, #tpu.memory_space<vmem>>, vector<1x128xf32>
      %33 = vector.broadcast %32 : vector<1x128xf32> to vector<2x128xf32>
      %34 = arith.addf %31, %33 : vector<2x128xf32>
      %c0_26 = arith.constant 0 : index
      %c0_27 = arith.constant 0 : index
      %35 = vector.load %arg9[%c0_26, %c0_27] : memref<2x128xf32, #tpu.memory_space<vmem>>, vector<2x128xf32>
      tpu.vector_store %arg9[%c0_26, %c0_27], %34 {strides = array<i32>} : memref<2x128xf32, #tpu.memory_space<vmem>>, vector<2x128xf32>,
    } else {
    }
    return
  }
  func.func @transform_0(%arg0: i32, %arg1: i32) -> (i32, i32, i32) {
    %c0_i32 = arith.constant 0 : i32
    %c0_i32_0 = arith.constant 0 : i32
    return %arg0, %arg1, %c0_i32 : i32, i32, i32
  }
  func.func @transform_1(%arg0: i32, %arg1: i32) -> (i32, i32) {
    %c0_i32 = arith.constant 0 : i32
    return %arg0, %arg1 : i32, i32
  }
  func.func @transform_2(%arg0: i32, %arg1: i32) -> (i32, i32) {
    %c0_i32 = arith.constant 0 : i32
    %c0_i32_0 = arith.constant 0 : i32
    return %arg0, %c0_i32 : i32, i32
  }
  func.func @transform_3(%arg0: i32, %arg1: i32) -> (i32, i32) {
    %c0_i32 = arith.constant 0 : i32
    %c0_i32_0 = arith.constant 0 : i32
    %c0_i32_1 = arith.constant 0 : i32
    return %c0_i32, %c0_i32_0 : i32, i32
  }
  func.func @transform_4(%arg0: i32, %arg1: i32) -> (i32, i32) {
    %c0_i32 = arith.constant 0 : i32
    %c0_i32_0 = arith.constant 0 : i32
    %c0_i32_1 = arith.constant 0 : i32
    return %c0_i32, %c0_i32_0 : i32, i32
  }
  func.func @transform_5(%arg0: i32, %arg1: i32) -> (i32, i32) {
    %c0_i32 = arith.constant 0 : i32
    %c0_i32_0 = arith.constant 0 : i32
    %c0_i32_1 = arith.constant 0 : i32
    return %c0_i32, %c0_i32_0 : i32, i32
  }
  func.func @transform_6(%arg0: i32, %arg1: i32) -> (i32, i32) {
    %c0_i32 = arith.constant 0 : i32
    %c0_i32_0 = arith.constant 0 : i32
    %c0_i32_1 = arith.constant 0 : i32
    return %c0_i32, %c0_i32_0 : i32, i32
  }
  func.func @transform_7(%arg0: i32, %arg1: i32) -> (i32, i32) {
    %c0_i32 = arith.constant 0 : i32
    %c0_i32_0 = arith.constant 0 : i32
    return %arg0, %c0_i32 : i32, i32
  }
}

module attributes {stable_mosaic.version = 11 : i64} {
  func.func @kernel(%arg0: i32, %arg1: i32, %arg2: memref<2x256x32xbf16, #tpu.memory_space<vmem>>, %arg3: memref<2x256xbf16, #tpu.memory_space<vmem>>, %arg4: memref<2x1xf32, #tpu.memory_space<vmem>>, %arg5: memref<32x32xbf16, #tpu.memory_space<vmem>>, %arg6: memref<1x32xf32, #tpu.memory_space<vmem>>, %arg7: memref<32x128xbf16, #tpu.memory_space<vmem>>, %arg8: memref<1x128xf32, #tpu.memory_space<vmem>>, %arg9: memref<2x128xf32, #tpu.memory_space<vmem>>, %arg10: memref<2x32xf32, #tpu.memory_space<vmem>>) attributes {dimension_semantics = [#tpu.dimension_semantics<parallel>, #tpu.dimension_semantics<arbitrary>], iteration_bounds = array<i64: 1, 1>, scalar_prefetch = 0 : i64, scratch_operands = 1 : i64, tpu.core_type = #tpu.core_type<tc>, window_params = [{transform_indices = @transform_0, window_bounds = array<i64: 2, 256, 32>}, {transform_indices = @transform_1, window_bounds = array<i64: 2, 256>}, {transform_indices = @transform_2, window_bounds = array<i64: 2, 1>}, {pipeline_mode = #tpu.pipeline_mode<synchronous>, transform_indices = @transform_3, window_bounds = array<i64: 32, 32>}, {pipeline_mode = #tpu.pipeline_mode<synchronous>, transform_indices = @transform_4, window_bounds = array<i64: 1, 32>}, {pipeline_mode = #tpu.pipeline_mode<synchronous>, transform_indices = @transform_5, window_bounds = array<i64: 32, 128>}, {pipeline_mode = #tpu.pipeline_mode<synchronous>, transform_indices = @transform_6, window_bounds = array<i64: 1, 128>}, {transform_indices = @transform_7, window_bounds = array<i64: 2, 128>}]} {
    %c0_i32 = arith.constant 0 : i32
    %0 = arith.cmpi eq, %arg1, %c0_i32 : i32
    %1 = arith.extui %0 : i1 to i32
    %c0_i32_0 = arith.constant 0 : i32
    %2 = arith.cmpi ne, %1, %c0_i32_0 : i32
    scf.if %2 {
      %cst_11 = arith.constant 0.000000e+00 : f32
      %17 = vector.broadcast %cst_11 : f32 to vector<2x32xf32>
      %c0_12 = arith.constant 0 : index
      %c0_13 = arith.constant 0 : index
      %18 = vector.load %arg10[%c0_12, %c0_13] : memref<2x32xf32, #tpu.memory_space<vmem>>, vector<2x32xf32>
      tpu.vector_store %arg10[%c0_12, %c0_13], %17 {strides = array<i32>} : memref<2x32xf32, #tpu.memory_space<vmem>>, vector<2x32xf32>,
    } else {
    }
    %c0 = arith.constant 0 : index
    %c0_1 = arith.constant 0 : index
    %c0_2 = arith.constant 0 : index
    %3 = vector.load %arg2[%c0, %c0_1, %c0_2] : memref<2x256x32xbf16, #tpu.memory_space<vmem>>, vector<2x256x32xbf16>
    %c0_3 = arith.constant 0 : index
    %c0_4 = arith.constant 0 : index
    %4 = vector.load %arg3[%c0_3, %c0_4] : memref<2x256xbf16, #tpu.memory_space<vmem>>, vector<2x256xbf16>
    %5 = arith.extf %4 : vector<2x256xbf16> to vector<2x256xf32>
    %c0_5 = arith.constant 0 : index
    %c0_6 = arith.constant 0 : index
    %6 = vector.load %arg10[%c0_5, %c0_6] : memref<2x32xf32, #tpu.memory_space<vmem>>, vector<2x32xf32>
    %7 = arith.extf %3 : vector<2x256x32xbf16> to vector<2x256x32xf32>
    %8 = vector.shape_cast %5 : vector<2x256xf32> to vector<2x256x1xf32>
    %9 = vector.broadcast %8 : vector<2x256x1xf32> to vector<2x256x32xf32>
    %10 = arith.mulf %7, %9 : vector<2x256x32xf32>
    %cst = arith.constant dense<0.000000e+00> : vector<2x32xf32>
    %11 = vector.multi_reduction <add>, %10, %cst [1] : vector<2x256x32xf32> to vector<2x32xf32>
    %12 = arith.addf %6, %11 : vector<2x32xf32>
    %c0_7 = arith.constant 0 : index
    %c0_8 = arith.constant 0 : index
    %13 = vector.load %arg10[%c0_7, %c0_8] : memref<2x32xf32, #tpu.memory_space<vmem>>, vector<2x32xf32>
    tpu.vector_store %arg10[%c0_7, %c0_8], %12 {strides = array<i32>} : memref<2x32xf32, #tpu.memory_space<vmem>>, vector<2x32xf32>,
    %c0_i32_9 = arith.constant 0 : i32
    %14 = arith.cmpi eq, %arg1, %c0_i32_9 : i32
    %15 = arith.extui %14 : i1 to i32
    %c0_i32_10 = arith.constant 0 : i32
    %16 = arith.cmpi ne, %15, %c0_i32_10 : i32
    scf.if %16 {
      %c0_11 = arith.constant 0 : index
      %c0_12 = arith.constant 0 : index
      %17 = vector.load %arg10[%c0_11, %c0_12] : memref<2x32xf32, #tpu.memory_space<vmem>>, vector<2x32xf32>
      %c0_13 = arith.constant 0 : index
      %c0_14 = arith.constant 0 : index
      %18 = vector.load %arg4[%c0_13, %c0_14] : memref<2x1xf32, #tpu.memory_space<vmem>>, vector<2x1xf32>
      %19 = vector.broadcast %18 : vector<2x1xf32> to vector<2x32xf32>
      %20 = arith.mulf %17, %19 : vector<2x32xf32>
      %21 = arith.truncf %20 : vector<2x32xf32> to vector<2x32xbf16>
      %c0_15 = arith.constant 0 : index
      %c0_16 = arith.constant 0 : index
      %22 = vector.load %arg5[%c0_15, %c0_16] : memref<32x32xbf16, #tpu.memory_space<vmem>>, vector<32x32xbf16>
      %cst_17 = arith.constant dense<0.000000e+00> : vector<2x32xf32>
      %23 = tpu.matmul %21, %22, %cst_17 {dimension_numbers = #tpu.dot_dimension_numbers<[1], [0], [0], [1], [0, 0, 1, 1], [], []>} : vector<2x32xbf16>, vector<32x32xbf16>, vector<2x32xf32> -> vector<2x32xf32>
      %c0_18 = arith.constant 0 : index
      %c0_19 = arith.constant 0 : index
      %24 = vector.load %arg6[%c0_18, %c0_19] : memref<1x32xf32, #tpu.memory_space<vmem>>, vector<1x32xf32>
      %25 = vector.broadcast %24 : vector<1x32xf32> to vector<2x32xf32>
      %26 = arith.addf %23, %25 : vector<2x32xf32>
      %cst_20 = arith.constant 0.000000e+00 : f32
      %27 = vector.broadcast %cst_20 : f32 to vector<2x32xf32>
      %28 = arith.maximumf %26, %27 : vector<2x32xf32>
      %29 = arith.truncf %28 : vector<2x32xf32> to vector<2x32xbf16>
      %c0_21 = arith.constant 0 : index
      %c0_22 = arith.constant 0 : index
      %30 = vector.load %arg7[%c0_21, %c0_22] : memref<32x128xbf16, #tpu.memory_space<vmem>>, vector<32x128xbf16>
      %cst_23 = arith.constant dense<0.000000e+00> : vector<2x128xf32>
      %31 = tpu.matmul %29, %30, %cst_23 {dimension_numbers = #tpu.dot_dimension_numbers<[1], [0], [0], [1], [0, 0, 1, 1], [], []>} : vector<2x32xbf16>, vector<32x128xbf16>, vector<2x128xf32> -> vector<2x128xf32>
      %c0_24 = arith.constant 0 : index
      %c0_25 = arith.constant 0 : index
      %32 = vector.load %arg8[%c0_24, %c0_25] : memref<1x128xf32, #tpu.memory_space<vmem>>, vector<1x128xf32>
      %33 = vector.broadcast %32 : vector<1x128xf32> to vector<2x128xf32>
      %34 = arith.addf %31, %33 : vector<2x128xf32>
      %c0_26 = arith.constant 0 : index
      %c0_27 = arith.constant 0 : index
      %35 = vector.load %arg9[%c0_26, %c0_27] : memref<2x128xf32, #tpu.memory_space<vmem>>, vector<2x128xf32>
      tpu.vector_store %arg9[%c0_26, %c0_27], %34 {strides = array<i32>} : memref<2x128xf32, #tpu.memory_space<vmem>>, vector<2x128xf32>,
    } else {
    }
    return
  }
  func.func @transform_0(%arg0: i32, %arg1: i32) -> (i32, i32, i32) {
    %c0_i32 = arith.constant 0 : i32
    %c0_i32_0 = arith.constant 0 : i32
    return %arg0, %arg1, %c0_i32 : i32, i32, i32
  }
  func.func @transform_1(%arg0: i32, %arg1: i32) -> (i32, i32) {
    %c0_i32 = arith.constant 0 : i32
    return %arg0, %arg1 : i32, i32
  }
  func.func @transform_2(%arg0: i32, %arg1: i32) -> (i32, i32) {
    %c0_i32 = arith.constant 0 : i32
    %c0_i32_0 = arith.constant 0 : i32
    return %arg0, %c0_i32 : i32, i32
  }
  func.func @transform_3(%arg0: i32, %arg1: i32) -> (i32, i32) {
    %c0_i32 = arith.constant 0 : i32
    %c0_i32_0 = arith.constant 0 : i32
    %c0_i32_1 = arith.constant 0 : i32
    return %c0_i32, %c0_i32_0 : i32, i32
  }
  func.func @transform_4(%arg0: i32, %arg1: i32) -> (i32, i32) {
    %c0_i32 = arith.constant 0 : i32
    %c0_i32_0 = arith.constant 0 : i32
    %c0_i32_1 = arith.constant 0 : i32
    return %c0_i32, %c0_i32_0 : i32, i32
  }
  func.func @transform_5(%arg0: i32, %arg1: i32) -> (i32, i32) {
    %c0_i32 = arith.constant 0 : i32
    %c0_i32_0 = arith.constant 0 : i32
    %c0_i32_1 = arith.constant 0 : i32
    return %c0_i32, %c0_i32_0 : i32, i32
  }
  func.func @transform_6(%arg0: i32, %arg1: i32) -> (i32, i32) {
    %c0_i32 = arith.constant 0 : i32
    %c0_i32_0 = arith.constant 0 : i32
    %c0_i32_1 = arith.constant 0 : i32
    return %c0_i32, %c0_i32_0 : i32, i32
  }
  func.func @transform_7(%arg0: i32, %arg1: i32) -> (i32, i32) {
    %c0_i32 = arith.constant 0 : i32
    %c0_i32_0 = arith.constant 0 : i32
    return %arg0, %c0_i32 : i32, i32
  }
}

</mosaic_0001>

<llo_original>
// kernel: tpu_custom_call.1
$region0: #{tpu_custom_call.1}
  #allocation0 [shape = 'u32[]', space=smem, size = 0x4, offset = 0x4, fixed_abs, tag = 'smem constant byte address 0x4 - core index']
  #allocation1 [shape = 'u32[144,128]{1,0:T(1,128)}', space=vmem, size = 0x12000, scoped, tag = 'internal scratch']
  #allocation2 [shape = 'f32[2,1,32]{2,1,0:T(1,128)}', space=vmem, size = 0x400, scoped, tag = 'scratch operand']
  %s0 = inlined_call_operand.vmem [shape: bf16[2,256,32], index: 0, kind: input, shape index: {}]
  %s1 = inlined_call_operand.vmem [shape: bf16[2,1,256], index: 1, kind: input, shape index: {}]
  %s2 = inlined_call_operand.vmem [shape: f32[2,1], index: 2, kind: input, shape index: {}]
  %s3 = inlined_call_operand.vmem [shape: bf16[32,32], index: 3, kind: input, shape index: {}]
  %s4 = inlined_call_operand.vmem [shape: f32[1,32], index: 4, kind: input, shape index: {}]
  %s5 = inlined_call_operand.vmem [shape: bf16[32,128], index: 5, kind: input, shape index: {}]
  %s6 = inlined_call_operand.vmem [shape: f32[1,128], index: 6, kind: input, shape index: {}]
  %s7 = inlined_call_operand.hbm [shape: f32[2,128], index: 7, kind: output, shape index: {}]
  %s8 = sld [smem:[#allocation0]]
  $region46: #{tpu_custom_call.1} parent=0
    _
  %s10 = ssub.s32 1, %s8
  %s11 = scalar_select 0, %s10, %s8
  $region1: #{tpu_custom_call.1} parent=0
    #allocation3 [shape = 'u8[1024]{0}', space=vmem, size = 0x400, scoped, tag = 'output window, operand 0, single buffered']
    #allocation4 [shape = 's32[1]{0}', space=sflag, size = 0x4, scoped, tag = 'scoped memory for tpu_custom_call.1']
    %12 = vsyncpa [#allocation4], 0
    // Predicated region
    $region2: #{tpu_custom_call.1} parent=1 // pred_check
      _
    $region3: #{tpu_custom_call.1} parent=1 // pred_check_branch
      %14 = sbr.rel (0) target = $region5
    $region4: #{tpu_custom_call.1} parent=1 // pred_region
      _
    $region5: #{tpu_custom_call.1} parent=1 // pred_fallthru
      _
    // Predicated region
    $region6: #{tpu_custom_call.1} parent=1 // pred_check
      _
    $region7: #{tpu_custom_call.1} parent=1 // pred_check_branch
      %16 = sbr.rel (0) target = $region9
    $region8: #{tpu_custom_call.1} parent=1 // pred_region
      _
    $region9: #{tpu_custom_call.1} parent=1 // pred_fallthru
      _
    // Predicated region
    $region10: #{tpu_custom_call.1} parent=1 // pred_check
      _
    $region11: #{tpu_custom_call.1} parent=1 // pred_check_branch
      %18 = sbr.rel (0) target = $region13
    $region12: #{tpu_custom_call.1} parent=1 // pred_region
      _
    $region13: #{tpu_custom_call.1} parent=1 // pred_fallthru
      _
    // Predicated region
    $region14: #{tpu_custom_call.1} parent=1 // pred_check
      _
    $region15: #{tpu_custom_call.1} parent=1 // pred_check_branch
      %20 = sbr.rel (0) target = $region17
    $region16: #{tpu_custom_call.1} parent=1 // pred_region
      _
    $region17: #{tpu_custom_call.1} parent=1 // pred_fallthru
      _
    // Predicated region
    $region18: #{tpu_custom_call.1} parent=1 // pred_check
      _
    $region19: #{tpu_custom_call.1} parent=1 // pred_check_branch
      %22 = sbr.rel (0) target = $region21
    $region20: #{tpu_custom_call.1} parent=1 // pred_region
      _
    $region21: #{tpu_custom_call.1} parent=1 // pred_fallthru
      _
    // Predicated region
    $region22: #{tpu_custom_call.1} parent=1 // pred_check
      _
    $region23: #{tpu_custom_call.1} parent=1 // pred_check_branch
      %24 = sbr.rel (0) target = $region25
    $region24: #{tpu_custom_call.1} parent=1 // pred_region
      _
    $region25: #{tpu_custom_call.1} parent=1 // pred_fallthru
      _
    // Predicated region
    $region26: #{tpu_custom_call.1} parent=1 // pred_check
      _
    $region27: #{tpu_custom_call.1} parent=1 // pred_check_branch
      %26 = sbr.rel (0) target = $region29
    $region28: #{tpu_custom_call.1} parent=1 // pred_region
      _
    $region29: #{tpu_custom_call.1} parent=1 // pred_fallthru
      _
    %p28 = scmp.eq.s32.totalorder 0, 0
    // Predicated region
    $region30: #{tpu_custom_call.1} parent=1 // pred_check
      %p29 = pneg %p28
    $region31: #{tpu_custom_call.1} parent=1 // pred_check_branch
      %31 = sbr.rel (%p29) target = $region33
    $region32: #{tpu_custom_call.1} parent=1 // pred_region
      %vm32 = vcmask 253952
      %33 = vst.msk [vmem:[#allocation2] sm:$0x1] %vm32, 0.0
      %34 = vst.msk [vmem:[#allocation2 + $0x1] sm:$0x1] %vm32, 0.0
    $region33: #{tpu_custom_call.1} parent=1 // pred_fallthru
      _
    %v35 = vld [vmem:[%s0] sm:$0xf]
    %v36 = vld [vmem:[%s0 + $0x4] sm:$0xf]
    %v37 = vld [vmem:[%s0 + $0x8] sm:$0xf]
    %v38 = vld [vmem:[%s0 + $0xc] sm:$0xf]
    %v39 = vld [vmem:[%s0 + $0x10] sm:$0xf]
    %v40 = vld [vmem:[%s0 + $0x14] sm:$0xf]
    %v41 = vld [vmem:[%s0 + $0x18] sm:$0xf]
    %v42 = vld [vmem:[%s0 + $0x1c] sm:$0xf]
    %v43 = vld [vmem:[%s0 + $0x20] sm:$0xf]
    %v44 = vld [vmem:[%s0 + $0x24] sm:$0xf]
    %v45 = vld [vmem:[%s0 + $0x28] sm:$0xf]
    %v46 = vld [vmem:[%s0 + $0x2c] sm:$0xf]
    %v47 = vld [vmem:[%s0 + $0x30] sm:$0xf]
    %v48 = vld [vmem:[%s0 + $0x34] sm:$0xf]
    %v49 = vld [vmem:[%s0 + $0x38] sm:$0xf]
    %v50 = vld [vmem:[%s0 + $0x3c] sm:$0xf]
    %v51 = vld [vmem:[%s0 + $0x40] sm:$0xf]
    %v52 = vld [vmem:[%s0 + $0x44] sm:$0xf]
    %v53 = vld [vmem:[%s0 + $0x48] sm:$0xf]
    %v54 = vld [vmem:[%s0 + $0x4c] sm:$0xf]
    %v55 = vld [vmem:[%s0 + $0x50] sm:$0xf]
    %v56 = vld [vmem:[%s0 + $0x54] sm:$0xf]
    %v57 = vld [vmem:[%s0 + $0x58] sm:$0xf]
    %v58 = vld [vmem:[%s0 + $0x5c] sm:$0xf]
    %v59 = vld [vmem:[%s0 + $0x60] sm:$0xf]
    %v60 = vld [vmem:[%s0 + $0x64] sm:$0xf]
    %v61 = vld [vmem:[%s0 + $0x68] sm:$0xf]
    %v62 = vld [vmem:[%s0 + $0x6c] sm:$0xf]
    %v63 = vld [vmem:[%s0 + $0x70] sm:$0xf]
    %v64 = vld [vmem:[%s0 + $0x74] sm:$0xf]
    %v65 = vld [vmem:[%s0 + $0x78] sm:$0xf]
    %v66 = vld [vmem:[%s0 + $0x7c] sm:$0xf]
    %v67 = vld [vmem:[%s0 + $0x80] sm:$0xf]
    %v68 = vld [vmem:[%s0 + $0x84] sm:$0xf]
    %v69 = vld [vmem:[%s0 + $0x88] sm:$0xf]
    %v70 = vld [vmem:[%s0 + $0x8c] sm:$0xf]
    %v71 = vld [vmem:[%s0 + $0x90] sm:$0xf]
    %v72 = vld [vmem:[%s0 + $0x94] sm:$0xf]
    %v73 = vld [vmem:[%s0 + $0x98] sm:$0xf]
    %v74 = vld [vmem:[%s0 + $0x9c] sm:$0xf]
    %v75 = vld [vmem:[%s0 + $0xa0] sm:$0xf]
    %v76 = vld [vmem:[%s0 + $0xa4] sm:$0xf]
    %v77 = vld [vmem:[%s0 + $0xa8] sm:$0xf]
    %v78 = vld [vmem:[%s0 + $0xac] sm:$0xf]
    %v79 = vld [vmem:[%s0 + $0xb0] sm:$0xf]
    %v80 = vld [vmem:[%s0 + $0xb4] sm:$0xf]
    %v81 = vld [vmem:[%s0 + $0xb8] sm:$0xf]
    %v82 = vld [vmem:[%s0 + $0xbc] sm:$0xf]
    %v83 = vld [vmem:[%s0 + $0xc0] sm:$0xf]
    %v84 = vld [vmem:[%s0 + $0xc4] sm:$0xf]
    %v85 = vld [vmem:[%s0 + $0xc8] sm:$0xf]
    %v86 = vld [vmem:[%s0 + $0xcc] sm:$0xf]
    %v87 = vld [vmem:[%s0 + $0xd0] sm:$0xf]
    %v88 = vld [vmem:[%s0 + $0xd4] sm:$0xf]
    %v89 = vld [vmem:[%s0 + $0xd8] sm:$0xf]
    %v90 = vld [vmem:[%s0 + $0xdc] sm:$0xf]
    %v91 = vld [vmem:[%s0 + $0xe0] sm:$0xf]
    %v92 = vld [vmem:[%s0 + $0xe4] sm:$0xf]
    %v93 = vld [vmem:[%s0 + $0xe8] sm:$0xf]
    %v94 = vld [vmem:[%s0 + $0xec] sm:$0xf]
    %v95 = vld [vmem:[%s0 + $0xf0] sm:$0xf]
    %v96 = vld [vmem:[%s0 + $0xf4] sm:$0xf]
    %v97 = vld [vmem:[%s0 + $0xf8] sm:$0xf]
    %v98 = vld [vmem:[%s0 + $0xfc] sm:$0xf]
    %v99 = vld [vmem:[#allocation2] sm:$0x1]
    %v100 = vld [vmem:[#allocation2 + $0x1] sm:$0x1]
    %v101 = vld [vmem:[%s1] sm:$0x3]
    %v102 = vld [vmem:[%s1 + $0x2] sm:$0x3]
    %v105 = vunpack.c.l.s4 1966171168
    %v106 = vunpack.c.0.s8 %v105
    %v107 = vlaneseq
    %v108 = vshrl.u32 %v107, 7
    %v109 = vsub.s32 %v106, %v108
    %v110 = vrot.slane %v101, %v109
    %v111 = vcombine.high %v110, %v110
    %v113 = vunpack.c.l.s4 1966171168
    %v114 = vunpack.c.0.s8 %v113
    %v115 = vlaneseq
    %v116 = vshrl.u32 %v115, 7
    %v117 = vsub.s32 %v114, %v116
    %v118 = vrot.slane %v110, %v117
    %v120 = vunpack.c.l.s4 1966171168
    %v121 = vunpack.c.0.s8 %v120
    %v122 = vlaneseq
    %v123 = vshrl.u32 %v122, 7
    %v124 = vsub.s32 %v121, %v123
    %v125 = vrot.slane %v111, %v124
    %v160 = vunpack.c.l.b16 %v35
    %v161 = vunpack.c.l.b16 %v36
    %v162 = vunpack.c.l.b16 %v37
    %v163 = vunpack.c.l.b16 %v38
    %v164 = vunpack.c.l.b16 %v39
    %v165 = vunpack.c.l.b16 %v40
    %v166 = vunpack.c.l.b16 %v41
    %v167 = vunpack.c.l.b16 %v42
    %v168 = vunpack.c.l.b16 %v43
    %v169 = vunpack.c.l.b16 %v44
    %v170 = vunpack.c.l.b16 %v45
    %v171 = vunpack.c.l.b16 %v46
    %v172 = vunpack.c.l.b16 %v47
    %v173 = vunpack.c.l.b16 %v48
    %v174 = vunpack.c.l.b16 %v49
    %v175 = vunpack.c.l.b16 %v50
    %v176 = vunpack.c.l.b16 %v51
    %v177 = vunpack.c.l.b16 %v52
    %v178 = vunpack.c.l.b16 %v53
    %v179 = vunpack.c.l.b16 %v54
    %v180 = vunpack.c.l.b16 %v55
    %v181 = vunpack.c.l.b16 %v56
    %v182 = vunpack.c.l.b16 %v57
    %v183 = vunpack.c.l.b16 %v58
    %v184 = vunpack.c.l.b16 %v59
    %v185 = vunpack.c.l.b16 %v60
    %v186 = vunpack.c.l.b16 %v61
    %v187 = vunpack.c.l.b16 %v62
    %v188 = vunpack.c.l.b16 %v63
    %v189 = vunpack.c.l.b16 %v64
    %v190 = vunpack.c.l.b16 %v65
    %v191 = vunpack.c.l.b16 %v66
    %v192 = vpack.c.b16 %v161, %v160
    %v193 = vpack.c.b16 %v163, %v162
    %v194 = vpack.c.b16 %v165, %v164
    %v195 = vpack.c.b16 %v167, %v166
    %v196 = vpack.c.b16 %v169, %v168
    %v197 = vpack.c.b16 %v171, %v170
    %v198 = vpack.c.b16 %v173, %v172
    %v199 = vpack.c.b16 %v175, %v174
    %v200 = vpack.c.b16 %v177, %v176
    %v201 = vpack.c.b16 %v179, %v178
    %v202 = vpack.c.b16 %v181, %v180
    %v203 = vpack.c.b16 %v183, %v182
    %v204 = vpack.c.b16 %v185, %v184
    %v205 = vpack.c.b16 %v187, %v186
    %v206 = vpack.c.b16 %v189, %v188
    %v207 = vpack.c.b16 %v191, %v190
    %224 = vmatprep.subr.bf16.mxu0 0
    %225 = vmatpush1.bf16.msra.mxu0 %v192
    %226 = vmatprep.subr.bf16.mxu0 0
    %227 = vmatpush1.bf16.msra.mxu0 %v193
    %228 = vmatprep.subr.bf16.mxu0 0
    %229 = vmatpush1.bf16.msra.mxu0 %v194
    %230 = vmatprep.subr.bf16.mxu0 0
    %231 = vmatpush1.bf16.msra.mxu0 %v195
    %232 = vmatprep.subr.bf16.mxu0 0
    %233 = vmatpush1.bf16.msra.mxu0 %v196
    %234 = vmatprep.subr.bf16.mxu0 0
    %235 = vmatpush1.bf16.msra.mxu0 %v197
    %236 = vmatprep.subr.bf16.mxu0 0
    %237 = vmatpush1.bf16.msra.mxu0 %v198
    %238 = vmatprep.subr.bf16.mxu0 0
    %239 = vmatpush1.bf16.msra.mxu0 %v199
    %240 = vmatprep.subr.bf16.mxu0 0
    %241 = vmatpush1.bf16.msra.mxu0 %v200
    %242 = vmatprep.subr.bf16.mxu0 0
    %243 = vmatpush1.bf16.msra.mxu0 %v201
    %244 = vmatprep.subr.bf16.mxu0 0
    %245 = vmatpush1.bf16.msra.mxu0 %v202
    %246 = vmatprep.subr.bf16.mxu0 0
    %247 = vmatpush1.bf16.msra.mxu0 %v203
    %248 = vmatprep.subr.bf16.mxu0 0
    %249 = vmatpush1.bf16.msra.mxu0 %v204
    %250 = vmatprep.subr.bf16.mxu0 0
    %251 = vmatpush1.bf16.msra.mxu0 %v205
    %252 = vmatprep.subr.bf16.mxu0 0
    %253 = vmatpush1.bf16.msra.mxu0 %v206
    %254 = vmatprep.subr.bf16.mxu0 0
    %255 = vmatpush1.bf16.msra.mxu0 %v207
    %256 = vmatprep.mubr.bf16.mxu0 %v125
    %257 = vmatmul.mubr.bf16.gmra.mrb[0].mxu0 %v118
    %v258 = vpop.f32.mrb[0].mxu0
    %v259 = vadd.f32 0.0, %v258
    %v260 = vpop.f32.mrb[0].mxu0
    %v261 = vpop.f32.mrb[0].mxu0
    %v262 = vpop.f32.mrb[0].mxu0
    %263 = vdwg.mxu0
    %v266 = vunpack.c.l.s4 1966171168
    %v267 = vunpack.c.0.s8 %v266
    %v268 = vlaneseq
    %v269 = vshrl.u32 %v268, 7
    %v270 = vsub.s32 %v267, %v269
    %v271 = vrot.slane %v102, %v270
    %v272 = vcombine.high %v271, %v271
    %v274 = vunpack.c.l.s4 1966171168
    %v275 = vunpack.c.0.s8 %v274
    %v276 = vlaneseq
    %v277 = vshrl.u32 %v276, 7
    %v278 = vsub.s32 %v275, %v277
    %v279 = vrot.slane %v271, %v278
    %v281 = vunpack.c.l.s4 1966171168
    %v282 = vunpack.c.0.s8 %v281
    %v283 = vlaneseq
    %v284 = vshrl.u32 %v283, 7
    %v285 = vsub.s32 %v282, %v284
    %v286 = vrot.slane %v272, %v285
    %v321 = vunpack.c.l.b16 %v67
    %v322 = vunpack.c.l.b16 %v68
    %v323 = vunpack.c.l.b16 %v69
    %v324 = vunpack.c.l.b16 %v70
    %v325 = vunpack.c.l.b16 %v71
    %v326 = vunpack.c.l.b16 %v72
    %v327 = vunpack.c.l.b16 %v73
    %v328 = vunpack.c.l.b16 %v74
    %v329 = vunpack.c.l.b16 %v75
    %v330 = vunpack.c.l.b16 %v76
    %v331 = vunpack.c.l.b16 %v77
    %v332 = vunpack.c.l.b16 %v78
    %v333 = vunpack.c.l.b16 %v79
    %v334 = vunpack.c.l.b16 %v80
    %v335 = vunpack.c.l.b16 %v81
    %v336 = vunpack.c.l.b16 %v82
    %v337 = vunpack.c.l.b16 %v83
    %v338 = vunpack.c.l.b16 %v84
    %v339 = vunpack.c.l.b16 %v85
    %v340 = vunpack.c.l.b16 %v86
    %v341 = vunpack.c.l.b16 %v87
    %v342 = vunpack.c.l.b16 %v88
    %v343 = vunpack.c.l.b16 %v89
    %v344 = vunpack.c.l.b16 %v90
    %v345 = vunpack.c.l.b16 %v91
    %v346 = vunpack.c.l.b16 %v92
    %v347 = vunpack.c.l.b16 %v93
    %v348 = vunpack.c.l.b16 %v94
    %v349 = vunpack.c.l.b16 %v95
    %v350 = vunpack.c.l.b16 %v96
    %v351 = vunpack.c.l.b16 %v97
    %v352 = vunpack.c.l.b16 %v98
    %v353 = vpack.c.b16 %v322, %v321
    %v354 = vpack.c.b16 %v324, %v323
    %v355 = vpack.c.b16 %v326, %v325
    %v356 = vpack.c.b16 %v328, %v327
    %v357 = vpack.c.b16 %v330, %v329
    %v358 = vpack.c.b16 %v332, %v331
    %v359 = vpack.c.b16 %v334, %v333
    %v360 = vpack.c.b16 %v336, %v335
    %v361 = vpack.c.b16 %v338, %v337
    %v362 = vpack.c.b16 %v340, %v339
    %v363 = vpack.c.b16 %v342, %v341
    %v364 = vpack.c.b16 %v344, %v343
    %v365 = vpack.c.b16 %v346, %v345
    %v366 = vpack.c.b16 %v348, %v347
    %v367 = vpack.c.b16 %v350, %v349
    %v368 = vpack.c.b16 %v352, %v351
    %385 = vmatprep.subr.bf16.mxu0 0
    %386 = vmatpush1.bf16.msra.mxu0 %v353
    %387 = vmatprep.subr.bf16.mxu0 0
    %388 = vmatpush1.bf16.msra.mxu0 %v354
    %389 = vmatprep.subr.bf16.mxu0 0
    %390 = vmatpush1.bf16.msra.mxu0 %v355
    %391 = vmatprep.subr.bf16.mxu0 0
    %392 = vmatpush1.bf16.msra.mxu0 %v356
    %393 = vmatprep.subr.bf16.mxu0 0
    %394 = vmatpush1.bf16.msra.mxu0 %v357
    %395 = vmatprep.subr.bf16.mxu0 0
    %396 = vmatpush1.bf16.msra.mxu0 %v358
    %397 = vmatprep.subr.bf16.mxu0 0
    %398 = vmatpush1.bf16.msra.mxu0 %v359
    %399 = vmatprep.subr.bf16.mxu0 0
    %400 = vmatpush1.bf16.msra.mxu0 %v360
    %401 = vmatprep.subr.bf16.mxu0 0
    %402 = vmatpush1.bf16.msra.mxu0 %v361
    %403 = vmatprep.subr.bf16.mxu0 0
    %404 = vmatpush1.bf16.msra.mxu0 %v362
    %405 = vmatprep.subr.bf16.mxu0 0
    %406 = vmatpush1.bf16.msra.mxu0 %v363
    %407 = vmatprep.subr.bf16.mxu0 0
    %408 = vmatpush1.bf16.msra.mxu0 %v364
    %409 = vmatprep.subr.bf16.mxu0 0
    %410 = vmatpush1.bf16.msra.mxu0 %v365
    %411 = vmatprep.subr.bf16.mxu0 0
    %412 = vmatpush1.bf16.msra.mxu0 %v366
    %413 = vmatprep.subr.bf16.mxu0 0
    %414 = vmatpush1.bf16.msra.mxu0 %v367
    %415 = vmatprep.subr.bf16.mxu0 0
    %416 = vmatpush1.bf16.msra.mxu0 %v368
    %417 = vmatprep.mubr.bf16.mxu0 %v286
    %418 = vmatmul.mubr.bf16.gmra.mrb[0].mxu0 %v279
    %v419 = vpop.f32.mrb[0].mxu0
    %v420 = vadd.f32 0.0, %v419
    %v421 = vpop.f32.mrb[0].mxu0
    %v422 = vpop.f32.mrb[0].mxu0
    %v423 = vpop.f32.mrb[0].mxu0
    %424 = vdwg.mxu0
    %v425 = vadd.f32 %v99, %v259
    %v426 = vadd.f32 %v100, %v420
    %vm427 = vcmask 253952
    %428 = vst.msk [vmem:[#allocation2] sm:$0x1] %vm427, %v425
    %429 = vst.msk [vmem:[#allocation2 + $0x1] sm:$0x1] %vm427, %v426
    // Predicated region
    $region34: #{tpu_custom_call.1} parent=1 // pred_check
      %p430 = pneg %p28
    $region35: #{tpu_custom_call.1} parent=1 // pred_check_branch
      %432 = sbr.rel (%p430) target = $region37
    $region36: #{tpu_custom_call.1} parent=1 // pred_region
      %v433 = vld [vmem:[#allocation2] sm:$0x1]
      %v434 = vld [vmem:[#allocation2 + $0x1] sm:$0x1]
      %v435 = vld [vmem:[%s2] sm:$0x3]
      %437 = vset.pattern.permute.xlu0 0
      %438 = vperm.xlu0 %437, %v435
      %v439 = vpop.permute.xlu0 %438
      %v440 = vlaneseq
      %v441 = vshrl.u32 %v440, 7
      %v442 = vsub.s32 0, %v441
      %v443 = vrot.slane %v439, %v442
      %v444 = vlaneseq
      %v445 = vshrl.u32 %v444, 7
      %v446 = vsub.s32 1, %v445
      %v447 = vrot.slane %v439, %v446
      %v450 = vmul.f32 %v433, %v443
      %v451 = vmul.f32 %v434, %v447
      %v452 = vpack.c.bf16 %v450, %v450
      %v453 = vpack.c.bf16 %v451, %v451
      %v454 = vld [vmem:[%s3] sm:$0xf]
      %v455 = vld [vmem:[%s3 + $0x4] sm:$0xf]
      %v456 = vld [vmem:[%s3 + $0x8] sm:$0xf]
      %v457 = vld [vmem:[%s3 + $0xc] sm:$0xf]
      %v458 = vld [vmem:[%s4] sm:$0x1]
      %v460 = vlaneseq
      %v461 = vshrl.u32 %v460, 7
      %v462 = vsub.s32 0, %v461
      %v463 = vrot.slane %v458, %v462
      %v467 = vunpack.c.l.b16 %v452
      %v468 = vunpack.c.l.b16 %v453
      %v469 = vrot.slane %v468, 7
      %vm470 = vcmask 1041409
      %v471 = vsel %vm470, %v469, %v467
      %v472 = vpack.c.b16 %v471, %v471
      %v477 = vunpack.c.l.b16 %v454
      %v478 = vunpack.c.l.b16 %v455
      %v479 = vunpack.c.l.b16 %v456
      %v480 = vunpack.c.l.b16 %v457
      %v481 = vpack.c.b16 %v478, %v477
      %v482 = vpack.c.b16 %v480, %v479
      %vm485 = vcmask 261120
      %v487 = vsel %vm485, %v472, 0
      %489 = vmatprep.subr.bf16.mxu0 0
      %490 = vmatpush1.bf16.msra.mxu0 %v481
      %491 = vmatprep.subr.bf16.mxu0 0
      %492 = vmatpush1.bf16.msra.mxu0 %v482
      %493 = vmatprep.subr.bf16.mxu0 0
      %494 = vmatpush1.bf16.msra.mxu0 0
      %495 = vmatprep.subr.bf16.mxu0 0
      %496 = vmatpush1.bf16.msra.mxu0 0
      %497 = vmatprep.subr.bf16.mxu0 0
      %498 = vmatpush1.bf16.msra.mxu0 0
      %499 = vmatprep.subr.bf16.mxu0 0
      %500 = vmatpush1.bf16.msra.mxu0 0
      %501 = vmatprep.subr.bf16.mxu0 0
      %502 = vmatpush1.bf16.msra.mxu0 0
      %503 = vmatprep.subr.bf16.mxu0 0
      %504 = vmatpush1.bf16.msra.mxu0 0
      %505 = vmatprep.subr.bf16.mxu0 0
      %506 = vmatpush1.bf16.msra.mxu0 0
      %507 = vmatprep.subr.bf16.mxu0 0
      %508 = vmatpush1.bf16.msra.mxu0 0
      %509 = vmatprep.subr.bf16.mxu0 0
      %510 = vmatpush1.bf16.msra.mxu0 0
      %511 = vmatprep.subr.bf16.mxu0 0
      %512 = vmatpush1.bf16.msra.mxu0 0
      %513 = vmatprep.subr.bf16.mxu0 0
      %514 = vmatpush1.bf16.msra.mxu0 0
      %515 = vmatprep.subr.bf16.mxu0 0
      %516 = vmatpush1.bf16.msra.mxu0 0
      %517 = vmatprep.subr.bf16.mxu0 0
      %518 = vmatpush1.bf16.msra.mxu0 0
      %519 = vmatprep.subr.bf16.mxu0 0
      %520 = vmatpush1.bf16.msra.mxu0 0
      %521 = vmatprep.mubr.bf16.mxu0 0
      %522 = vmatmul.mubr.bf16.gmra.mrb[0].mxu0 %v487
      %v523 = vpop.f32.mrb[0].mxu0
      %v524 = vadd.f32 %v463, %v523
      %v525 = vpop.f32.mrb[0].mxu0
      %v526 = vpop.f32.mrb[0].mxu0
      %v527 = vpop.f32.mrb[0].mxu0
      %528 = vdwg.mxu0
      %v529 = vmax.f32 %v524, 0.0
      %v530 = vpack.c.bf16 %v529, %v529
      %v531 = vld [vmem:[%s5] sm:$0xf]
      %v532 = vld [vmem:[%s5 + $0x4] sm:$0xf]
      %v533 = vld [vmem:[%s5 + $0x8] sm:$0xf]
      %v534 = vld [vmem:[%s5 + $0xc] sm:$0xf]
      %v535 = vld [vmem:[%s6] sm:$0x1]
      %v537 = vlaneseq
      %v538 = vshrl.u32 %v537, 7
      %v539 = vsub.s32 0, %v538
      %v540 = vrot.slane %v535, %v539
      %v546 = vunpack.c.l.b16 %v531
      %v547 = vunpack.c.l.b16 %v532
      %v548 = vunpack.c.l.b16 %v533
      %v549 = vunpack.c.l.b16 %v534
      %v550 = vpack.c.b16 %v547, %v546
      %v551 = vpack.c.b16 %v549, %v548
      %v555 = vsel %vm485, %v530, 0
      %557 = vmatprep.subr.bf16.mxu0 0
      %558 = vmatpush1.bf16.msra.mxu0 %v550
      %559 = vmatprep.subr.bf16.mxu0 0
      %560 = vmatpush1.bf16.msra.mxu0 %v551
      %561 = vmatprep.subr.bf16.mxu0 0
      %562 = vmatpush1.bf16.msra.mxu0 0
      %563 = vmatprep.subr.bf16.mxu0 0
      %564 = vmatpush1.bf16.msra.mxu0 0
      %565 = vmatprep.subr.bf16.mxu0 0
      %566 = vmatpush1.bf16.msra.mxu0 0
      %567 = vmatprep.subr.bf16.mxu0 0
      %568 = vmatpush1.bf16.msra.mxu0 0
      %569 = vmatprep.subr.bf16.mxu0 0
      %570 = vmatpush1.bf16.msra.mxu0 0
      %571 = vmatprep.subr.bf16.mxu0 0
      %572 = vmatpush1.bf16.msra.mxu0 0
      %573 = vmatprep.subr.bf16.mxu0 0
      %574 = vmatpush1.bf16.msra.mxu0 0
      %575 = vmatprep.subr.bf16.mxu0 0
      %576 = vmatpush1.bf16.msra.mxu0 0
      %577 = vmatprep.subr.bf16.mxu0 0
      %578 = vmatpush1.bf16.msra.mxu0 0
      %579 = vmatprep.subr.bf16.mxu0 0
      %580 = vmatpush1.bf16.msra.mxu0 0
      %581 = vmatprep.subr.bf16.mxu0 0
      %582 = vmatpush1.bf16.msra.mxu0 0
      %583 = vmatprep.subr.bf16.mxu0 0
      %584 = vmatpush1.bf16.msra.mxu0 0
      %585 = vmatprep.subr.bf16.mxu0 0
      %586 = vmatpush1.bf16.msra.mxu0 0
      %587 = vmatprep.subr.bf16.mxu0 0
      %588 = vmatpush1.bf16.msra.mxu0 0
      %589 = vmatprep.mubr.bf16.mxu0 0
      %590 = vmatmul.mubr.bf16.gmra.mrb[0].mxu0 %v555
      %v591 = vpop.f32.mrb[0].mxu0
      %v592 = vadd.f32 %v540, %v591
      %v593 = vpop.f32.mrb[0].mxu0
      %v594 = vpop.f32.mrb[0].mxu0
      %v595 = vpop.f32.mrb[0].mxu0
      %596 = vdwg.mxu0
      %597 = vst [vmem:[#allocation3] sm:$0x3] %v592
    $region37: #{tpu_custom_call.1} parent=1 // pred_fallthru
      _
    // Predicated region
    $region38: #{tpu_custom_call.1} parent=1 // pred_check
      _
    $region39: #{tpu_custom_call.1} parent=1 // pred_check_branch
      %599 = sbr.rel (0) target = $region41
    $region40: #{tpu_custom_call.1} parent=1 // pred_region
      %s601 = ssub.s32 32, 32
      %602 = vsyncadd [#allocation4], %s601
      %s604 = sshll.u32 [#allocation3], 4
      %s605 = int_to_ptr.vmem [resolvable:$true] %s604
      %607 = dma.vmem_to_hbm [thread:$0]  %s605, 32, %s7, [#allocation4]
    $region41: #{tpu_custom_call.1} parent=1 // pred_fallthru
      _
    // Predicated region
    $region42: #{tpu_custom_call.1} parent=1 // pred_check
      _
    $region43: #{tpu_custom_call.1} parent=1 // pred_check_branch
      %609 = sbr.rel (0) target = $region45
    $region44: #{tpu_custom_call.1} parent=1 // pred_region
      %610 = dma.done [#allocation4], 32
    $region45: #{tpu_custom_call.1} parent=1 // pred_fallthru
      _
    %611 = vsyncpa [#allocation4], 1

// kernel: tpu_custom_call.1
$region0: #{tpu_custom_call.1}
  #allocation0 [shape = 'u32[]', space=smem, size = 0x4, offset = 0x4, fixed_abs, tag = 'smem constant byte address 0x4 - core index']
  #allocation1 [shape = 'u32[144,128]{1,0:T(1,128)}', space=vmem, size = 0x12000, scoped, tag = 'internal scratch']
  #allocation2 [shape = 'f32[2,1,32]{2,1,0:T(1,128)}', space=vmem, size = 0x400, scoped, tag = 'scratch operand']
  %s0 = inlined_call_operand.vmem [shape: bf16[2,256,32], index: 0, kind: input, shape index: {}]
  %s1 = inlined_call_operand.vmem [shape: bf16[2,1,256], index: 1, kind: input, shape index: {}]
  %s2 = inlined_call_operand.vmem [shape: f32[2,1], index: 2, kind: input, shape index: {}]
  %s3 = inlined_call_operand.vmem [shape: bf16[32,32], index: 3, kind: input, shape index: {}]
  %s4 = inlined_call_operand.vmem [shape: f32[1,32], index: 4, kind: input, shape index: {}]
  %s5 = inlined_call_operand.vmem [shape: bf16[32,128], index: 5, kind: input, shape index: {}]
  %s6 = inlined_call_operand.vmem [shape: f32[1,128], index: 6, kind: input, shape index: {}]
  %s7 = inlined_call_operand.hbm [shape: f32[2,128], index: 7, kind: output, shape index: {}]
  %s8 = sld [smem:[#allocation0]]
  $region46: #{tpu_custom_call.1} parent=0
    _
  %s10 = ssub.s32 1, %s8
  %s11 = scalar_select 0, %s10, %s8
  $region1: #{tpu_custom_call.1} parent=0
    #allocation3 [shape = 'u8[1024]{0}', space=vmem, size = 0x400, scoped, tag = 'output window, operand 0, single buffered']
    #allocation4 [shape = 's32[1]{0}', space=sflag, size = 0x4, scoped, tag = 'scoped memory for tpu_custom_call.1']
    %12 = vsyncpa [#allocation4], 0
    // Predicated region
    $region2: #{tpu_custom_call.1} parent=1 // pred_check
      _
    $region3: #{tpu_custom_call.1} parent=1 // pred_check_branch
      %14 = sbr.rel (0) target = $region5
    $region4: #{tpu_custom_call.1} parent=1 // pred_region
      _
    $region5: #{tpu_custom_call.1} parent=1 // pred_fallthru
      _
    // Predicated region
    $region6: #{tpu_custom_call.1} parent=1 // pred_check
      _
    $region7: #{tpu_custom_call.1} parent=1 // pred_check_branch
      %16 = sbr.rel (0) target = $region9
    $region8: #{tpu_custom_call.1} parent=1 // pred_region
      _
    $region9: #{tpu_custom_call.1} parent=1 // pred_fallthru
      _
    // Predicated region
    $region10: #{tpu_custom_call.1} parent=1 // pred_check
      _
    $region11: #{tpu_custom_call.1} parent=1 // pred_check_branch
      %18 = sbr.rel (0) target = $region13
    $region12: #{tpu_custom_call.1} parent=1 // pred_region
      _
    $region13: #{tpu_custom_call.1} parent=1 // pred_fallthru
      _
    // Predicated region
    $region14: #{tpu_custom_call.1} parent=1 // pred_check
      _
    $region15: #{tpu_custom_call.1} parent=1 // pred_check_branch
      %20 = sbr.rel (0) target = $region17
    $region16: #{tpu_custom_call.1} parent=1 // pred_region
      _
    $region17: #{tpu_custom_call.1} parent=1 // pred_fallthru
      _
    // Predicated region
    $region18: #{tpu_custom_call.1} parent=1 // pred_check
      _
    $region19: #{tpu_custom_call.1} parent=1 // pred_check_branch
      %22 = sbr.rel (0) target = $region21
    $region20: #{tpu_custom_call.1} parent=1 // pred_region
      _
    $region21: #{tpu_custom_call.1} parent=1 // pred_fallthru
      _
    // Predicated region
    $region22: #{tpu_custom_call.1} parent=1 // pred_check
      _
    $region23: #{tpu_custom_call.1} parent=1 // pred_check_branch
      %24 = sbr.rel (0) target = $region25
    $region24: #{tpu_custom_call.1} parent=1 // pred_region
      _
    $region25: #{tpu_custom_call.1} parent=1 // pred_fallthru
      _
    // Predicated region
    $region26: #{tpu_custom_call.1} parent=1 // pred_check
      _
    $region27: #{tpu_custom_call.1} parent=1 // pred_check_branch
      %26 = sbr.rel (0) target = $region29
    $region28: #{tpu_custom_call.1} parent=1 // pred_region
      _
    $region29: #{tpu_custom_call.1} parent=1 // pred_fallthru
      _
    %p28 = scmp.eq.s32.totalorder 0, 0
    // Predicated region
    $region30: #{tpu_custom_call.1} parent=1 // pred_check
      %p29 = pneg %p28
    $region31: #{tpu_custom_call.1} parent=1 // pred_check_branch
      %31 = sbr.rel (%p29) target = $region33
    $region32: #{tpu_custom_call.1} parent=1 // pred_region
      %vm32 = vcmask 253952
      %33 = vst.msk [vmem:[#allocation2] sm:$0x1] %vm32, 0.0
      %34 = vst.msk [vmem:[#allocation2 + $0x1] sm:$0x1] %vm32, 0.0
    $region33: #{tpu_custom_call.1} parent=1 // pred_fallthru
      _
    %v35 = vld [vmem:[%s0] sm:$0xf]
    %v36 = vld [vmem:[%s0 + $0x4] sm:$0xf]
    %v37 = vld [vmem:[%s0 + $0x8] sm:$0xf]
    %v38 = vld [vmem:[%s0 + $0xc] sm:$0xf]
    %v39 = vld [vmem:[%s0 + $0x10] sm:$0xf]
    %v40 = vld [vmem:[%s0 + $0x14] sm:$0xf]
    %v41 = vld [vmem:[%s0 + $0x18] sm:$0xf]
    %v42 = vld [vmem:[%s0 + $0x1c] sm:$0xf]
    %v43 = vld [vmem:[%s0 + $0x20] sm:$0xf]
    %v44 = vld [vmem:[%s0 + $0x24] sm:$0xf]
    %v45 = vld [vmem:[%s0 + $0x28] sm:$0xf]
    %v46 = vld [vmem:[%s0 + $0x2c] sm:$0xf]
    %v47 = vld [vmem:[%s0 + $0x30] sm:$0xf]
    %v48 = vld [vmem:[%s0 + $0x34] sm:$0xf]
    %v49 = vld [vmem:[%s0 + $0x38] sm:$0xf]
    %v50 = vld [vmem:[%s0 + $0x3c] sm:$0xf]
    %v51 = vld [vmem:[%s0 + $0x40] sm:$0xf]
    %v52 = vld [vmem:[%s0 + $0x44] sm:$0xf]
    %v53 = vld [vmem:[%s0 + $0x48] sm:$0xf]
    %v54 = vld [vmem:[%s0 + $0x4c] sm:$0xf]
    %v55 = vld [vmem:[%s0 + $0x50] sm:$0xf]
    %v56 = vld [vmem:[%s0 + $0x54] sm:$0xf]
    %v57 = vld [vmem:[%s0 + $0x58] sm:$0xf]
    %v58 = vld [vmem:[%s0 + $0x5c] sm:$0xf]
    %v59 = vld [vmem:[%s0 + $0x60] sm:$0xf]
    %v60 = vld [vmem:[%s0 + $0x64] sm:$0xf]
    %v61 = vld [vmem:[%s0 + $0x68] sm:$0xf]
    %v62 = vld [vmem:[%s0 + $0x6c] sm:$0xf]
    %v63 = vld [vmem:[%s0 + $0x70] sm:$0xf]
    %v64 = vld [vmem:[%s0 + $0x74] sm:$0xf]
    %v65 = vld [vmem:[%s0 + $0x78] sm:$0xf]
    %v66 = vld [vmem:[%s0 + $0x7c] sm:$0xf]
    %v67 = vld [vmem:[%s0 + $0x80] sm:$0xf]
    %v68 = vld [vmem:[%s0 + $0x84] sm:$0xf]
    %v69 = vld [vmem:[%s0 + $0x88] sm:$0xf]
    %v70 = vld [vmem:[%s0 + $0x8c] sm:$0xf]
    %v71 = vld [vmem:[%s0 + $0x90] sm:$0xf]
    %v72 = vld [vmem:[%s0 + $0x94] sm:$0xf]
    %v73 = vld [vmem:[%s0 + $0x98] sm:$0xf]
    %v74 = vld [vmem:[%s0 + $0x9c] sm:$0xf]
    %v75 = vld [vmem:[%s0 + $0xa0] sm:$0xf]
    %v76 = vld [vmem:[%s0 + $0xa4] sm:$0xf]
    %v77 = vld [vmem:[%s0 + $0xa8] sm:$0xf]
    %v78 = vld [vmem:[%s0 + $0xac] sm:$0xf]
    %v79 = vld [vmem:[%s0 + $0xb0] sm:$0xf]
    %v80 = vld [vmem:[%s0 + $0xb4] sm:$0xf]
    %v81 = vld [vmem:[%s0 + $0xb8] sm:$0xf]
    %v82 = vld [vmem:[%s0 + $0xbc] sm:$0xf]
    %v83 = vld [vmem:[%s0 + $0xc0] sm:$0xf]
    %v84 = vld [vmem:[%s0 + $0xc4] sm:$0xf]
    %v85 = vld [vmem:[%s0 + $0xc8] sm:$0xf]
    %v86 = vld [vmem:[%s0 + $0xcc] sm:$0xf]
    %v87 = vld [vmem:[%s0 + $0xd0] sm:$0xf]
    %v88 = vld [vmem:[%s0 + $0xd4] sm:$0xf]
    %v89 = vld [vmem:[%s0 + $0xd8] sm:$0xf]
    %v90 = vld [vmem:[%s0 + $0xdc] sm:$0xf]
    %v91 = vld [vmem:[%s0 + $0xe0] sm:$0xf]
    %v92 = vld [vmem:[%s0 + $0xe4] sm:$0xf]
    %v93 = vld [vmem:[%s0 + $0xe8] sm:$0xf]
    %v94 = vld [vmem:[%s0 + $0xec] sm:$0xf]
    %v95 = vld [vmem:[%s0 + $0xf0] sm:$0xf]
    %v96 = vld [vmem:[%s0 + $0xf4] sm:$0xf]
    %v97 = vld [vmem:[%s0 + $0xf8] sm:$0xf]
    %v98 = vld [vmem:[%s0 + $0xfc] sm:$0xf]
    %v99 = vld [vmem:[#allocation2] sm:$0x1]
    %v100 = vld [vmem:[#allocation2 + $0x1] sm:$0x1]
    %v101 = vld [vmem:[%s1] sm:$0x3]
    %v102 = vld [vmem:[%s1 + $0x2] sm:$0x3]
    %v105 = vunpack.c.l.s4 1966171168
    %v106 = vunpack.c.0.s8 %v105
    %v107 = vlaneseq
    %v108 = vshrl.u32 %v107, 7
    %v109 = vsub.s32 %v106, %v108
    %v110 = vrot.slane %v101, %v109
    %v111 = vcombine.high %v110, %v110
    %v113 = vunpack.c.l.s4 1966171168
    %v114 = vunpack.c.0.s8 %v113
    %v115 = vlaneseq
    %v116 = vshrl.u32 %v115, 7
    %v117 = vsub.s32 %v114, %v116
    %v118 = vrot.slane %v110, %v117
    %v120 = vunpack.c.l.s4 1966171168
    %v121 = vunpack.c.0.s8 %v120
    %v122 = vlaneseq
    %v123 = vshrl.u32 %v122, 7
    %v124 = vsub.s32 %v121, %v123
    %v125 = vrot.slane %v111, %v124
    %v160 = vunpack.c.l.b16 %v35
    %v161 = vunpack.c.l.b16 %v36
    %v162 = vunpack.c.l.b16 %v37
    %v163 = vunpack.c.l.b16 %v38
    %v164 = vunpack.c.l.b16 %v39
    %v165 = vunpack.c.l.b16 %v40
    %v166 = vunpack.c.l.b16 %v41
    %v167 = vunpack.c.l.b16 %v42
    %v168 = vunpack.c.l.b16 %v43
    %v169 = vunpack.c.l.b16 %v44
    %v170 = vunpack.c.l.b16 %v45
    %v171 = vunpack.c.l.b16 %v46
    %v172 = vunpack.c.l.b16 %v47
    %v173 = vunpack.c.l.b16 %v48
    %v174 = vunpack.c.l.b16 %v49
    %v175 = vunpack.c.l.b16 %v50
    %v176 = vunpack.c.l.b16 %v51
    %v177 = vunpack.c.l.b16 %v52
    %v178 = vunpack.c.l.b16 %v53
    %v179 = vunpack.c.l.b16 %v54
    %v180 = vunpack.c.l.b16 %v55
    %v181 = vunpack.c.l.b16 %v56
    %v182 = vunpack.c.l.b16 %v57
    %v183 = vunpack.c.l.b16 %v58
    %v184 = vunpack.c.l.b16 %v59
    %v185 = vunpack.c.l.b16 %v60
    %v186 = vunpack.c.l.b16 %v61
    %v187 = vunpack.c.l.b16 %v62
    %v188 = vunpack.c.l.b16 %v63
    %v189 = vunpack.c.l.b16 %v64
    %v190 = vunpack.c.l.b16 %v65
    %v191 = vunpack.c.l.b16 %v66
    %v192 = vpack.c.b16 %v161, %v160
    %v193 = vpack.c.b16 %v163, %v162
    %v194 = vpack.c.b16 %v165, %v164
    %v195 = vpack.c.b16 %v167, %v166
    %v196 = vpack.c.b16 %v169, %v168
    %v197 = vpack.c.b16 %v171, %v170
    %v198 = vpack.c.b16 %v173, %v172
    %v199 = vpack.c.b16 %v175, %v174
    %v200 = vpack.c.b16 %v177, %v176
    %v201 = vpack.c.b16 %v179, %v178
    %v202 = vpack.c.b16 %v181, %v180
    %v203 = vpack.c.b16 %v183, %v182
    %v204 = vpack.c.b16 %v185, %v184
    %v205 = vpack.c.b16 %v187, %v186
    %v206 = vpack.c.b16 %v189, %v188
    %v207 = vpack.c.b16 %v191, %v190
    %224 = vmatprep.subr.bf16.mxu0 0
    %225 = vmatpush1.bf16.msra.mxu0 %v192
    %226 = vmatprep.subr.bf16.mxu0 0
    %227 = vmatpush1.bf16.msra.mxu0 %v193
    %228 = vmatprep.subr.bf16.mxu0 0
    %229 = vmatpush1.bf16.msra.mxu0 %v194
    %230 = vmatprep.subr.bf16.mxu0 0
    %231 = vmatpush1.bf16.msra.mxu0 %v195
    %232 = vmatprep.subr.bf16.mxu0 0
    %233 = vmatpush1.bf16.msra.mxu0 %v196
    %234 = vmatprep.subr.bf16.mxu0 0
    %235 = vmatpush1.bf16.msra.mxu0 %v197
    %236 = vmatprep.subr.bf16.mxu0 0
    %237 = vmatpush1.bf16.msra.mxu0 %v198
    %238 = vmatprep.subr.bf16.mxu0 0
    %239 = vmatpush1.bf16.msra.mxu0 %v199
    %240 = vmatprep.subr.bf16.mxu0 0
    %241 = vmatpush1.bf16.msra.mxu0 %v200
    %242 = vmatprep.subr.bf16.mxu0 0
    %243 = vmatpush1.bf16.msra.mxu0 %v201
    %244 = vmatprep.subr.bf16.mxu0 0
    %245 = vmatpush1.bf16.msra.mxu0 %v202
    %246 = vmatprep.subr.bf16.mxu0 0
    %247 = vmatpush1.bf16.msra.mxu0 %v203
    %248 = vmatprep.subr.bf16.mxu0 0
    %249 = vmatpush1.bf16.msra.mxu0 %v204
    %250 = vmatprep.subr.bf16.mxu0 0
    %251 = vmatpush1.bf16.msra.mxu0 %v205
    %252 = vmatprep.subr.bf16.mxu0 0
    %253 = vmatpush1.bf16.msra.mxu0 %v206
    %254 = vmatprep.subr.bf16.mxu0 0
    %255 = vmatpush1.bf16.msra.mxu0 %v207
    %256 = vmatprep.mubr.bf16.mxu0 %v125
    %257 = vmatmul.mubr.bf16.gmra.mrb[0].mxu0 %v118
    %v258 = vpop.f32.mrb[0].mxu0
    %v259 = vadd.f32 0.0, %v258
    %v260 = vpop.f32.mrb[0].mxu0
    %v261 = vpop.f32.mrb[0].mxu0
    %v262 = vpop.f32.mrb[0].mxu0
    %263 = vdwg.mxu0
    %v266 = vunpack.c.l.s4 1966171168
    %v267 = vunpack.c.0.s8 %v266
    %v268 = vlaneseq
    %v269 = vshrl.u32 %v268, 7
    %v270 = vsub.s32 %v267, %v269
    %v271 = vrot.slane %v102, %v270
    %v272 = vcombine.high %v271, %v271
    %v274 = vunpack.c.l.s4 1966171168
    %v275 = vunpack.c.0.s8 %v274
    %v276 = vlaneseq
    %v277 = vshrl.u32 %v276, 7
    %v278 = vsub.s32 %v275, %v277
    %v279 = vrot.slane %v271, %v278
    %v281 = vunpack.c.l.s4 1966171168
    %v282 = vunpack.c.0.s8 %v281
    %v283 = vlaneseq
    %v284 = vshrl.u32 %v283, 7
    %v285 = vsub.s32 %v282, %v284
    %v286 = vrot.slane %v272, %v285
    %v321 = vunpack.c.l.b16 %v67
    %v322 = vunpack.c.l.b16 %v68
    %v323 = vunpack.c.l.b16 %v69
    %v324 = vunpack.c.l.b16 %v70
    %v325 = vunpack.c.l.b16 %v71
    %v326 = vunpack.c.l.b16 %v72
    %v327 = vunpack.c.l.b16 %v73
    %v328 = vunpack.c.l.b16 %v74
    %v329 = vunpack.c.l.b16 %v75
    %v330 = vunpack.c.l.b16 %v76
    %v331 = vunpack.c.l.b16 %v77
    %v332 = vunpack.c.l.b16 %v78
    %v333 = vunpack.c.l.b16 %v79
    %v334 = vunpack.c.l.b16 %v80
    %v335 = vunpack.c.l.b16 %v81
    %v336 = vunpack.c.l.b16 %v82
    %v337 = vunpack.c.l.b16 %v83
    %v338 = vunpack.c.l.b16 %v84
    %v339 = vunpack.c.l.b16 %v85
    %v340 = vunpack.c.l.b16 %v86
    %v341 = vunpack.c.l.b16 %v87
    %v342 = vunpack.c.l.b16 %v88
    %v343 = vunpack.c.l.b16 %v89
    %v344 = vunpack.c.l.b16 %v90
    %v345 = vunpack.c.l.b16 %v91
    %v346 = vunpack.c.l.b16 %v92
    %v347 = vunpack.c.l.b16 %v93
    %v348 = vunpack.c.l.b16 %v94
    %v349 = vunpack.c.l.b16 %v95
    %v350 = vunpack.c.l.b16 %v96
    %v351 = vunpack.c.l.b16 %v97
    %v352 = vunpack.c.l.b16 %v98
    %v353 = vpack.c.b16 %v322, %v321
    %v354 = vpack.c.b16 %v324, %v323
    %v355 = vpack.c.b16 %v326, %v325
    %v356 = vpack.c.b16 %v328, %v327
    %v357 = vpack.c.b16 %v330, %v329
    %v358 = vpack.c.b16 %v332, %v331
    %v359 = vpack.c.b16 %v334, %v333
    %v360 = vpack.c.b16 %v336, %v335
    %v361 = vpack.c.b16 %v338, %v337
    %v362 = vpack.c.b16 %v340, %v339
    %v363 = vpack.c.b16 %v342, %v341
    %v364 = vpack.c.b16 %v344, %v343
    %v365 = vpack.c.b16 %v346, %v345
    %v366 = vpack.c.b16 %v348, %v347
    %v367 = vpack.c.b16 %v350, %v349
    %v368 = vpack.c.b16 %v352, %v351
    %385 = vmatprep.subr.bf16.mxu0 0
    %386 = vmatpush1.bf16.msra.mxu0 %v353
    %387 = vmatprep.subr.bf16.mxu0 0
    %388 = vmatpush1.bf16.msra.mxu0 %v354
    %389 = vmatprep.subr.bf16.mxu0 0
    %390 = vmatpush1.bf16.msra.mxu0 %v355
    %391 = vmatprep.subr.bf16.mxu0 0
    %392 = vmatpush1.bf16.msra.mxu0 %v356
    %393 = vmatprep.subr.bf16.mxu0 0
    %394 = vmatpush1.bf16.msra.mxu0 %v357
    %395 = vmatprep.subr.bf16.mxu0 0
    %396 = vmatpush1.bf16.msra.mxu0 %v358
    %397 = vmatprep.subr.bf16.mxu0 0
    %398 = vmatpush1.bf16.msra.mxu0 %v359
    %399 = vmatprep.subr.bf16.mxu0 0
    %400 = vmatpush1.bf16.msra.mxu0 %v360
    %401 = vmatprep.subr.bf16.mxu0 0
    %402 = vmatpush1.bf16.msra.mxu0 %v361
    %403 = vmatprep.subr.bf16.mxu0 0
    %404 = vmatpush1.bf16.msra.mxu0 %v362
    %405 = vmatprep.subr.bf16.mxu0 0
    %406 = vmatpush1.bf16.msra.mxu0 %v363
    %407 = vmatprep.subr.bf16.mxu0 0
    %408 = vmatpush1.bf16.msra.mxu0 %v364
    %409 = vmatprep.subr.bf16.mxu0 0
    %410 = vmatpush1.bf16.msra.mxu0 %v365
    %411 = vmatprep.subr.bf16.mxu0 0
    %412 = vmatpush1.bf16.msra.mxu0 %v366
    %413 = vmatprep.subr.bf16.mxu0 0
    %414 = vmatpush1.bf16.msra.mxu0 %v367
    %415 = vmatprep.subr.bf16.mxu0 0
    %416 = vmatpush1.bf16.msra.mxu0 %v368
    %417 = vmatprep.mubr.bf16.mxu0 %v286
    %418 = vmatmul.mubr.bf16.gmra.mrb[0].mxu0 %v279
    %v419 = vpop.f32.mrb[0].mxu0
    %v420 = vadd.f32 0.0, %v419
    %v421 = vpop.f32.mrb[0].mxu0
    %v422 = vpop.f32.mrb[0].mxu0
    %v423 = vpop.f32.mrb[0].mxu0
    %424 = vdwg.mxu0
    %v425 = vadd.f32 %v99, %v259
    %v426 = vadd.f32 %v100, %v420
    %vm427 = vcmask 253952
    %428 = vst.msk [vmem:[#allocation2] sm:$0x1] %vm427, %v425
    %429 = vst.msk [vmem:[#allocation2 + $0x1] sm:$0x1] %vm427, %v426
    // Predicated region
    $region34: #{tpu_custom_call.1} parent=1 // pred_check
      %p430 = pneg %p28
    $region35: #{tpu_custom_call.1} parent=1 // pred_check_branch
      %432 = sbr.rel (%p430) target = $region37
    $region36: #{tpu_custom_call.1} parent=1 // pred_region
      %v433 = vld [vmem:[#allocation2] sm:$0x1]
      %v434 = vld [vmem:[#allocation2 + $0x1] sm:$0x1]
      %v435 = vld [vmem:[%s2] sm:$0x3]
      %437 = vset.pattern.permute.xlu0 0
      %438 = vperm.xlu0 %437, %v435
      %v439 = vpop.permute.xlu0 %438
      %v440 = vlaneseq
      %v441 = vshrl.u32 %v440, 7
      %v442 = vsub.s32 0, %v441
      %v443 = vrot.slane %v439, %v442
      %v444 = vlaneseq
      %v445 = vshrl.u32 %v444, 7
      %v446 = vsub.s32 1, %v445
      %v447 = vrot.slane %v439, %v446
      %v450 = vmul.f32 %v433, %v443
      %v451 = vmul.f32 %v434, %v447
      %v452 = vpack.c.bf16 %v450, %v450
      %v453 = vpack.c.bf16 %v451, %v451
      %v454 = vld [vmem:[%s3] sm:$0xf]
      %v455 = vld [vmem:[%s3 + $0x4] sm:$0xf]
      %v456 = vld [vmem:[%s3 + $0x8] sm:$0xf]
      %v457 = vld [vmem:[%s3 + $0xc] sm:$0xf]
      %v458 = vld [vmem:[%s4] sm:$0x1]
      %v460 = vlaneseq
      %v461 = vshrl.u32 %v460, 7
      %v462 = vsub.s32 0, %v461
      %v463 = vrot.slane %v458, %v462
      %v467 = vunpack.c.l.b16 %v452
      %v468 = vunpack.c.l.b16 %v453
      %v469 = vrot.slane %v468, 7
      %vm470 = vcmask 1041409
      %v471 = vsel %vm470, %v469, %v467
      %v472 = vpack.c.b16 %v471, %v471
      %v477 = vunpack.c.l.b16 %v454
      %v478 = vunpack.c.l.b16 %v455
      %v479 = vunpack.c.l.b16 %v456
      %v480 = vunpack.c.l.b16 %v457
      %v481 = vpack.c.b16 %v478, %v477
      %v482 = vpack.c.b16 %v480, %v479
      %vm485 = vcmask 261120
      %v487 = vsel %vm485, %v472, 0
      %489 = vmatprep.subr.bf16.mxu0 0
      %490 = vmatpush1.bf16.msra.mxu0 %v481
      %491 = vmatprep.subr.bf16.mxu0 0
      %492 = vmatpush1.bf16.msra.mxu0 %v482
      %493 = vmatprep.subr.bf16.mxu0 0
      %494 = vmatpush1.bf16.msra.mxu0 0
      %495 = vmatprep.subr.bf16.mxu0 0
      %496 = vmatpush1.bf16.msra.mxu0 0
      %497 = vmatprep.subr.bf16.mxu0 0
      %498 = vmatpush1.bf16.msra.mxu0 0
      %499 = vmatprep.subr.bf16.mxu0 0
      %500 = vmatpush1.bf16.msra.mxu0 0
      %501 = vmatprep.subr.bf16.mxu0 0
      %502 = vmatpush1.bf16.msra.mxu0 0
      %503 = vmatprep.subr.bf16.mxu0 0
      %504 = vmatpush1.bf16.msra.mxu0 0
      %505 = vmatprep.subr.bf16.mxu0 0
      %506 = vmatpush1.bf16.msra.mxu0 0
      %507 = vmatprep.subr.bf16.mxu0 0
      %508 = vmatpush1.bf16.msra.mxu0 0
      %509 = vmatprep.subr.bf16.mxu0 0
      %510 = vmatpush1.bf16.msra.mxu0 0
      %511 = vmatprep.subr.bf16.mxu0 0
      %512 = vmatpush1.bf16.msra.mxu0 0
      %513 = vmatprep.subr.bf16.mxu0 0
      %514 = vmatpush1.bf16.msra.mxu0 0
      %515 = vmatprep.subr.bf16.mxu0 0
      %516 = vmatpush1.bf16.msra.mxu0 0
      %517 = vmatprep.subr.bf16.mxu0 0
      %518 = vmatpush1.bf16.msra.mxu0 0
      %519 = vmatprep.subr.bf16.mxu0 0
      %520 = vmatpush1.bf16.msra.mxu0 0
      %521 = vmatprep.mubr.bf16.mxu0 0
      %522 = vmatmul.mubr.bf16.gmra.mrb[0].mxu0 %v487
      %v523 = vpop.f32.mrb[0].mxu0
      %v524 = vadd.f32 %v463, %v523
      %v525 = vpop.f32.mrb[0].mxu0
      %v526 = vpop.f32.mrb[0].mxu0
      %v527 = vpop.f32.mrb[0].mxu0
      %528 = vdwg.mxu0
      %v529 = vmax.f32 %v524, 0.0
      %v530 = vpack.c.bf16 %v529, %v529
      %v531 = vld [vmem:[%s5] sm:$0xf]
      %v532 = vld [vmem:[%s5 + $0x4] sm:$0xf]
      %v533 = vld [vmem:[%s5 + $0x8] sm:$0xf]
      %v534 = vld [vmem:[%s5 + $0xc] sm:$0xf]
      %v535 = vld [vmem:[%s6] sm:$0x1]
      %v537 = vlaneseq
      %v538 = vshrl.u32 %v537, 7
      %v539 = vsub.s32 0, %v538
      %v540 = vrot.slane %v535, %v539
      %v546 = vunpack.c.l.b16 %v531
      %v547 = vunpack.c.l.b16 %v532
      %v548 = vunpack.c.l.b16 %v533
      %v549 = vunpack.c.l.b16 %v534
      %v550 = vpack.c.b16 %v547, %v546
      %v551 = vpack.c.b16 %v549, %v548
      %v555 = vsel %vm485, %v530, 0
      %557 = vmatprep.subr.bf16.mxu0 0
      %558 = vmatpush1.bf16.msra.mxu0 %v550
      %559 = vmatprep.subr.bf16.mxu0 0
      %560 = vmatpush1.bf16.msra.mxu0 %v551
      %561 = vmatprep.subr.bf16.mxu0 0
      %562 = vmatpush1.bf16.msra.mxu0 0
      %563 = vmatprep.subr.bf16.mxu0 0
      %564 = vmatpush1.bf16.msra.mxu0 0
      %565 = vmatprep.subr.bf16.mxu0 0
      %566 = vmatpush1.bf16.msra.mxu0 0
      %567 = vmatprep.subr.bf16.mxu0 0
      %568 = vmatpush1.bf16.msra.mxu0 0
      %569 = vmatprep.subr.bf16.mxu0 0
      %570 = vmatpush1.bf16.msra.mxu0 0
      %571 = vmatprep.subr.bf16.mxu0 0
      %572 = vmatpush1.bf16.msra.mxu0 0
      %573 = vmatprep.subr.bf16.mxu0 0
      %574 = vmatpush1.bf16.msra.mxu0 0
      %575 = vmatprep.subr.bf16.mxu0 0
      %576 = vmatpush1.bf16.msra.mxu0 0
      %577 = vmatprep.subr.bf16.mxu0 0
      %578 = vmatpush1.bf16.msra.mxu0 0
      %579 = vmatprep.subr.bf16.mxu0 0
      %580 = vmatpush1.bf16.msra.mxu0 0
      %581 = vmatprep.subr.bf16.mxu0 0
      %582 = vmatpush1.bf16.msra.mxu0 0
      %583 = vmatprep.subr.bf16.mxu0 0
      %584 = vmatpush1.bf16.msra.mxu0 0
      %585 = vmatprep.subr.bf16.mxu0 0
      %586 = vmatpush1.bf16.msra.mxu0 0
      %587 = vmatprep.subr.bf16.mxu0 0
      %588 = vmatpush1.bf16.msra.mxu0 0
      %589 = vmatprep.mubr.bf16.mxu0 0
      %590 = vmatmul.mubr.bf16.gmra.mrb[0].mxu0 %v555
      %v591 = vpop.f32.mrb[0].mxu0
      %v592 = vadd.f32 %v540, %v591
      %v593 = vpop.f32.mrb[0].mxu0
      %v594 = vpop.f32.mrb[0].mxu0
      %v595 = vpop.f32.mrb[0].mxu0
      %596 = vdwg.mxu0
      %597 = vst [vmem:[#allocation3] sm:$0x3] %v592
    $region37: #{tpu_custom_call.1} parent=1 // pred_fallthru
      _
    // Predicated region
    $region38: #{tpu_custom_call.1} parent=1 // pred_check
      _
    $region39: #{tpu_custom_call.1} parent=1 // pred_check_branch
      %599 = sbr.rel (0) target = $region41
    $region40: #{tpu_custom_call.1} parent=1 // pred_region
      %s601 = ssub.s32 32, 32
      %602 = vsyncadd [#allocation4], %s601
      %s604 = sshll.u32 [#allocation3], 4
      %s605 = int_to_ptr.vmem [resolvable:$true] %s604
      %607 = dma.vmem_to_hbm [thread:$0]  %s605, 32, %s7, [#allocation4]
    $region41: #{tpu_custom_call.1} parent=1 // pred_fallthru
      _
    // Predicated region
    $region42: #{tpu_custom_call.1} parent=1 // pred_check
      _
    $region43: #{tpu_custom_call.1} parent=1 // pred_check_branch
      %609 = sbr.rel (0) target = $region45
    $region44: #{tpu_custom_call.1} parent=1 // pred_region
      %610 = dma.done [#allocation4], 32
    $region45: #{tpu_custom_call.1} parent=1 // pred_fallthru
      _
    %611 = vsyncpa [#allocation4], 1

// kernel: tpu_custom_call.1
$region0: #{tpu_custom_call.1}
  #allocation0 [shape = 'u32[]', space=smem, size = 0x4, offset = 0x4, fixed_abs, tag = 'smem constant byte address 0x4 - core index']
  #allocation1 [shape = 'u32[144,128]{1,0:T(1,128)}', space=vmem, size = 0x12000, scoped, tag = 'internal scratch']
  #allocation2 [shape = 'f32[2,32]{1,0:T(2,128)}', space=vmem, size = 0x400, scoped, tag = 'scratch operand']
  %s0 = inlined_call_operand.vmem [shape: bf16[2,256,32], index: 0, kind: input, shape index: {}]
  %s1 = inlined_call_operand.vmem [shape: bf16[2,256], index: 1, kind: input, shape index: {}]
  %s2 = inlined_call_operand.vmem [shape: f32[2,1], index: 2, kind: input, shape index: {}]
  %s3 = inlined_call_operand.vmem [shape: bf16[32,32], index: 3, kind: input, shape index: {}]
  %s4 = inlined_call_operand.vmem [shape: f32[1,32], index: 4, kind: input, shape index: {}]
  %s5 = inlined_call_operand.vmem [shape: bf16[32,128], index: 5, kind: input, shape index: {}]
  %s6 = inlined_call_operand.vmem [shape: f32[1,128], index: 6, kind: input, shape index: {}]
  %s7 = inlined_call_operand.hbm [shape: f32[2,128], index: 7, kind: output, shape index: {}]
  %s8 = sld [smem:[#allocation0]]
  $region46: #{tpu_custom_call.1} parent=0
    _
  %s10 = ssub.s32 1, %s8
  %s11 = scalar_select 0, %s10, %s8
  $region1: #{tpu_custom_call.1} parent=0
    #allocation3 [shape = 'u8[1024]{0}', space=vmem, size = 0x400, scoped, tag = 'output window, operand 0, single buffered']
    #allocation4 [shape = 's32[1]{0}', space=sflag, size = 0x4, scoped, tag = 'scoped memory for tpu_custom_call.1']
    %12 = vsyncpa [#allocation4], 0
    // Predicated region
    $region2: #{tpu_custom_call.1} parent=1 // pred_check
      _
    $region3: #{tpu_custom_call.1} parent=1 // pred_check_branch
      %14 = sbr.rel (0) target = $region5
    $region4: #{tpu_custom_call.1} parent=1 // pred_region
      _
    $region5: #{tpu_custom_call.1} parent=1 // pred_fallthru
      _
    // Predicated region
    $region6: #{tpu_custom_call.1} parent=1 // pred_check
      _
    $region7: #{tpu_custom_call.1} parent=1 // pred_check_branch
      %16 = sbr.rel (0) target = $region9
    $region8: #{tpu_custom_call.1} parent=1 // pred_region
      _
    $region9: #{tpu_custom_call.1} parent=1 // pred_fallthru
      _
    // Predicated region
    $region10: #{tpu_custom_call.1} parent=1 // pred_check
      _
    $region11: #{tpu_custom_call.1} parent=1 // pred_check_branch
      %18 = sbr.rel (0) target = $region13
    $region12: #{tpu_custom_call.1} parent=1 // pred_region
      _
    $region13: #{tpu_custom_call.1} parent=1 // pred_fallthru
      _
    // Predicated region
    $region14: #{tpu_custom_call.1} parent=1 // pred_check
      _
    $region15: #{tpu_custom_call.1} parent=1 // pred_check_branch
      %20 = sbr.rel (0) target = $region17
    $region16: #{tpu_custom_call.1} parent=1 // pred_region
      _
    $region17: #{tpu_custom_call.1} parent=1 // pred_fallthru
      _
    // Predicated region
    $region18: #{tpu_custom_call.1} parent=1 // pred_check
      _
    $region19: #{tpu_custom_call.1} parent=1 // pred_check_branch
      %22 = sbr.rel (0) target = $region21
    $region20: #{tpu_custom_call.1} parent=1 // pred_region
      _
    $region21: #{tpu_custom_call.1} parent=1 // pred_fallthru
      _
    // Predicated region
    $region22: #{tpu_custom_call.1} parent=1 // pred_check
      _
    $region23: #{tpu_custom_call.1} parent=1 // pred_check_branch
      %24 = sbr.rel (0) target = $region25
    $region24: #{tpu_custom_call.1} parent=1 // pred_region
      _
    $region25: #{tpu_custom_call.1} parent=1 // pred_fallthru
      _
    // Predicated region
    $region26: #{tpu_custom_call.1} parent=1 // pred_check
      _
    $region27: #{tpu_custom_call.1} parent=1 // pred_check_branch
      %26 = sbr.rel (0) target = $region29
    $region28: #{tpu_custom_call.1} parent=1 // pred_region
      _
    $region29: #{tpu_custom_call.1} parent=1 // pred_fallthru
      _
    %p28 = scmp.eq.s32.totalorder 0, 0
    // Predicated region
    $region30: #{tpu_custom_call.1} parent=1 // pred_check
      %p29 = pneg %p28
    $region31: #{tpu_custom_call.1} parent=1 // pred_check_branch
      %31 = sbr.rel (%p29) target = $region33
    $region32: #{tpu_custom_call.1} parent=1 // pred_region
      %vm32 = vcmask 254976
      %33 = vst.msk [vmem:[#allocation2] sm:$0x3] %vm32, 0.0
    $region33: #{tpu_custom_call.1} parent=1 // pred_fallthru
      _
    %v34 = vld [vmem:[%s0] sm:$0xf]
    %v35 = vld [vmem:[%s0 + $0x4] sm:$0xf]
    %v36 = vld [vmem:[%s0 + $0x8] sm:$0xf]
    %v37 = vld [vmem:[%s0 + $0xc] sm:$0xf]
    %v38 = vld [vmem:[%s0 + $0x10] sm:$0xf]
    %v39 = vld [vmem:[%s0 + $0x14] sm:$0xf]
    %v40 = vld [vmem:[%s0 + $0x18] sm:$0xf]
    %v41 = vld [vmem:[%s0 + $0x1c] sm:$0xf]
    %v42 = vld [vmem:[%s0 + $0x20] sm:$0xf]
    %v43 = vld [vmem:[%s0 + $0x24] sm:$0xf]
    %v44 = vld [vmem:[%s0 + $0x28] sm:$0xf]
    %v45 = vld [vmem:[%s0 + $0x2c] sm:$0xf]
    %v46 = vld [vmem:[%s0 + $0x30] sm:$0xf]
    %v47 = vld [vmem:[%s0 + $0x34] sm:$0xf]
    %v48 = vld [vmem:[%s0 + $0x38] sm:$0xf]
    %v49 = vld [vmem:[%s0 + $0x3c] sm:$0xf]
    %v50 = vld [vmem:[%s0 + $0x40] sm:$0xf]
    %v51 = vld [vmem:[%s0 + $0x44] sm:$0xf]
    %v52 = vld [vmem:[%s0 + $0x48] sm:$0xf]
    %v53 = vld [vmem:[%s0 + $0x4c] sm:$0xf]
    %v54 = vld [vmem:[%s0 + $0x50] sm:$0xf]
    %v55 = vld [vmem:[%s0 + $0x54] sm:$0xf]
    %v56 = vld [vmem:[%s0 + $0x58] sm:$0xf]
    %v57 = vld [vmem:[%s0 + $0x5c] sm:$0xf]
    %v58 = vld [vmem:[%s0 + $0x60] sm:$0xf]
    %v59 = vld [vmem:[%s0 + $0x64] sm:$0xf]
    %v60 = vld [vmem:[%s0 + $0x68] sm:$0xf]
    %v61 = vld [vmem:[%s0 + $0x6c] sm:$0xf]
    %v62 = vld [vmem:[%s0 + $0x70] sm:$0xf]
    %v63 = vld [vmem:[%s0 + $0x74] sm:$0xf]
    %v64 = vld [vmem:[%s0 + $0x78] sm:$0xf]
    %v65 = vld [vmem:[%s0 + $0x7c] sm:$0xf]
    %v66 = vld [vmem:[%s0 + $0x80] sm:$0xf]
    %v67 = vld [vmem:[%s0 + $0x84] sm:$0xf]
    %v68 = vld [vmem:[%s0 + $0x88] sm:$0xf]
    %v69 = vld [vmem:[%s0 + $0x8c] sm:$0xf]
    %v70 = vld [vmem:[%s0 + $0x90] sm:$0xf]
    %v71 = vld [vmem:[%s0 + $0x94] sm:$0xf]
    %v72 = vld [vmem:[%s0 + $0x98] sm:$0xf]
    %v73 = vld [vmem:[%s0 + $0x9c] sm:$0xf]
    %v74 = vld [vmem:[%s0 + $0xa0] sm:$0xf]
    %v75 = vld [vmem:[%s0 + $0xa4] sm:$0xf]
    %v76 = vld [vmem:[%s0 + $0xa8] sm:$0xf]
    %v77 = vld [vmem:[%s0 + $0xac] sm:$0xf]
    %v78 = vld [vmem:[%s0 + $0xb0] sm:$0xf]
    %v79 = vld [vmem:[%s0 + $0xb4] sm:$0xf]
    %v80 = vld [vmem:[%s0 + $0xb8] sm:$0xf]
    %v81 = vld [vmem:[%s0 + $0xbc] sm:$0xf]
    %v82 = vld [vmem:[%s0 + $0xc0] sm:$0xf]
    %v83 = vld [vmem:[%s0 + $0xc4] sm:$0xf]
    %v84 = vld [vmem:[%s0 + $0xc8] sm:$0xf]
    %v85 = vld [vmem:[%s0 + $0xcc] sm:$0xf]
    %v86 = vld [vmem:[%s0 + $0xd0] sm:$0xf]
    %v87 = vld [vmem:[%s0 + $0xd4] sm:$0xf]
    %v88 = vld [vmem:[%s0 + $0xd8] sm:$0xf]
    %v89 = vld [vmem:[%s0 + $0xdc] sm:$0xf]
    %v90 = vld [vmem:[%s0 + $0xe0] sm:$0xf]
    %v91 = vld [vmem:[%s0 + $0xe4] sm:$0xf]
    %v92 = vld [vmem:[%s0 + $0xe8] sm:$0xf]
    %v93 = vld [vmem:[%s0 + $0xec] sm:$0xf]
    %v94 = vld [vmem:[%s0 + $0xf0] sm:$0xf]
    %v95 = vld [vmem:[%s0 + $0xf4] sm:$0xf]
    %v96 = vld [vmem:[%s0 + $0xf8] sm:$0xf]
    %v97 = vld [vmem:[%s0 + $0xfc] sm:$0xf]
    %v98 = vld [vmem:[%s1] sm:$0x3]
    %v99 = vunpack.c.l.bf16 %v98
    %v100 = vld [vmem:[#allocation2] sm:$0x3]
    %v101 = vunpack.c.l.bf16 %v34
    %v102 = vunpack.c.l.bf16 %v35
    %v103 = vunpack.c.l.bf16 %v36
    %v104 = vunpack.c.l.bf16 %v37
    %v105 = vunpack.c.l.bf16 %v38
    %v106 = vunpack.c.l.bf16 %v39
    %v107 = vunpack.c.l.bf16 %v40
    %v108 = vunpack.c.l.bf16 %v41
    %v109 = vunpack.c.l.bf16 %v42
    %v110 = vunpack.c.l.bf16 %v43
    %v111 = vunpack.c.l.bf16 %v44
    %v112 = vunpack.c.l.bf16 %v45
    %v113 = vunpack.c.l.bf16 %v46
    %v114 = vunpack.c.l.bf16 %v47
    %v115 = vunpack.c.l.bf16 %v48
    %v116 = vunpack.c.l.bf16 %v49
    %v117 = vunpack.c.l.bf16 %v50
    %v118 = vunpack.c.l.bf16 %v51
    %v119 = vunpack.c.l.bf16 %v52
    %v120 = vunpack.c.l.bf16 %v53
    %v121 = vunpack.c.l.bf16 %v54
    %v122 = vunpack.c.l.bf16 %v55
    %v123 = vunpack.c.l.bf16 %v56
    %v124 = vunpack.c.l.bf16 %v57
    %v125 = vunpack.c.l.bf16 %v58
    %v126 = vunpack.c.l.bf16 %v59
    %v127 = vunpack.c.l.bf16 %v60
    %v128 = vunpack.c.l.bf16 %v61
    %v129 = vunpack.c.l.bf16 %v62
    %v130 = vunpack.c.l.bf16 %v63
    %v131 = vunpack.c.l.bf16 %v64
    %v132 = vunpack.c.l.bf16 %v65
    %v133 = vunpack.c.l.bf16 %v66
    %v134 = vunpack.c.l.bf16 %v67
    %v135 = vunpack.c.l.bf16 %v68
    %v136 = vunpack.c.l.bf16 %v69
    %v137 = vunpack.c.l.bf16 %v70
    %v138 = vunpack.c.l.bf16 %v71
    %v139 = vunpack.c.l.bf16 %v72
    %v140 = vunpack.c.l.bf16 %v73
    %v141 = vunpack.c.l.bf16 %v74
    %v142 = vunpack.c.l.bf16 %v75
    %v143 = vunpack.c.l.bf16 %v76
    %v144 = vunpack.c.l.bf16 %v77
    %v145 = vunpack.c.l.bf16 %v78
    %v146 = vunpack.c.l.bf16 %v79
    %v147 = vunpack.c.l.bf16 %v80
    %v148 = vunpack.c.l.bf16 %v81
    %v149 = vunpack.c.l.bf16 %v82
    %v150 = vunpack.c.l.bf16 %v83
    %v151 = vunpack.c.l.bf16 %v84
    %v152 = vunpack.c.l.bf16 %v85
    %v153 = vunpack.c.l.bf16 %v86
    %v154 = vunpack.c.l.bf16 %v87
    %v155 = vunpack.c.l.bf16 %v88
    %v156 = vunpack.c.l.bf16 %v89
    %v157 = vunpack.c.l.bf16 %v90
    %v158 = vunpack.c.l.bf16 %v91
    %v159 = vunpack.c.l.bf16 %v92
    %v160 = vunpack.c.l.bf16 %v93
    %v161 = vunpack.c.l.bf16 %v94
    %v162 = vunpack.c.l.bf16 %v95
    %v163 = vunpack.c.l.bf16 %v96
    %v164 = vunpack.c.l.bf16 %v97
    %v167 = vunpack.c.l.s4 1983009808
    %v168 = vunpack.c.0.s8 %v167
    %v169 = vlaneseq
    %v170 = vshrl.u32 %v169, 7
    %v171 = vsub.s32 %v168, %v170
    %v172 = vrot.slane %v99, %v171
    %v173 = vcombine.high %v172, %v172
    %v176 = vlaneseq
    %v177 = vshrl.u32 %v176, 7
    %v178 = vsub.s32 0, %v177
    %v179 = vrot.slane %v172, %v178
    %181 = vbcast.lane.b32.xlu0 %v179, 256
    %v182 = vpop.permute.xlu0 %181
    %s184 = sor.u32 256, 8
    %185 = vbcast.lane.b32.xlu0 %v179, %s184
    %v186 = vpop.permute.xlu0 %185
    %s188 = sor.u32 256, 16
    %189 = vbcast.lane.b32.xlu0 %v179, %s188
    %v190 = vpop.permute.xlu0 %189
    %s192 = sor.u32 256, 24
    %193 = vbcast.lane.b32.xlu0 %v179, %s192
    %v194 = vpop.permute.xlu0 %193
    %s196 = sor.u32 256, 32
    %197 = vbcast.lane.b32.xlu0 %v179, %s196
    %v198 = vpop.permute.xlu0 %197
    %s200 = sor.u32 256, 40
    %201 = vbcast.lane.b32.xlu0 %v179, %s200
    %v202 = vpop.permute.xlu0 %201
    %s204 = sor.u32 256, 48
    %205 = vbcast.lane.b32.xlu0 %v179, %s204
    %v206 = vpop.permute.xlu0 %205
    %s208 = sor.u32 256, 56
    %209 = vbcast.lane.b32.xlu0 %v179, %s208
    %v210 = vpop.permute.xlu0 %209
    %s212 = sor.u32 256, 64
    %213 = vbcast.lane.b32.xlu0 %v179, %s212
    %v214 = vpop.permute.xlu0 %213
    %s216 = sor.u32 256, 72
    %217 = vbcast.lane.b32.xlu0 %v179, %s216
    %v218 = vpop.permute.xlu0 %217
    %s220 = sor.u32 256, 80
    %221 = vbcast.lane.b32.xlu0 %v179, %s220
    %v222 = vpop.permute.xlu0 %221
    %s224 = sor.u32 256, 88
    %225 = vbcast.lane.b32.xlu0 %v179, %s224
    %v226 = vpop.permute.xlu0 %225
    %s228 = sor.u32 256, 96
    %229 = vbcast.lane.b32.xlu0 %v179, %s228
    %v230 = vpop.permute.xlu0 %229
    %s232 = sor.u32 256, 104
    %233 = vbcast.lane.b32.xlu0 %v179, %s232
    %v234 = vpop.permute.xlu0 %233
    %s236 = sor.u32 256, 112
    %237 = vbcast.lane.b32.xlu0 %v179, %s236
    %v238 = vpop.permute.xlu0 %237
    %s240 = sor.u32 256, 120
    %241 = vbcast.lane.b32.xlu0 %v179, %s240
    %v242 = vpop.permute.xlu0 %241
    %v243 = vlaneseq
    %v244 = vshrl.u32 %v243, 7
    %v245 = vsub.s32 0, %v244
    %v246 = vrot.slane %v173, %v245
    %248 = vbcast.lane.b32.xlu0 %v246, 256
    %v249 = vpop.permute.xlu0 %248
    %s251 = sor.u32 256, 8
    %252 = vbcast.lane.b32.xlu0 %v246, %s251
    %v253 = vpop.permute.xlu0 %252
    %s255 = sor.u32 256, 16
    %256 = vbcast.lane.b32.xlu0 %v246, %s255
    %v257 = vpop.permute.xlu0 %256
    %s259 = sor.u32 256, 24
    %260 = vbcast.lane.b32.xlu0 %v246, %s259
    %v261 = vpop.permute.xlu0 %260
    %s263 = sor.u32 256, 32
    %264 = vbcast.lane.b32.xlu0 %v246, %s263
    %v265 = vpop.permute.xlu0 %264
    %s267 = sor.u32 256, 40
    %268 = vbcast.lane.b32.xlu0 %v246, %s267
    %v269 = vpop.permute.xlu0 %268
    %s271 = sor.u32 256, 48
    %272 = vbcast.lane.b32.xlu0 %v246, %s271
    %v273 = vpop.permute.xlu0 %272
    %s275 = sor.u32 256, 56
    %276 = vbcast.lane.b32.xlu0 %v246, %s275
    %v277 = vpop.permute.xlu0 %276
    %s279 = sor.u32 256, 64
    %280 = vbcast.lane.b32.xlu0 %v246, %s279
    %v281 = vpop.permute.xlu0 %280
    %s283 = sor.u32 256, 72
    %284 = vbcast.lane.b32.xlu0 %v246, %s283
    %v285 = vpop.permute.xlu0 %284
    %s287 = sor.u32 256, 80
    %288 = vbcast.lane.b32.xlu0 %v246, %s287
    %v289 = vpop.permute.xlu0 %288
    %s291 = sor.u32 256, 88
    %292 = vbcast.lane.b32.xlu0 %v246, %s291
    %v293 = vpop.permute.xlu0 %292
    %s295 = sor.u32 256, 96
    %296 = vbcast.lane.b32.xlu0 %v246, %s295
    %v297 = vpop.permute.xlu0 %296
    %s299 = sor.u32 256, 104
    %300 = vbcast.lane.b32.xlu0 %v246, %s299
    %v301 = vpop.permute.xlu0 %300
    %s303 = sor.u32 256, 112
    %304 = vbcast.lane.b32.xlu0 %v246, %s303
    %v305 = vpop.permute.xlu0 %304
    %s307 = sor.u32 256, 120
    %308 = vbcast.lane.b32.xlu0 %v246, %s307
    %v309 = vpop.permute.xlu0 %308
    %v310 = vlaneseq
    %v311 = vshrl.u32 %v310, 7
    %v312 = vsub.s32 1, %v311
    %v313 = vrot.slane %v172, %v312
    %315 = vbcast.lane.b32.xlu0 %v313, 256
    %v316 = vpop.permute.xlu0 %315
    %s318 = sor.u32 256, 8
    %319 = vbcast.lane.b32.xlu0 %v313, %s318
    %v320 = vpop.permute.xlu0 %319
    %s322 = sor.u32 256, 16
    %323 = vbcast.lane.b32.xlu0 %v313, %s322
    %v324 = vpop.permute.xlu0 %323
    %s326 = sor.u32 256, 24
    %327 = vbcast.lane.b32.xlu0 %v313, %s326
    %v328 = vpop.permute.xlu0 %327
    %s330 = sor.u32 256, 32
    %331 = vbcast.lane.b32.xlu0 %v313, %s330
    %v332 = vpop.permute.xlu0 %331
    %s334 = sor.u32 256, 40
    %335 = vbcast.lane.b32.xlu0 %v313, %s334
    %v336 = vpop.permute.xlu0 %335
    %s338 = sor.u32 256, 48
    %339 = vbcast.lane.b32.xlu0 %v313, %s338
    %v340 = vpop.permute.xlu0 %339
    %s342 = sor.u32 256, 56
    %343 = vbcast.lane.b32.xlu0 %v313, %s342
    %v344 = vpop.permute.xlu0 %343
    %s346 = sor.u32 256, 64
    %347 = vbcast.lane.b32.xlu0 %v313, %s346
    %v348 = vpop.permute.xlu0 %347
    %s350 = sor.u32 256, 72
    %351 = vbcast.lane.b32.xlu0 %v313, %s350
    %v352 = vpop.permute.xlu0 %351
    %s354 = sor.u32 256, 80
    %355 = vbcast.lane.b32.xlu0 %v313, %s354
    %v356 = vpop.permute.xlu0 %355
    %s358 = sor.u32 256, 88
    %359 = vbcast.lane.b32.xlu0 %v313, %s358
    %v360 = vpop.permute.xlu0 %359
    %s362 = sor.u32 256, 96
    %363 = vbcast.lane.b32.xlu0 %v313, %s362
    %v364 = vpop.permute.xlu0 %363
    %s366 = sor.u32 256, 104
    %367 = vbcast.lane.b32.xlu0 %v313, %s366
    %v368 = vpop.permute.xlu0 %367
    %s370 = sor.u32 256, 112
    %371 = vbcast.lane.b32.xlu0 %v313, %s370
    %v372 = vpop.permute.xlu0 %371
    %s374 = sor.u32 256, 120
    %375 = vbcast.lane.b32.xlu0 %v313, %s374
    %v376 = vpop.permute.xlu0 %375
    %v377 = vlaneseq
    %v378 = vshrl.u32 %v377, 7
    %v379 = vsub.s32 1, %v378
    %v380 = vrot.slane %v173, %v379
    %382 = vbcast.lane.b32.xlu0 %v380, 256
    %v383 = vpop.permute.xlu0 %382
    %s385 = sor.u32 256, 8
    %386 = vbcast.lane.b32.xlu0 %v380, %s385
    %v387 = vpop.permute.xlu0 %386
    %s389 = sor.u32 256, 16
    %390 = vbcast.lane.b32.xlu0 %v380, %s389
    %v391 = vpop.permute.xlu0 %390
    %s393 = sor.u32 256, 24
    %394 = vbcast.lane.b32.xlu0 %v380, %s393
    %v395 = vpop.permute.xlu0 %394
    %s397 = sor.u32 256, 32
    %398 = vbcast.lane.b32.xlu0 %v380, %s397
    %v399 = vpop.permute.xlu0 %398
    %s401 = sor.u32 256, 40
    %402 = vbcast.lane.b32.xlu0 %v380, %s401
    %v403 = vpop.permute.xlu0 %402
    %s405 = sor.u32 256, 48
    %406 = vbcast.lane.b32.xlu0 %v380, %s405
    %v407 = vpop.permute.xlu0 %406
    %s409 = sor.u32 256, 56
    %410 = vbcast.lane.b32.xlu0 %v380, %s409
    %v411 = vpop.permute.xlu0 %410
    %s413 = sor.u32 256, 64
    %414 = vbcast.lane.b32.xlu0 %v380, %s413
    %v415 = vpop.permute.xlu0 %414
    %s417 = sor.u32 256, 72
    %418 = vbcast.lane.b32.xlu0 %v380, %s417
    %v419 = vpop.permute.xlu0 %418
    %s421 = sor.u32 256, 80
    %422 = vbcast.lane.b32.xlu0 %v380, %s421
    %v423 = vpop.permute.xlu0 %422
    %s425 = sor.u32 256, 88
    %426 = vbcast.lane.b32.xlu0 %v380, %s425
    %v427 = vpop.permute.xlu0 %426
    %s429 = sor.u32 256, 96
    %430 = vbcast.lane.b32.xlu0 %v380, %s429
    %v431 = vpop.permute.xlu0 %430
    %s433 = sor.u32 256, 104
    %434 = vbcast.lane.b32.xlu0 %v380, %s433
    %v435 = vpop.permute.xlu0 %434
    %s437 = sor.u32 256, 112
    %438 = vbcast.lane.b32.xlu0 %v380, %s437
    %v439 = vpop.permute.xlu0 %438
    %s441 = sor.u32 256, 120
    %442 = vbcast.lane.b32.xlu0 %v380, %s441
    %v443 = vpop.permute.xlu0 %442
    %v444 = vmul.f32 %v101, %v182
    %v445 = vmul.f32 %v102, %v186
    %v446 = vmul.f32 %v103, %v190
    %v447 = vmul.f32 %v104, %v194
    %v448 = vmul.f32 %v105, %v198
    %v449 = vmul.f32 %v106, %v202
    %v450 = vmul.f32 %v107, %v206
    %v451 = vmul.f32 %v108, %v210
    %v452 = vmul.f32 %v109, %v214
    %v453 = vmul.f32 %v110, %v218
    %v454 = vmul.f32 %v111, %v222
    %v455 = vmul.f32 %v112, %v226
    %v456 = vmul.f32 %v113, %v230
    %v457 = vmul.f32 %v114, %v234
    %v458 = vmul.f32 %v115, %v238
    %v459 = vmul.f32 %v116, %v242
    %v460 = vmul.f32 %v117, %v249
    %v461 = vmul.f32 %v118, %v253
    %v462 = vmul.f32 %v119, %v257
    %v463 = vmul.f32 %v120, %v261
    %v464 = vmul.f32 %v121, %v265
    %v465 = vmul.f32 %v122, %v269
    %v466 = vmul.f32 %v123, %v273
    %v467 = vmul.f32 %v124, %v277
    %v468 = vmul.f32 %v125, %v281
    %v469 = vmul.f32 %v126, %v285
    %v470 = vmul.f32 %v127, %v289
    %v471 = vmul.f32 %v128, %v293
    %v472 = vmul.f32 %v129, %v297
    %v473 = vmul.f32 %v130, %v301
    %v474 = vmul.f32 %v131, %v305
    %v475 = vmul.f32 %v132, %v309
    %v476 = vmul.f32 %v133, %v316
    %v477 = vmul.f32 %v134, %v320
    %v478 = vmul.f32 %v135, %v324
    %v479 = vmul.f32 %v136, %v328
    %v480 = vmul.f32 %v137, %v332
    %v481 = vmul.f32 %v138, %v336
    %v482 = vmul.f32 %v139, %v340
    %v483 = vmul.f32 %v140, %v344
    %v484 = vmul.f32 %v141, %v348
    %v485 = vmul.f32 %v142, %v352
    %v486 = vmul.f32 %v143, %v356
    %v487 = vmul.f32 %v144, %v360
    %v488 = vmul.f32 %v145, %v364
    %v489 = vmul.f32 %v146, %v368
    %v490 = vmul.f32 %v147, %v372
    %v491 = vmul.f32 %v148, %v376
    %v492 = vmul.f32 %v149, %v383
    %v493 = vmul.f32 %v150, %v387
    %v494 = vmul.f32 %v151, %v391
    %v495 = vmul.f32 %v152, %v395
    %v496 = vmul.f32 %v153, %v399
    %v497 = vmul.f32 %v154, %v403
    %v498 = vmul.f32 %v155, %v407
    %v499 = vmul.f32 %v156, %v411
    %v500 = vmul.f32 %v157, %v415
    %v501 = vmul.f32 %v158, %v419
    %v502 = vmul.f32 %v159, %v423
    %v503 = vmul.f32 %v160, %v427
    %v504 = vmul.f32 %v161, %v431
    %v505 = vmul.f32 %v162, %v435
    %v506 = vmul.f32 %v163, %v439
    %v507 = vmul.f32 %v164, %v443
    %vm508 = vcmask 261120
    %v509 = vsel %vm508, %v444, 0.0
    %v510 = vsel %vm508, %v445, 0.0
    %v511 = vadd.f32 %v509, %v510
    %v512 = vsel %vm508, %v446, 0.0
    %v513 = vadd.f32 %v511, %v512
    %v514 = vsel %vm508, %v447, 0.0
    %v515 = vadd.f32 %v513, %v514
    %v516 = vsel %vm508, %v448, 0.0
    %v517 = vadd.f32 %v515, %v516
    %v518 = vsel %vm508, %v449, 0.0
    %v519 = vadd.f32 %v517, %v518
    %v520 = vsel %vm508, %v450, 0.0
    %v521 = vadd.f32 %v519, %v520
    %v522 = vsel %vm508, %v451, 0.0
    %v523 = vadd.f32 %v521, %v522
    %v524 = vsel %vm508, %v452, 0.0
    %v525 = vadd.f32 %v523, %v524
    %v526 = vsel %vm508, %v453, 0.0
    %v527 = vadd.f32 %v525, %v526
    %v528 = vsel %vm508, %v454, 0.0
    %v529 = vadd.f32 %v527, %v528
    %v530 = vsel %vm508, %v455, 0.0
    %v531 = vadd.f32 %v529, %v530
    %v532 = vsel %vm508, %v456, 0.0
    %v533 = vadd.f32 %v531, %v532
    %v534 = vsel %vm508, %v457, 0.0
    %v535 = vadd.f32 %v533, %v534
    %v536 = vsel %vm508, %v458, 0.0
    %v537 = vadd.f32 %v535, %v536
    %v538 = vsel %vm508, %v459, 0.0
    %v539 = vadd.f32 %v537, %v538
    %v540 = vsel %vm508, %v460, 0.0
    %v541 = vadd.f32 %v539, %v540
    %v542 = vsel %vm508, %v461, 0.0
    %v543 = vadd.f32 %v541, %v542
    %v544 = vsel %vm508, %v462, 0.0
    %v545 = vadd.f32 %v543, %v544
    %v546 = vsel %vm508, %v463, 0.0
    %v547 = vadd.f32 %v545, %v546
    %v548 = vsel %vm508, %v464, 0.0
    %v549 = vadd.f32 %v547, %v548
    %v550 = vsel %vm508, %v465, 0.0
    %v551 = vadd.f32 %v549, %v550
    %v552 = vsel %vm508, %v466, 0.0
    %v553 = vadd.f32 %v551, %v552
    %v554 = vsel %vm508, %v467, 0.0
    %v555 = vadd.f32 %v553, %v554
    %v556 = vsel %vm508, %v468, 0.0
    %v557 = vadd.f32 %v555, %v556
    %v558 = vsel %vm508, %v469, 0.0
    %v559 = vadd.f32 %v557, %v558
    %v560 = vsel %vm508, %v470, 0.0
    %v561 = vadd.f32 %v559, %v560
    %v562 = vsel %vm508, %v471, 0.0
    %v563 = vadd.f32 %v561, %v562
    %v564 = vsel %vm508, %v472, 0.0
    %v565 = vadd.f32 %v563, %v564
    %v566 = vsel %vm508, %v473, 0.0
    %v567 = vadd.f32 %v565, %v566
    %v568 = vsel %vm508, %v474, 0.0
    %v569 = vadd.f32 %v567, %v568
    %v570 = vsel %vm508, %v475, 0.0
    %v571 = vadd.f32 %v569, %v570
    %v572 = vrot.slane %v571, 4
    %v573 = vadd.f32 %v571, %v572
    %v574 = vrot.slane %v573, 2
    %v575 = vadd.f32 %v573, %v574
    %v576 = vrot.slane %v575, 1
    %v577 = vadd.f32 %v575, %v576
    %v578 = vsel %vm508, %v476, 0.0
    %v579 = vsel %vm508, %v477, 0.0
    %v580 = vadd.f32 %v578, %v579
    %v581 = vsel %vm508, %v478, 0.0
    %v582 = vadd.f32 %v580, %v581
    %v583 = vsel %vm508, %v479, 0.0
    %v584 = vadd.f32 %v582, %v583
    %v585 = vsel %vm508, %v480, 0.0
    %v586 = vadd.f32 %v584, %v585
    %v587 = vsel %vm508, %v481, 0.0
    %v588 = vadd.f32 %v586, %v587
    %v589 = vsel %vm508, %v482, 0.0
    %v590 = vadd.f32 %v588, %v589
    %v591 = vsel %vm508, %v483, 0.0
    %v592 = vadd.f32 %v590, %v591
    %v593 = vsel %vm508, %v484, 0.0
    %v594 = vadd.f32 %v592, %v593
    %v595 = vsel %vm508, %v485, 0.0
    %v596 = vadd.f32 %v594, %v595
    %v597 = vsel %vm508, %v486, 0.0
    %v598 = vadd.f32 %v596, %v597
    %v599 = vsel %vm508, %v487, 0.0
    %v600 = vadd.f32 %v598, %v599
    %v601 = vsel %vm508, %v488, 0.0
    %v602 = vadd.f32 %v600, %v601
    %v603 = vsel %vm508, %v489, 0.0
    %v604 = vadd.f32 %v602, %v603
    %v605 = vsel %vm508, %v490, 0.0
    %v606 = vadd.f32 %v604, %v605
    %v607 = vsel %vm508, %v491, 0.0
    %v608 = vadd.f32 %v606, %v607
    %v609 = vsel %vm508, %v492, 0.0
    %v610 = vadd.f32 %v608, %v609
    %v611 = vsel %vm508, %v493, 0.0
    %v612 = vadd.f32 %v610, %v611
    %v613 = vsel %vm508, %v494, 0.0
    %v614 = vadd.f32 %v612, %v613
    %v615 = vsel %vm508, %v495, 0.0
    %v616 = vadd.f32 %v614, %v615
    %v617 = vsel %vm508, %v496, 0.0
    %v618 = vadd.f32 %v616, %v617
    %v619 = vsel %vm508, %v497, 0.0
    %v620 = vadd.f32 %v618, %v619
    %v621 = vsel %vm508, %v498, 0.0
    %v622 = vadd.f32 %v620, %v621
    %v623 = vsel %vm508, %v499, 0.0
    %v624 = vadd.f32 %v622, %v623
    %v625 = vsel %vm508, %v500, 0.0
    %v626 = vadd.f32 %v624, %v625
    %v627 = vsel %vm508, %v501, 0.0
    %v628 = vadd.f32 %v626, %v627
    %v629 = vsel %vm508, %v502, 0.0
    %v630 = vadd.f32 %v628, %v629
    %v631 = vsel %vm508, %v503, 0.0
    %v632 = vadd.f32 %v630, %v631
    %v633 = vsel %vm508, %v504, 0.0
    %v634 = vadd.f32 %v632, %v633
    %v635 = vsel %vm508, %v505, 0.0
    %v636 = vadd.f32 %v634, %v635
    %v637 = vsel %vm508, %v506, 0.0
    %v638 = vadd.f32 %v636, %v637
    %v639 = vsel %vm508, %v507, 0.0
    %v640 = vadd.f32 %v638, %v639
    %v641 = vrot.slane %v640, 4
    %v642 = vadd.f32 %v640, %v641
    %v643 = vrot.slane %v642, 2
    %v644 = vadd.f32 %v642, %v643
    %v645 = vrot.slane %v644, 1
    %v646 = vadd.f32 %v644, %v645
    %vm649 = vcmask 1041409
    %v650 = vsel %vm649, %v646, %v577
    %v652 = vadd.f32 %v100, %v650
    %vm653 = vcmask 254976
    %654 = vst.msk [vmem:[#allocation2] sm:$0x3] %vm653, %v652
    // Predicated region
    $region34: #{tpu_custom_call.1} parent=1 // pred_check
      %p655 = pneg %p28
    $region35: #{tpu_custom_call.1} parent=1 // pred_check_branch
      %657 = sbr.rel (%p655) target = $region37
    $region36: #{tpu_custom_call.1} parent=1 // pred_region
      %v658 = vld [vmem:[#allocation2] sm:$0x3]
      %v659 = vld [vmem:[%s2] sm:$0x3]
      %661 = vset.pattern.permute.xlu0 0
      %662 = vperm.xlu0 %661, %v659
      %v663 = vpop.permute.xlu0 %662
      %v665 = vmul.f32 %v658, %v663
      %v666 = vpack.c.bf16 %v665, %v665
      %v667 = vld [vmem:[%s3] sm:$0xf]
      %v668 = vld [vmem:[%s3 + $0x4] sm:$0xf]
      %v669 = vld [vmem:[%s3 + $0x8] sm:$0xf]
      %v670 = vld [vmem:[%s3 + $0xc] sm:$0xf]
      %v671 = vld [vmem:[%s4] sm:$0x1]
      %v673 = vlaneseq
      %v674 = vshrl.u32 %v673, 7
      %v675 = vsub.s32 0, %v674
      %v676 = vrot.slane %v671, %v675
      %v682 = vunpack.c.l.b16 %v667
      %v683 = vunpack.c.l.b16 %v668
      %v684 = vunpack.c.l.b16 %v669
      %v685 = vunpack.c.l.b16 %v670
      %v686 = vpack.c.b16 %v683, %v682
      %v687 = vpack.c.b16 %v685, %v684
      %v691 = vsel %vm508, %v666, 0
      %693 = vmatprep.subr.bf16.mxu0 0
      %694 = vmatpush1.bf16.msra.mxu0 %v686
      %695 = vmatprep.subr.bf16.mxu0 0
      %696 = vmatpush1.bf16.msra.mxu0 %v687
      %697 = vmatprep.subr.bf16.mxu0 0
      %698 = vmatpush1.bf16.msra.mxu0 0
      %699 = vmatprep.subr.bf16.mxu0 0
      %700 = vmatpush1.bf16.msra.mxu0 0
      %701 = vmatprep.subr.bf16.mxu0 0
      %702 = vmatpush1.bf16.msra.mxu0 0
      %703 = vmatprep.subr.bf16.mxu0 0
      %704 = vmatpush1.bf16.msra.mxu0 0
      %705 = vmatprep.subr.bf16.mxu0 0
      %706 = vmatpush1.bf16.msra.mxu0 0
      %707 = vmatprep.subr.bf16.mxu0 0
      %708 = vmatpush1.bf16.msra.mxu0 0
      %709 = vmatprep.subr.bf16.mxu0 0
      %710 = vmatpush1.bf16.msra.mxu0 0
      %711 = vmatprep.subr.bf16.mxu0 0
      %712 = vmatpush1.bf16.msra.mxu0 0
      %713 = vmatprep.subr.bf16.mxu0 0
      %714 = vmatpush1.bf16.msra.mxu0 0
      %715 = vmatprep.subr.bf16.mxu0 0
      %716 = vmatpush1.bf16.msra.mxu0 0
      %717 = vmatprep.subr.bf16.mxu0 0
      %718 = vmatpush1.bf16.msra.mxu0 0
      %719 = vmatprep.subr.bf16.mxu0 0
      %720 = vmatpush1.bf16.msra.mxu0 0
      %721 = vmatprep.subr.bf16.mxu0 0
      %722 = vmatpush1.bf16.msra.mxu0 0
      %723 = vmatprep.subr.bf16.mxu0 0
      %724 = vmatpush1.bf16.msra.mxu0 0
      %725 = vmatprep.mubr.bf16.mxu0 0
      %726 = vmatmul.mubr.bf16.gmra.mrb[0].mxu0 %v691
      %v727 = vpop.f32.mrb[0].mxu0
      %v728 = vadd.f32 %v676, %v727
      %v729 = vpop.f32.mrb[0].mxu0
      %v730 = vpop.f32.mrb[0].mxu0
      %v731 = vpop.f32.mrb[0].mxu0
      %732 = vdwg.mxu0
      %v733 = vmax.f32 %v728, 0.0
      %v734 = vpack.c.bf16 %v733, %v733
      %v735 = vld [vmem:[%s5] sm:$0xf]
      %v736 = vld [vmem:[%s5 + $0x4] sm:$0xf]
      %v737 = vld [vmem:[%s5 + $0x8] sm:$0xf]
      %v738 = vld [vmem:[%s5 + $0xc] sm:$0xf]
      %v739 = vld [vmem:[%s6] sm:$0x1]
      %v741 = vlaneseq
      %v742 = vshrl.u32 %v741, 7
      %v743 = vsub.s32 0, %v742
      %v744 = vrot.slane %v739, %v743
      %v750 = vunpack.c.l.b16 %v735
      %v751 = vunpack.c.l.b16 %v736
      %v752 = vunpack.c.l.b16 %v737
      %v753 = vunpack.c.l.b16 %v738
      %v754 = vpack.c.b16 %v751, %v750
      %v755 = vpack.c.b16 %v753, %v752
      %v759 = vsel %vm508, %v734, 0
      %761 = vmatprep.subr.bf16.mxu0 0
      %762 = vmatpush1.bf16.msra.mxu0 %v754
      %763 = vmatprep.subr.bf16.mxu0 0
      %764 = vmatpush1.bf16.msra.mxu0 %v755
      %765 = vmatprep.subr.bf16.mxu0 0
      %766 = vmatpush1.bf16.msra.mxu0 0
      %767 = vmatprep.subr.bf16.mxu0 0
      %768 = vmatpush1.bf16.msra.mxu0 0
      %769 = vmatprep.subr.bf16.mxu0 0
      %770 = vmatpush1.bf16.msra.mxu0 0
      %771 = vmatprep.subr.bf16.mxu0 0
      %772 = vmatpush1.bf16.msra.mxu0 0
      %773 = vmatprep.subr.bf16.mxu0 0
      %774 = vmatpush1.bf16.msra.mxu0 0
      %775 = vmatprep.subr.bf16.mxu0 0
      %776 = vmatpush1.bf16.msra.mxu0 0
      %777 = vmatprep.subr.bf16.mxu0 0
      %778 = vmatpush1.bf16.msra.mxu0 0
      %779 = vmatprep.subr.bf16.mxu0 0
      %780 = vmatpush1.bf16.msra.mxu0 0
      %781 = vmatprep.subr.bf16.mxu0 0
      %782 = vmatpush1.bf16.msra.mxu0 0
      %783 = vmatprep.subr.bf16.mxu0 0
      %784 = vmatpush1.bf16.msra.mxu0 0
      %785 = vmatprep.subr.bf16.mxu0 0
      %786 = vmatpush1.bf16.msra.mxu0 0
      %787 = vmatprep.subr.bf16.mxu0 0
      %788 = vmatpush1.bf16.msra.mxu0 0
      %789 = vmatprep.subr.bf16.mxu0 0
      %790 = vmatpush1.bf16.msra.mxu0 0
      %791 = vmatprep.subr.bf16.mxu0 0
      %792 = vmatpush1.bf16.msra.mxu0 0
      %793 = vmatprep.mubr.bf16.mxu0 0
      %794 = vmatmul.mubr.bf16.gmra.mrb[0].mxu0 %v759
      %v795 = vpop.f32.mrb[0].mxu0
      %v796 = vadd.f32 %v744, %v795
      %v797 = vpop.f32.mrb[0].mxu0
      %v798 = vpop.f32.mrb[0].mxu0
      %v799 = vpop.f32.mrb[0].mxu0
      %800 = vdwg.mxu0
      %801 = vst [vmem:[#allocation3] sm:$0x3] %v796
    $region37: #{tpu_custom_call.1} parent=1 // pred_fallthru
      _
    // Predicated region
    $region38: #{tpu_custom_call.1} parent=1 // pred_check
      _
    $region39: #{tpu_custom_call.1} parent=1 // pred_check_branch
      %803 = sbr.rel (0) target = $region41
    $region40: #{tpu_custom_call.1} parent=1 // pred_region
      %s805 = ssub.s32 32, 32
      %806 = vsyncadd [#allocation4], %s805
      %s808 = sshll.u32 [#allocation3], 4
      %s809 = int_to_ptr.vmem [resolvable:$true] %s808
      %811 = dma.vmem_to_hbm [thread:$0]  %s809, 32, %s7, [#allocation4]
    $region41: #{tpu_custom_call.1} parent=1 // pred_fallthru
      _
    // Predicated region
    $region42: #{tpu_custom_call.1} parent=1 // pred_check
      _
    $region43: #{tpu_custom_call.1} parent=1 // pred_check_branch
      %813 = sbr.rel (0) target = $region45
    $region44: #{tpu_custom_call.1} parent=1 // pred_region
      %814 = dma.done [#allocation4], 32
    $region45: #{tpu_custom_call.1} parent=1 // pred_fallthru
      _
    %815 = vsyncpa [#allocation4], 1

// kernel: tpu_custom_call.1
$region0: #{tpu_custom_call.1}
  #allocation0 [shape = 'u32[]', space=smem, size = 0x4, offset = 0x4, fixed_abs, tag = 'smem constant byte address 0x4 - core index']
  #allocation1 [shape = 'u32[144,128]{1,0:T(1,128)}', space=vmem, size = 0x12000, scoped, tag = 'internal scratch']
  #allocation2 [shape = 'f32[2,32]{1,0:T(2,128)}', space=vmem, size = 0x400, scoped, tag = 'scratch operand']
  %s0 = inlined_call_operand.vmem [shape: bf16[2,256,32], index: 0, kind: input, shape index: {}]
  %s1 = inlined_call_operand.vmem [shape: bf16[2,256], index: 1, kind: input, shape index: {}]
  %s2 = inlined_call_operand.vmem [shape: f32[2,1], index: 2, kind: input, shape index: {}]
  %s3 = inlined_call_operand.vmem [shape: bf16[32,32], index: 3, kind: input, shape index: {}]
  %s4 = inlined_call_operand.vmem [shape: f32[1,32], index: 4, kind: input, shape index: {}]
  %s5 = inlined_call_operand.vmem [shape: bf16[32,128], index: 5, kind: input, shape index: {}]
  %s6 = inlined_call_operand.vmem [shape: f32[1,128], index: 6, kind: input, shape index: {}]
  %s7 = inlined_call_operand.hbm [shape: f32[2,128], index: 7, kind: output, shape index: {}]
  %s8 = sld [smem:[#allocation0]]
  $region46: #{tpu_custom_call.1} parent=0
    _
  %s10 = ssub.s32 1, %s8
  %s11 = scalar_select 0, %s10, %s8
  $region1: #{tpu_custom_call.1} parent=0
    #allocation3 [shape = 'u8[1024]{0}', space=vmem, size = 0x400, scoped, tag = 'output window, operand 0, single buffered']
    #allocation4 [shape = 's32[1]{0}', space=sflag, size = 0x4, scoped, tag = 'scoped memory for tpu_custom_call.1']
    %12 = vsyncpa [#allocation4], 0
    // Predicated region
    $region2: #{tpu_custom_call.1} parent=1 // pred_check
      _
    $region3: #{tpu_custom_call.1} parent=1 // pred_check_branch
      %14 = sbr.rel (0) target = $region5
    $region4: #{tpu_custom_call.1} parent=1 // pred_region
      _
    $region5: #{tpu_custom_call.1} parent=1 // pred_fallthru
      _
    // Predicated region
    $region6: #{tpu_custom_call.1} parent=1 // pred_check
      _
    $region7: #{tpu_custom_call.1} parent=1 // pred_check_branch
      %16 = sbr.rel (0) target = $region9
    $region8: #{tpu_custom_call.1} parent=1 // pred_region
      _
    $region9: #{tpu_custom_call.1} parent=1 // pred_fallthru
      _
    // Predicated region
    $region10: #{tpu_custom_call.1} parent=1 // pred_check
      _
    $region11: #{tpu_custom_call.1} parent=1 // pred_check_branch
      %18 = sbr.rel (0) target = $region13
    $region12: #{tpu_custom_call.1} parent=1 // pred_region
      _
    $region13: #{tpu_custom_call.1} parent=1 // pred_fallthru
      _
    // Predicated region
    $region14: #{tpu_custom_call.1} parent=1 // pred_check
      _
    $region15: #{tpu_custom_call.1} parent=1 // pred_check_branch
      %20 = sbr.rel (0) target = $region17
    $region16: #{tpu_custom_call.1} parent=1 // pred_region
      _
    $region17: #{tpu_custom_call.1} parent=1 // pred_fallthru
      _
    // Predicated region
    $region18: #{tpu_custom_call.1} parent=1 // pred_check
      _
    $region19: #{tpu_custom_call.1} parent=1 // pred_check_branch
      %22 = sbr.rel (0) target = $region21
    $region20: #{tpu_custom_call.1} parent=1 // pred_region
      _
    $region21: #{tpu_custom_call.1} parent=1 // pred_fallthru
      _
    // Predicated region
    $region22: #{tpu_custom_call.1} parent=1 // pred_check
      _
    $region23: #{tpu_custom_call.1} parent=1 // pred_check_branch
      %24 = sbr.rel (0) target = $region25
    $region24: #{tpu_custom_call.1} parent=1 // pred_region
      _
    $region25: #{tpu_custom_call.1} parent=1 // pred_fallthru
      _
    // Predicated region
    $region26: #{tpu_custom_call.1} parent=1 // pred_check
      _
    $region27: #{tpu_custom_call.1} parent=1 // pred_check_branch
      %26 = sbr.rel (0) target = $region29
    $region28: #{tpu_custom_call.1} parent=1 // pred_region
      _
    $region29: #{tpu_custom_call.1} parent=1 // pred_fallthru
      _
    %p28 = scmp.eq.s32.totalorder 0, 0
    // Predicated region
    $region30: #{tpu_custom_call.1} parent=1 // pred_check
      %p29 = pneg %p28
    $region31: #{tpu_custom_call.1} parent=1 // pred_check_branch
      %31 = sbr.rel (%p29) target = $region33
    $region32: #{tpu_custom_call.1} parent=1 // pred_region
      %vm32 = vcmask 254976
      %33 = vst.msk [vmem:[#allocation2] sm:$0x3] %vm32, 0.0
    $region33: #{tpu_custom_call.1} parent=1 // pred_fallthru
      _
    %v34 = vld [vmem:[%s0] sm:$0xf]
    %v35 = vld [vmem:[%s0 + $0x4] sm:$0xf]
    %v36 = vld [vmem:[%s0 + $0x8] sm:$0xf]
    %v37 = vld [vmem:[%s0 + $0xc] sm:$0xf]
    %v38 = vld [vmem:[%s0 + $0x10] sm:$0xf]
    %v39 = vld [vmem:[%s0 + $0x14] sm:$0xf]
    %v40 = vld [vmem:[%s0 + $0x18] sm:$0xf]
    %v41 = vld [vmem:[%s0 + $0x1c] sm:$0xf]
    %v42 = vld [vmem:[%s0 + $0x20] sm:$0xf]
    %v43 = vld [vmem:[%s0 + $0x24] sm:$0xf]
    %v44 = vld [vmem:[%s0 + $0x28] sm:$0xf]
    %v45 = vld [vmem:[%s0 + $0x2c] sm:$0xf]
    %v46 = vld [vmem:[%s0 + $0x30] sm:$0xf]
    %v47 = vld [vmem:[%s0 + $0x34] sm:$0xf]
    %v48 = vld [vmem:[%s0 + $0x38] sm:$0xf]
    %v49 = vld [vmem:[%s0 + $0x3c] sm:$0xf]
    %v50 = vld [vmem:[%s0 + $0x40] sm:$0xf]
    %v51 = vld [vmem:[%s0 + $0x44] sm:$0xf]
    %v52 = vld [vmem:[%s0 + $0x48] sm:$0xf]
    %v53 = vld [vmem:[%s0 + $0x4c] sm:$0xf]
    %v54 = vld [vmem:[%s0 + $0x50] sm:$0xf]
    %v55 = vld [vmem:[%s0 + $0x54] sm:$0xf]
    %v56 = vld [vmem:[%s0 + $0x58] sm:$0xf]
    %v57 = vld [vmem:[%s0 + $0x5c] sm:$0xf]
    %v58 = vld [vmem:[%s0 + $0x60] sm:$0xf]
    %v59 = vld [vmem:[%s0 + $0x64] sm:$0xf]
    %v60 = vld [vmem:[%s0 + $0x68] sm:$0xf]
    %v61 = vld [vmem:[%s0 + $0x6c] sm:$0xf]
    %v62 = vld [vmem:[%s0 + $0x70] sm:$0xf]
    %v63 = vld [vmem:[%s0 + $0x74] sm:$0xf]
    %v64 = vld [vmem:[%s0 + $0x78] sm:$0xf]
    %v65 = vld [vmem:[%s0 + $0x7c] sm:$0xf]
    %v66 = vld [vmem:[%s0 + $0x80] sm:$0xf]
    %v67 = vld [vmem:[%s0 + $0x84] sm:$0xf]
    %v68 = vld [vmem:[%s0 + $0x88] sm:$0xf]
    %v69 = vld [vmem:[%s0 + $0x8c] sm:$0xf]
    %v70 = vld [vmem:[%s0 + $0x90] sm:$0xf]
    %v71 = vld [vmem:[%s0 + $0x94] sm:$0xf]
    %v72 = vld [vmem:[%s0 + $0x98] sm:$0xf]
    %v73 = vld [vmem:[%s0 + $0x9c] sm:$0xf]
    %v74 = vld [vmem:[%s0 + $0xa0] sm:$0xf]
    %v75 = vld [vmem:[%s0 + $0xa4] sm:$0xf]
    %v76 = vld [vmem:[%s0 + $0xa8] sm:$0xf]
    %v77 = vld [vmem:[%s0 + $0xac] sm:$0xf]
    %v78 = vld [vmem:[%s0 + $0xb0] sm:$0xf]
    %v79 = vld [vmem:[%s0 + $0xb4] sm:$0xf]
    %v80 = vld [vmem:[%s0 + $0xb8] sm:$0xf]
    %v81 = vld [vmem:[%s0 + $0xbc] sm:$0xf]
    %v82 = vld [vmem:[%s0 + $0xc0] sm:$0xf]
    %v83 = vld [vmem:[%s0 + $0xc4] sm:$0xf]
    %v84 = vld [vmem:[%s0 + $0xc8] sm:$0xf]
    %v85 = vld [vmem:[%s0 + $0xcc] sm:$0xf]
    %v86 = vld [vmem:[%s0 + $0xd0] sm:$0xf]
    %v87 = vld [vmem:[%s0 + $0xd4] sm:$0xf]
    %v88 = vld [vmem:[%s0 + $0xd8] sm:$0xf]
    %v89 = vld [vmem:[%s0 + $0xdc] sm:$0xf]
    %v90 = vld [vmem:[%s0 + $0xe0] sm:$0xf]
    %v91 = vld [vmem:[%s0 + $0xe4] sm:$0xf]
    %v92 = vld [vmem:[%s0 + $0xe8] sm:$0xf]
    %v93 = vld [vmem:[%s0 + $0xec] sm:$0xf]
    %v94 = vld [vmem:[%s0 + $0xf0] sm:$0xf]
    %v95 = vld [vmem:[%s0 + $0xf4] sm:$0xf]
    %v96 = vld [vmem:[%s0 + $0xf8] sm:$0xf]
    %v97 = vld [vmem:[%s0 + $0xfc] sm:$0xf]
    %v98 = vld [vmem:[%s1] sm:$0x3]
    %v99 = vunpack.c.l.bf16 %v98
    %v100 = vld [vmem:[#allocation2] sm:$0x3]
    %v101 = vunpack.c.l.bf16 %v34
    %v102 = vunpack.c.l.bf16 %v35
    %v103 = vunpack.c.l.bf16 %v36
    %v104 = vunpack.c.l.bf16 %v37
    %v105 = vunpack.c.l.bf16 %v38
    %v106 = vunpack.c.l.bf16 %v39
    %v107 = vunpack.c.l.bf16 %v40
    %v108 = vunpack.c.l.bf16 %v41
    %v109 = vunpack.c.l.bf16 %v42
    %v110 = vunpack.c.l.bf16 %v43
    %v111 = vunpack.c.l.bf16 %v44
    %v112 = vunpack.c.l.bf16 %v45
    %v113 = vunpack.c.l.bf16 %v46
    %v114 = vunpack.c.l.bf16 %v47
    %v115 = vunpack.c.l.bf16 %v48
    %v116 = vunpack.c.l.bf16 %v49
    %v117 = vunpack.c.l.bf16 %v50
    %v118 = vunpack.c.l.bf16 %v51
    %v119 = vunpack.c.l.bf16 %v52
    %v120 = vunpack.c.l.bf16 %v53
    %v121 = vunpack.c.l.bf16 %v54
    %v122 = vunpack.c.l.bf16 %v55
    %v123 = vunpack.c.l.bf16 %v56
    %v124 = vunpack.c.l.bf16 %v57
    %v125 = vunpack.c.l.bf16 %v58
    %v126 = vunpack.c.l.bf16 %v59
    %v127 = vunpack.c.l.bf16 %v60
    %v128 = vunpack.c.l.bf16 %v61
    %v129 = vunpack.c.l.bf16 %v62
    %v130 = vunpack.c.l.bf16 %v63
    %v131 = vunpack.c.l.bf16 %v64
    %v132 = vunpack.c.l.bf16 %v65
    %v133 = vunpack.c.l.bf16 %v66
    %v134 = vunpack.c.l.bf16 %v67
    %v135 = vunpack.c.l.bf16 %v68
    %v136 = vunpack.c.l.bf16 %v69
    %v137 = vunpack.c.l.bf16 %v70
    %v138 = vunpack.c.l.bf16 %v71
    %v139 = vunpack.c.l.bf16 %v72
    %v140 = vunpack.c.l.bf16 %v73
    %v141 = vunpack.c.l.bf16 %v74
    %v142 = vunpack.c.l.bf16 %v75
    %v143 = vunpack.c.l.bf16 %v76
    %v144 = vunpack.c.l.bf16 %v77
    %v145 = vunpack.c.l.bf16 %v78
    %v146 = vunpack.c.l.bf16 %v79
    %v147 = vunpack.c.l.bf16 %v80
    %v148 = vunpack.c.l.bf16 %v81
    %v149 = vunpack.c.l.bf16 %v82
    %v150 = vunpack.c.l.bf16 %v83
    %v151 = vunpack.c.l.bf16 %v84
    %v152 = vunpack.c.l.bf16 %v85
    %v153 = vunpack.c.l.bf16 %v86
    %v154 = vunpack.c.l.bf16 %v87
    %v155 = vunpack.c.l.bf16 %v88
    %v156 = vunpack.c.l.bf16 %v89
    %v157 = vunpack.c.l.bf16 %v90
    %v158 = vunpack.c.l.bf16 %v91
    %v159 = vunpack.c.l.bf16 %v92
    %v160 = vunpack.c.l.bf16 %v93
    %v161 = vunpack.c.l.bf16 %v94
    %v162 = vunpack.c.l.bf16 %v95
    %v163 = vunpack.c.l.bf16 %v96
    %v164 = vunpack.c.l.bf16 %v97
    %v167 = vunpack.c.l.s4 1983009808
    %v168 = vunpack.c.0.s8 %v167
    %v169 = vlaneseq
    %v170 = vshrl.u32 %v169, 7
    %v171 = vsub.s32 %v168, %v170
    %v172 = vrot.slane %v99, %v171
    %v173 = vcombine.high %v172, %v172
    %v176 = vlaneseq
    %v177 = vshrl.u32 %v176, 7
    %v178 = vsub.s32 0, %v177
    %v179 = vrot.slane %v172, %v178
    %181 = vbcast.lane.b32.xlu0 %v179, 256
    %v182 = vpop.permute.xlu0 %181
    %s184 = sor.u32 256, 8
    %185 = vbcast.lane.b32.xlu0 %v179, %s184
    %v186 = vpop.permute.xlu0 %185
    %s188 = sor.u32 256, 16
    %189 = vbcast.lane.b32.xlu0 %v179, %s188
    %v190 = vpop.permute.xlu0 %189
    %s192 = sor.u32 256, 24
    %193 = vbcast.lane.b32.xlu0 %v179, %s192
    %v194 = vpop.permute.xlu0 %193
    %s196 = sor.u32 256, 32
    %197 = vbcast.lane.b32.xlu0 %v179, %s196
    %v198 = vpop.permute.xlu0 %197
    %s200 = sor.u32 256, 40
    %201 = vbcast.lane.b32.xlu0 %v179, %s200
    %v202 = vpop.permute.xlu0 %201
    %s204 = sor.u32 256, 48
    %205 = vbcast.lane.b32.xlu0 %v179, %s204
    %v206 = vpop.permute.xlu0 %205
    %s208 = sor.u32 256, 56
    %209 = vbcast.lane.b32.xlu0 %v179, %s208
    %v210 = vpop.permute.xlu0 %209
    %s212 = sor.u32 256, 64
    %213 = vbcast.lane.b32.xlu0 %v179, %s212
    %v214 = vpop.permute.xlu0 %213
    %s216 = sor.u32 256, 72
    %217 = vbcast.lane.b32.xlu0 %v179, %s216
    %v218 = vpop.permute.xlu0 %217
    %s220 = sor.u32 256, 80
    %221 = vbcast.lane.b32.xlu0 %v179, %s220
    %v222 = vpop.permute.xlu0 %221
    %s224 = sor.u32 256, 88
    %225 = vbcast.lane.b32.xlu0 %v179, %s224
    %v226 = vpop.permute.xlu0 %225
    %s228 = sor.u32 256, 96
    %229 = vbcast.lane.b32.xlu0 %v179, %s228
    %v230 = vpop.permute.xlu0 %229
    %s232 = sor.u32 256, 104
    %233 = vbcast.lane.b32.xlu0 %v179, %s232
    %v234 = vpop.permute.xlu0 %233
    %s236 = sor.u32 256, 112
    %237 = vbcast.lane.b32.xlu0 %v179, %s236
    %v238 = vpop.permute.xlu0 %237
    %s240 = sor.u32 256, 120
    %241 = vbcast.lane.b32.xlu0 %v179, %s240
    %v242 = vpop.permute.xlu0 %241
    %v243 = vlaneseq
    %v244 = vshrl.u32 %v243, 7
    %v245 = vsub.s32 0, %v244
    %v246 = vrot.slane %v173, %v245
    %248 = vbcast.lane.b32.xlu0 %v246, 256
    %v249 = vpop.permute.xlu0 %248
    %s251 = sor.u32 256, 8
    %252 = vbcast.lane.b32.xlu0 %v246, %s251
    %v253 = vpop.permute.xlu0 %252
    %s255 = sor.u32 256, 16
    %256 = vbcast.lane.b32.xlu0 %v246, %s255
    %v257 = vpop.permute.xlu0 %256
    %s259 = sor.u32 256, 24
    %260 = vbcast.lane.b32.xlu0 %v246, %s259
    %v261 = vpop.permute.xlu0 %260
    %s263 = sor.u32 256, 32
    %264 = vbcast.lane.b32.xlu0 %v246, %s263
    %v265 = vpop.permute.xlu0 %264
    %s267 = sor.u32 256, 40
    %268 = vbcast.lane.b32.xlu0 %v246, %s267
    %v269 = vpop.permute.xlu0 %268
    %s271 = sor.u32 256, 48
    %272 = vbcast.lane.b32.xlu0 %v246, %s271
    %v273 = vpop.permute.xlu0 %272
    %s275 = sor.u32 256, 56
    %276 = vbcast.lane.b32.xlu0 %v246, %s275
    %v277 = vpop.permute.xlu0 %276
    %s279 = sor.u32 256, 64
    %280 = vbcast.lane.b32.xlu0 %v246, %s279
    %v281 = vpop.permute.xlu0 %280
    %s283 = sor.u32 256, 72
    %284 = vbcast.lane.b32.xlu0 %v246, %s283
    %v285 = vpop.permute.xlu0 %284
    %s287 = sor.u32 256, 80
    %288 = vbcast.lane.b32.xlu0 %v246, %s287
    %v289 = vpop.permute.xlu0 %288
    %s291 = sor.u32 256, 88
    %292 = vbcast.lane.b32.xlu0 %v246, %s291
    %v293 = vpop.permute.xlu0 %292
    %s295 = sor.u32 256, 96
    %296 = vbcast.lane.b32.xlu0 %v246, %s295
    %v297 = vpop.permute.xlu0 %296
    %s299 = sor.u32 256, 104
    %300 = vbcast.lane.b32.xlu0 %v246, %s299
    %v301 = vpop.permute.xlu0 %300
    %s303 = sor.u32 256, 112
    %304 = vbcast.lane.b32.xlu0 %v246, %s303
    %v305 = vpop.permute.xlu0 %304
    %s307 = sor.u32 256, 120
    %308 = vbcast.lane.b32.xlu0 %v246, %s307
    %v309 = vpop.permute.xlu0 %308
    %v310 = vlaneseq
    %v311 = vshrl.u32 %v310, 7
    %v312 = vsub.s32 1, %v311
    %v313 = vrot.slane %v172, %v312
    %315 = vbcast.lane.b32.xlu0 %v313, 256
    %v316 = vpop.permute.xlu0 %315
    %s318 = sor.u32 256, 8
    %319 = vbcast.lane.b32.xlu0 %v313, %s318
    %v320 = vpop.permute.xlu0 %319
    %s322 = sor.u32 256, 16
    %323 = vbcast.lane.b32.xlu0 %v313, %s322
    %v324 = vpop.permute.xlu0 %323
    %s326 = sor.u32 256, 24
    %327 = vbcast.lane.b32.xlu0 %v313, %s326
    %v328 = vpop.permute.xlu0 %327
    %s330 = sor.u32 256, 32
    %331 = vbcast.lane.b32.xlu0 %v313, %s330
    %v332 = vpop.permute.xlu0 %331
    %s334 = sor.u32 256, 40
    %335 = vbcast.lane.b32.xlu0 %v313, %s334
    %v336 = vpop.permute.xlu0 %335
    %s338 = sor.u32 256, 48
    %339 = vbcast.lane.b32.xlu0 %v313, %s338
    %v340 = vpop.permute.xlu0 %339
    %s342 = sor.u32 256, 56
    %343 = vbcast.lane.b32.xlu0 %v313, %s342
    %v344 = vpop.permute.xlu0 %343
    %s346 = sor.u32 256, 64
    %347 = vbcast.lane.b32.xlu0 %v313, %s346
    %v348 = vpop.permute.xlu0 %347
    %s350 = sor.u32 256, 72
    %351 = vbcast.lane.b32.xlu0 %v313, %s350
    %v352 = vpop.permute.xlu0 %351
    %s354 = sor.u32 256, 80
    %355 = vbcast.lane.b32.xlu0 %v313, %s354
    %v356 = vpop.permute.xlu0 %355
    %s358 = sor.u32 256, 88
    %359 = vbcast.lane.b32.xlu0 %v313, %s358
    %v360 = vpop.permute.xlu0 %359
    %s362 = sor.u32 256, 96
    %363 = vbcast.lane.b32.xlu0 %v313, %s362
    %v364 = vpop.permute.xlu0 %363
    %s366 = sor.u32 256, 104
    %367 = vbcast.lane.b32.xlu0 %v313, %s366
    %v368 = vpop.permute.xlu0 %367
    %s370 = sor.u32 256, 112
    %371 = vbcast.lane.b32.xlu0 %v313, %s370
    %v372 = vpop.permute.xlu0 %371
    %s374 = sor.u32 256, 120
    %375 = vbcast.lane.b32.xlu0 %v313, %s374
    %v376 = vpop.permute.xlu0 %375
    %v377 = vlaneseq
    %v378 = vshrl.u32 %v377, 7
    %v379 = vsub.s32 1, %v378
    %v380 = vrot.slane %v173, %v379
    %382 = vbcast.lane.b32.xlu0 %v380, 256
    %v383 = vpop.permute.xlu0 %382
    %s385 = sor.u32 256, 8
    %386 = vbcast.lane.b32.xlu0 %v380, %s385
    %v387 = vpop.permute.xlu0 %386
    %s389 = sor.u32 256, 16
    %390 = vbcast.lane.b32.xlu0 %v380, %s389
    %v391 = vpop.permute.xlu0 %390
    %s393 = sor.u32 256, 24
    %394 = vbcast.lane.b32.xlu0 %v380, %s393
    %v395 = vpop.permute.xlu0 %394
    %s397 = sor.u32 256, 32
    %398 = vbcast.lane.b32.xlu0 %v380, %s397
    %v399 = vpop.permute.xlu0 %398
    %s401 = sor.u32 256, 40
    %402 = vbcast.lane.b32.xlu0 %v380, %s401
    %v403 = vpop.permute.xlu0 %402
    %s405 = sor.u32 256, 48
    %406 = vbcast.lane.b32.xlu0 %v380, %s405
    %v407 = vpop.permute.xlu0 %406
    %s409 = sor.u32 256, 56
    %410 = vbcast.lane.b32.xlu0 %v380, %s409
    %v411 = vpop.permute.xlu0 %410
    %s413 = sor.u32 256, 64
    %414 = vbcast.lane.b32.xlu0 %v380, %s413
    %v415 = vpop.permute.xlu0 %414
    %s417 = sor.u32 256, 72
    %418 = vbcast.lane.b32.xlu0 %v380, %s417
    %v419 = vpop.permute.xlu0 %418
    %s421 = sor.u32 256, 80
    %422 = vbcast.lane.b32.xlu0 %v380, %s421
    %v423 = vpop.permute.xlu0 %422
    %s425 = sor.u32 256, 88
    %426 = vbcast.lane.b32.xlu0 %v380, %s425
    %v427 = vpop.permute.xlu0 %426
    %s429 = sor.u32 256, 96
    %430 = vbcast.lane.b32.xlu0 %v380, %s429
    %v431 = vpop.permute.xlu0 %430
    %s433 = sor.u32 256, 104
    %434 = vbcast.lane.b32.xlu0 %v380, %s433
    %v435 = vpop.permute.xlu0 %434
    %s437 = sor.u32 256, 112
    %438 = vbcast.lane.b32.xlu0 %v380, %s437
    %v439 = vpop.permute.xlu0 %438
    %s441 = sor.u32 256, 120
    %442 = vbcast.lane.b32.xlu0 %v380, %s441
    %v443 = vpop.permute.xlu0 %442
    %v444 = vmul.f32 %v101, %v182
    %v445 = vmul.f32 %v102, %v186
    %v446 = vmul.f32 %v103, %v190
    %v447 = vmul.f32 %v104, %v194
    %v448 = vmul.f32 %v105, %v198
    %v449 = vmul.f32 %v106, %v202
    %v450 = vmul.f32 %v107, %v206
    %v451 = vmul.f32 %v108, %v210
    %v452 = vmul.f32 %v109, %v214
    %v453 = vmul.f32 %v110, %v218
    %v454 = vmul.f32 %v111, %v222
    %v455 = vmul.f32 %v112, %v226
    %v456 = vmul.f32 %v113, %v230
    %v457 = vmul.f32 %v114, %v234
    %v458 = vmul.f32 %v115, %v238
    %v459 = vmul.f32 %v116, %v242
    %v460 = vmul.f32 %v117, %v249
    %v461 = vmul.f32 %v118, %v253
    %v462 = vmul.f32 %v119, %v257
    %v463 = vmul.f32 %v120, %v261
    %v464 = vmul.f32 %v121, %v265
    %v465 = vmul.f32 %v122, %v269
    %v466 = vmul.f32 %v123, %v273
    %v467 = vmul.f32 %v124, %v277
    %v468 = vmul.f32 %v125, %v281
    %v469 = vmul.f32 %v126, %v285
    %v470 = vmul.f32 %v127, %v289
    %v471 = vmul.f32 %v128, %v293
    %v472 = vmul.f32 %v129, %v297
    %v473 = vmul.f32 %v130, %v301
    %v474 = vmul.f32 %v131, %v305
    %v475 = vmul.f32 %v132, %v309
    %v476 = vmul.f32 %v133, %v316
    %v477 = vmul.f32 %v134, %v320
    %v478 = vmul.f32 %v135, %v324
    %v479 = vmul.f32 %v136, %v328
    %v480 = vmul.f32 %v137, %v332
    %v481 = vmul.f32 %v138, %v336
    %v482 = vmul.f32 %v139, %v340
    %v483 = vmul.f32 %v140, %v344
    %v484 = vmul.f32 %v141, %v348
    %v485 = vmul.f32 %v142, %v352
    %v486 = vmul.f32 %v143, %v356
    %v487 = vmul.f32 %v144, %v360
    %v488 = vmul.f32 %v145, %v364
    %v489 = vmul.f32 %v146, %v368
    %v490 = vmul.f32 %v147, %v372
    %v491 = vmul.f32 %v148, %v376
    %v492 = vmul.f32 %v149, %v383
    %v493 = vmul.f32 %v150, %v387
    %v494 = vmul.f32 %v151, %v391
    %v495 = vmul.f32 %v152, %v395
    %v496 = vmul.f32 %v153, %v399
    %v497 = vmul.f32 %v154, %v403
    %v498 = vmul.f32 %v155, %v407
    %v499 = vmul.f32 %v156, %v411
    %v500 = vmul.f32 %v157, %v415
    %v501 = vmul.f32 %v158, %v419
    %v502 = vmul.f32 %v159, %v423
    %v503 = vmul.f32 %v160, %v427
    %v504 = vmul.f32 %v161, %v431
    %v505 = vmul.f32 %v162, %v435
    %v506 = vmul.f32 %v163, %v439
    %v507 = vmul.f32 %v164, %v443
    %vm508 = vcmask 261120
    %v509 = vsel %vm508, %v444, 0.0
    %v510 = vsel %vm508, %v445, 0.0
    %v511 = vadd.f32 %v509, %v510
    %v512 = vsel %vm508, %v446, 0.0
    %v513 = vadd.f32 %v511, %v512
    %v514 = vsel %vm508, %v447, 0.0
    %v515 = vadd.f32 %v513, %v514
    %v516 = vsel %vm508, %v448, 0.0
    %v517 = vadd.f32 %v515, %v516
    %v518 = vsel %vm508, %v449, 0.0
    %v519 = vadd.f32 %v517, %v518
    %v520 = vsel %vm508, %v450, 0.0
    %v521 = vadd.f32 %v519, %v520
    %v522 = vsel %vm508, %v451, 0.0
    %v523 = vadd.f32 %v521, %v522
    %v524 = vsel %vm508, %v452, 0.0
    %v525 = vadd.f32 %v523, %v524
    %v526 = vsel %vm508, %v453, 0.0
    %v527 = vadd.f32 %v525, %v526
    %v528 = vsel %vm508, %v454, 0.0
    %v529 = vadd.f32 %v527, %v528
    %v530 = vsel %vm508, %v455, 0.0
    %v531 = vadd.f32 %v529, %v530
    %v532 = vsel %vm508, %v456, 0.0
    %v533 = vadd.f32 %v531, %v532
    %v534 = vsel %vm508, %v457, 0.0
    %v535 = vadd.f32 %v533, %v534
    %v536 = vsel %vm508, %v458, 0.0
    %v537 = vadd.f32 %v535, %v536
    %v538 = vsel %vm508, %v459, 0.0
    %v539 = vadd.f32 %v537, %v538
    %v540 = vsel %vm508, %v460, 0.0
    %v541 = vadd.f32 %v539, %v540
    %v542 = vsel %vm508, %v461, 0.0
    %v543 = vadd.f32 %v541, %v542
    %v544 = vsel %vm508, %v462, 0.0
    %v545 = vadd.f32 %v543, %v544
    %v546 = vsel %vm508, %v463, 0.0
    %v547 = vadd.f32 %v545, %v546
    %v548 = vsel %vm508, %v464, 0.0
    %v549 = vadd.f32 %v547, %v548
    %v550 = vsel %vm508, %v465, 0.0
    %v551 = vadd.f32 %v549, %v550
    %v552 = vsel %vm508, %v466, 0.0
    %v553 = vadd.f32 %v551, %v552
    %v554 = vsel %vm508, %v467, 0.0
    %v555 = vadd.f32 %v553, %v554
    %v556 = vsel %vm508, %v468, 0.0
    %v557 = vadd.f32 %v555, %v556
    %v558 = vsel %vm508, %v469, 0.0
    %v559 = vadd.f32 %v557, %v558
    %v560 = vsel %vm508, %v470, 0.0
    %v561 = vadd.f32 %v559, %v560
    %v562 = vsel %vm508, %v471, 0.0
    %v563 = vadd.f32 %v561, %v562
    %v564 = vsel %vm508, %v472, 0.0
    %v565 = vadd.f32 %v563, %v564
    %v566 = vsel %vm508, %v473, 0.0
    %v567 = vadd.f32 %v565, %v566
    %v568 = vsel %vm508, %v474, 0.0
    %v569 = vadd.f32 %v567, %v568
    %v570 = vsel %vm508, %v475, 0.0
    %v571 = vadd.f32 %v569, %v570
    %v572 = vrot.slane %v571, 4
    %v573 = vadd.f32 %v571, %v572
    %v574 = vrot.slane %v573, 2
    %v575 = vadd.f32 %v573, %v574
    %v576 = vrot.slane %v575, 1
    %v577 = vadd.f32 %v575, %v576
    %v578 = vsel %vm508, %v476, 0.0
    %v579 = vsel %vm508, %v477, 0.0
    %v580 = vadd.f32 %v578, %v579
    %v581 = vsel %vm508, %v478, 0.0
    %v582 = vadd.f32 %v580, %v581
    %v583 = vsel %vm508, %v479, 0.0
    %v584 = vadd.f32 %v582, %v583
    %v585 = vsel %vm508, %v480, 0.0
    %v586 = vadd.f32 %v584, %v585
    %v587 = vsel %vm508, %v481, 0.0
    %v588 = vadd.f32 %v586, %v587
    %v589 = vsel %vm508, %v482, 0.0
    %v590 = vadd.f32 %v588, %v589
    %v591 = vsel %vm508, %v483, 0.0
    %v592 = vadd.f32 %v590, %v591
    %v593 = vsel %vm508, %v484, 0.0
    %v594 = vadd.f32 %v592, %v593
    %v595 = vsel %vm508, %v485, 0.0
    %v596 = vadd.f32 %v594, %v595
    %v597 = vsel %vm508, %v486, 0.0
    %v598 = vadd.f32 %v596, %v597
    %v599 = vsel %vm508, %v487, 0.0
    %v600 = vadd.f32 %v598, %v599
    %v601 = vsel %vm508, %v488, 0.0
    %v602 = vadd.f32 %v600, %v601
    %v603 = vsel %vm508, %v489, 0.0
    %v604 = vadd.f32 %v602, %v603
    %v605 = vsel %vm508, %v490, 0.0
    %v606 = vadd.f32 %v604, %v605
    %v607 = vsel %vm508, %v491, 0.0
    %v608 = vadd.f32 %v606, %v607
    %v609 = vsel %vm508, %v492, 0.0
    %v610 = vadd.f32 %v608, %v609
    %v611 = vsel %vm508, %v493, 0.0
    %v612 = vadd.f32 %v610, %v611
    %v613 = vsel %vm508, %v494, 0.0
    %v614 = vadd.f32 %v612, %v613
    %v615 = vsel %vm508, %v495, 0.0
    %v616 = vadd.f32 %v614, %v615
    %v617 = vsel %vm508, %v496, 0.0
    %v618 = vadd.f32 %v616, %v617
    %v619 = vsel %vm508, %v497, 0.0
    %v620 = vadd.f32 %v618, %v619
    %v621 = vsel %vm508, %v498, 0.0
    %v622 = vadd.f32 %v620, %v621
    %v623 = vsel %vm508, %v499, 0.0
    %v624 = vadd.f32 %v622, %v623
    %v625 = vsel %vm508, %v500, 0.0
    %v626 = vadd.f32 %v624, %v625
    %v627 = vsel %vm508, %v501, 0.0
    %v628 = vadd.f32 %v626, %v627
    %v629 = vsel %vm508, %v502, 0.0
    %v630 = vadd.f32 %v628, %v629
    %v631 = vsel %vm508, %v503, 0.0
    %v632 = vadd.f32 %v630, %v631
    %v633 = vsel %vm508, %v504, 0.0
    %v634 = vadd.f32 %v632, %v633
    %v635 = vsel %vm508, %v505, 0.0
    %v636 = vadd.f32 %v634, %v635
    %v637 = vsel %vm508, %v506, 0.0
    %v638 = vadd.f32 %v636, %v637
    %v639 = vsel %vm508, %v507, 0.0
    %v640 = vadd.f32 %v638, %v639
    %v641 = vrot.slane %v640, 4
    %v642 = vadd.f32 %v640, %v641
    %v643 = vrot.slane %v642, 2
    %v644 = vadd.f32 %v642, %v643
    %v645 = vrot.slane %v644, 1
    %v646 = vadd.f32 %v644, %v645
    %vm649 = vcmask 1041409
    %v650 = vsel %vm649, %v646, %v577
    %v652 = vadd.f32 %v100, %v650
    %vm653 = vcmask 254976
    %654 = vst.msk [vmem:[#allocation2] sm:$0x3] %vm653, %v652
    // Predicated region
    $region34: #{tpu_custom_call.1} parent=1 // pred_check
      %p655 = pneg %p28
    $region35: #{tpu_custom_call.1} parent=1 // pred_check_branch
      %657 = sbr.rel (%p655) target = $region37
    $region36: #{tpu_custom_call.1} parent=1 // pred_region
      %v658 = vld [vmem:[#allocation2] sm:$0x3]
      %v659 = vld [vmem:[%s2] sm:$0x3]
      %661 = vset.pattern.permute.xlu0 0
      %662 = vperm.xlu0 %661, %v659
      %v663 = vpop.permute.xlu0 %662
      %v665 = vmul.f32 %v658, %v663
      %v666 = vpack.c.bf16 %v665, %v665
      %v667 = vld [vmem:[%s3] sm:$0xf]
      %v668 = vld [vmem:[%s3 + $0x4] sm:$0xf]
      %v669 = vld [vmem:[%s3 + $0x8] sm:$0xf]
      %v670 = vld [vmem:[%s3 + $0xc] sm:$0xf]
      %v671 = vld [vmem:[%s4] sm:$0x1]
      %v673 = vlaneseq
      %v674 = vshrl.u32 %v673, 7
      %v675 = vsub.s32 0, %v674
      %v676 = vrot.slane %v671, %v675
      %v682 = vunpack.c.l.b16 %v667
      %v683 = vunpack.c.l.b16 %v668
      %v684 = vunpack.c.l.b16 %v669
      %v685 = vunpack.c.l.b16 %v670
      %v686 = vpack.c.b16 %v683, %v682
      %v687 = vpack.c.b16 %v685, %v684
      %v691 = vsel %vm508, %v666, 0
      %693 = vmatprep.subr.bf16.mxu0 0
      %694 = vmatpush1.bf16.msra.mxu0 %v686
      %695 = vmatprep.subr.bf16.mxu0 0
      %696 = vmatpush1.bf16.msra.mxu0 %v687
      %697 = vmatprep.subr.bf16.mxu0 0
      %698 = vmatpush1.bf16.msra.mxu0 0
      %699 = vmatprep.subr.bf16.mxu0 0
      %700 = vmatpush1.bf16.msra.mxu0 0
      %701 = vmatprep.subr.bf16.mxu0 0
      %702 = vmatpush1.bf16.msra.mxu0 0
      %703 = vmatprep.subr.bf16.mxu0 0
      %704 = vmatpush1.bf16.msra.mxu0 0
      %705 = vmatprep.subr.bf16.mxu0 0
      %706 = vmatpush1.bf16.msra.mxu0 0
      %707 = vmatprep.subr.bf16.mxu0 0
      %708 = vmatpush1.bf16.msra.mxu0 0
      %709 = vmatprep.subr.bf16.mxu0 0
      %710 = vmatpush1.bf16.msra.mxu0 0
      %711 = vmatprep.subr.bf16.mxu0 0
      %712 = vmatpush1.bf16.msra.mxu0 0
      %713 = vmatprep.subr.bf16.mxu0 0
      %714 = vmatpush1.bf16.msra.mxu0 0
      %715 = vmatprep.subr.bf16.mxu0 0
      %716 = vmatpush1.bf16.msra.mxu0 0
      %717 = vmatprep.subr.bf16.mxu0 0
      %718 = vmatpush1.bf16.msra.mxu0 0
      %719 = vmatprep.subr.bf16.mxu0 0
      %720 = vmatpush1.bf16.msra.mxu0 0
      %721 = vmatprep.subr.bf16.mxu0 0
      %722 = vmatpush1.bf16.msra.mxu0 0
      %723 = vmatprep.subr.bf16.mxu0 0
      %724 = vmatpush1.bf16.msra.mxu0 0
      %725 = vmatprep.mubr.bf16.mxu0 0
      %726 = vmatmul.mubr.bf16.gmra.mrb[0].mxu0 %v691
      %v727 = vpop.f32.mrb[0].mxu0
      %v728 = vadd.f32 %v676, %v727
      %v729 = vpop.f32.mrb[0].mxu0
      %v730 = vpop.f32.mrb[0].mxu0
      %v731 = vpop.f32.mrb[0].mxu0
      %732 = vdwg.mxu0
      %v733 = vmax.f32 %v728, 0.0
      %v734 = vpack.c.bf16 %v733, %v733
      %v735 = vld [vmem:[%s5] sm:$0xf]
      %v736 = vld [vmem:[%s5 + $0x4] sm:$0xf]
      %v737 = vld [vmem:[%s5 + $0x8] sm:$0xf]
      %v738 = vld [vmem:[%s5 + $0xc] sm:$0xf]
      %v739 = vld [vmem:[%s6] sm:$0x1]
      %v741 = vlaneseq
      %v742 = vshrl.u32 %v741, 7
      %v743 = vsub.s32 0, %v742
      %v744 = vrot.slane %v739, %v743
      %v750 = vunpack.c.l.b16 %v735
      %v751 = vunpack.c.l.b16 %v736
      %v752 = vunpack.c.l.b16 %v737
      %v753 = vunpack.c.l.b16 %v738
      %v754 = vpack.c.b16 %v751, %v750
      %v755 = vpack.c.b16 %v753, %v752
      %v759 = vsel %vm508, %v734, 0
      %761 = vmatprep.subr.bf16.mxu0 0
      %762 = vmatpush1.bf16.msra.mxu0 %v754
      %763 = vmatprep.subr.bf16.mxu0 0
      %764 = vmatpush1.bf16.msra.mxu0 %v755
      %765 = vmatprep.subr.bf16.mxu0 0
      %766 = vmatpush1.bf16.msra.mxu0 0
      %767 = vmatprep.subr.bf16.mxu0 0
      %768 = vmatpush1.bf16.msra.mxu0 0
      %769 = vmatprep.subr.bf16.mxu0 0
      %770 = vmatpush1.bf16.msra.mxu0 0
      %771 = vmatprep.subr.bf16.mxu0 0
      %772 = vmatpush1.bf16.msra.mxu0 0
      %773 = vmatprep.subr.bf16.mxu0 0
      %774 = vmatpush1.bf16.msra.mxu0 0
      %775 = vmatprep.subr.bf16.mxu0 0
      %776 = vmatpush1.bf16.msra.mxu0 0
      %777 = vmatprep.subr.bf16.mxu0 0
      %778 = vmatpush1.bf16.msra.mxu0 0
      %779 = vmatprep.subr.bf16.mxu0 0
      %780 = vmatpush1.bf16.msra.mxu0 0
      %781 = vmatprep.subr.bf16.mxu0 0
      %782 = vmatpush1.bf16.msra.mxu0 0
      %783 = vmatprep.subr.bf16.mxu0 0
      %784 = vmatpush1.bf16.msra.mxu0 0
      %785 = vmatprep.subr.bf16.mxu0 0
      %786 = vmatpush1.bf16.msra.mxu0 0
      %787 = vmatprep.subr.bf16.mxu0 0
      %788 = vmatpush1.bf16.msra.mxu0 0
      %789 = vmatprep.subr.bf16.mxu0 0
      %790 = vmatpush1.bf16.msra.mxu0 0
      %791 = vmatprep.subr.bf16.mxu0 0
      %792 = vmatpush1.bf16.msra.mxu0 0
      %793 = vmatprep.mubr.bf16.mxu0 0
      %794 = vmatmul.mubr.bf16.gmra.mrb[0].mxu0 %v759
      %v795 = vpop.f32.mrb[0].mxu0
      %v796 = vadd.f32 %v744, %v795
      %v797 = vpop.f32.mrb[0].mxu0
      %v798 = vpop.f32.mrb[0].mxu0
      %v799 = vpop.f32.mrb[0].mxu0
      %800 = vdwg.mxu0
      %801 = vst [vmem:[#allocation3] sm:$0x3] %v796
    $region37: #{tpu_custom_call.1} parent=1 // pred_fallthru
      _
    // Predicated region
    $region38: #{tpu_custom_call.1} parent=1 // pred_check
      _
    $region39: #{tpu_custom_call.1} parent=1 // pred_check_branch
      %803 = sbr.rel (0) target = $region41
    $region40: #{tpu_custom_call.1} parent=1 // pred_region
      %s805 = ssub.s32 32, 32
      %806 = vsyncadd [#allocation4], %s805
      %s808 = sshll.u32 [#allocation3], 4
      %s809 = int_to_ptr.vmem [resolvable:$true] %s808
      %811 = dma.vmem_to_hbm [thread:$0]  %s809, 32, %s7, [#allocation4]
    $region41: #{tpu_custom_call.1} parent=1 // pred_fallthru
      _
    // Predicated region
    $region42: #{tpu_custom_call.1} parent=1 // pred_check
      _
    $region43: #{tpu_custom_call.1} parent=1 // pred_check_branch
      %813 = sbr.rel (0) target = $region45
    $region44: #{tpu_custom_call.1} parent=1 // pred_region
      %814 = dma.done [#allocation4], 32
    $region45: #{tpu_custom_call.1} parent=1 // pred_fallthru
      _
    %815 = vsyncpa [#allocation4], 1

</llo_original>
